<compile_context>
chip_gen: v5e
topology: v5e:2x2
jax: 0.10.0
libtpu: 0.0.40
codegen_flags: <defaults>
</compile_context>

<pallas_src>
import functools

import jax
import jax.numpy as jnp
from jax.experimental import pallas as pl
from jax.experimental.pallas import tpu as pltpu


# PyTorch packs LSTM gates as [i, f, g, o]; we repack to [i, f, o | g] so one sigmoid
# covers the first 3H and one tanh covers the last H.
_TORCH_IFOG = (0, 1, 3, 2)


def _rup8(n):
    return ((n + 7) // 8) * 8


def _param_layout(D, H1, H2, OW=128):
    """Static row-block layout of the two packed parameter buffers.

    Buffer A (width wA) holds everything except the layer-2 input projection;
    buffer B (width 8*H2) holds Wih2 (top/bottom halves) + b2.
    """
    wA = max(8 * H1, 4 * H2, OW)
    wB = 8 * H2
    specA = [("wih1", D, 8 * H1), ("whh1bd", 2 * H1, 8 * H1), ("b1", 1, 8 * H1),
             ("whh2f", H2, 4 * H2), ("whh2r", H2, 4 * H2),
             ("woutt", H2, OW), ("woutb", H2, OW), ("bout", 1, OW)]
    specB = [("wih2t", H1, 8 * H2), ("wih2b", H1, 8 * H2), ("b2", 1, 8 * H2)]
    layout = {}
    rA = 0
    for name, nr, nc in specA:
        layout[name] = ("A", rA, nr, nc)
        rA += _rup8(nr)
    rB = 0
    for name, nr, nc in specB:
        layout[name] = ("B", rB, nr, nc)
        rB += _rup8(nr)
    return layout, (rA, wA), (rB, wB)


def bilstm_decoder_kernel(T, H1, H2, layout,
                          x_ref, pA_ref, pB_ref, out_ref,
                          s1f_scr, s1r_scr, gin2_scr, s2f_scr, s2r_scr):
    Bp = x_ref.shape[0]

    def getp(name):
        buf, r0, nr, nc = layout[name]
        ref = pA_ref if buf == "A" else pB_ref
        return ref[pl.ds(r0, nr), pl.ds(0, nc)]   # static, tile-aligned slices

    x = x_ref[...]

    # ---------------- Layer 1 (bidirectional, width H1) ----------------
    # The decoder repeats the same latent x at every timestep, so the input
    # projection is time-invariant: computed ONCE for both directions.
    # Gate-column order: [i_f,i_r, f_f,f_r, o_f,o_r, g_f,g_r], each block H1 wide.
    gin1 = jnp.dot(x, getp("wih1"), preferred_element_type=jnp.float32) + getp("b1")

    # Forward & reverse recurrences fused into ONE chain of T steps:
    # h = [h_fwd | h_rev] (Bp, 2*H1); Whh1 is block-diagonal by direction, so a single
    # 8*H1-wide MXU push per step produces both directions' gates.
    whh1bd = getp("whh1bd")
    h = jnp.zeros((Bp, 2 * H1), jnp.float32)
    c = jnp.zeros((Bp, 2 * H1), jnp.float32)
    for t in range(T):
        g = gin1 + jnp.dot(h, whh1bd, preferred_element_type=jnp.float32)
        sg = jax.nn.sigmoid(g[:, 0:6 * H1])        # [i | f | o]  (both directions)
        gg = jnp.tanh(g[:, 6 * H1:8 * H1])         # [g]          (both directions)
        c = sg[:, 2 * H1:4 * H1] * c + sg[:, 0:2 * H1] * gg
        h = sg[:, 4 * H1:6 * H1] * jnp.tanh(c)
        # fwd half is the output for timestep t, rev half for timestep T-1-t.
        s1f_scr[pl.ds(t * Bp, Bp), :] = h[:, 0:H1]
        s1r_scr[pl.ds((T - 1 - t) * Bp, Bp), :] = h[:, H1:2 * H1]

    # ---------------- Layer 2 input projection ----------------
    # Batched over ALL T timesteps and both directions; the top/bottom row split of
    # Wih2 stands in for the fwd/rev feature concat (no per-step lane concat).
    gin2_scr[...] = (
        jnp.dot(s1f_scr[...], getp("wih2t"), preferred_element_type=jnp.float32)
        + jnp.dot(s1r_scr[...], getp("wih2b"), preferred_element_type=jnp.float32)
        + getp("b2"))

    # ---------------- Layer 2 recurrences (bidirectional, width H2) ----------------
    # fwd step t and rev step T-1-t share an iteration so the two independent chains
    # overlap; whh2f/whh2r are indexed from VMEM inside the loop (no pinned 32 vregs).
    hf = jnp.zeros((Bp, H2), jnp.float32)
    cf = jnp.zeros((Bp, H2), jnp.float32)
    hr = jnp.zeros((Bp, H2), jnp.float32)
    cr = jnp.zeros((Bp, H2), jnp.float32)
    for t in range(T):
        tr = T - 1 - t
        gf = (gin2_scr[pl.ds(t * Bp, Bp), pl.ds(0, 4 * H2)]
              + jnp.dot(hf, getp("whh2f"), preferred_element_type=jnp.float32))
        gr = (gin2_scr[pl.ds(tr * Bp, Bp), pl.ds(4 * H2, 4 * H2)]
              + jnp.dot(hr, getp("whh2r"), preferred_element_type=jnp.float32))
        sgf = jax.nn.sigmoid(gf[:, 0:3 * H2])      # [i | f | o]
        ggf = jnp.tanh(gf[:, 3 * H2:4 * H2])       # [g]
        sgr = jax.nn.sigmoid(gr[:, 0:3 * H2])
        ggr = jnp.tanh(gr[:, 3 * H2:4 * H2])
        cf = sgf[:, H2:2 * H2] * cf + sgf[:, 0:H2] * ggf
        hf = sgf[:, 2 * H2:3 * H2] * jnp.tanh(cf)
        cr = sgr[:, H2:2 * H2] * cr + sgr[:, 0:H2] * ggr
        hr = sgr[:, 2 * H2:3 * H2] * jnp.tanh(cr)
        s2f_scr[pl.ds(t * Bp, Bp), :] = hf
        s2r_scr[pl.ds(tr * Bp, Bp), :] = hr

    # ---------------- Output layer ----------------
    # Wout is zero-padded to 128 lanes -> lane-dense result, unmasked stores; the real
    # n_features live in the leading columns and are sliced outside the kernel.
    out_ref[...] = (
        jnp.dot(s2f_scr[...], getp("woutt"), preferred_element_type=jnp.float32)
        + jnp.dot(s2r_scr[...], getp("woutb"), preferred_element_type=jnp.float32)
        + getp("bout"))


def bilstm_decoder(x, kparams, seq_len):
    """Pallas wrapper: x (B, input_dim) -> (B, seq_len)  (n_features == 1)."""
    B, D = x.shape
    Dk, H1, H2, nF = kparams["dims"]
    assert D == Dk and nF == 1
    T = seq_len
    Bp = max(8, _rup8(B))                                   # pad batch to sublanes
    layout, (rA, wA), (rB, wB) = _param_layout(D, H1, H2)
    OW = layout["woutt"][3]

    pA, pB = kparams["pA"], kparams["pB"]
    assert pA.shape == (rA, wA) and pB.shape == (rB, wB)

    x_pad = jnp.zeros((Bp, D), jnp.float32).at[:B, :].set(x.astype(jnp.float32))

    flops = int(2 * Bp * D * 8 * H1                          # layer-1 input proj (once)
                + 2 * T * Bp * (2 * H1) * (8 * H1)           # fused layer-1 recurrence
                + 2 * 2 * (T * Bp) * H1 * (8 * H2)           # layer-2 batched input proj
                + 2 * 2 * T * Bp * H2 * (4 * H2)             # layer-2 recurrence
                + 2 * 2 * (T * Bp) * H2 * OW)                # output layer
    transcend = int(T * Bp * 10 * (H1 + H2))
    bytes_accessed = int(4 * (x_pad.size + pA.size + pB.size + T * Bp * OW))

    out = pl.pallas_call(
        functools.partial(bilstm_decoder_kernel, T, H1, H2, layout),
        out_shape=jax.ShapeDtypeStruct((T * Bp, OW), jnp.float32),
        in_specs=[pl.BlockSpec(memory_space=pltpu.MemorySpace.VMEM)] * 3,
        out_specs=pl.BlockSpec(memory_space=pltpu.MemorySpace.VMEM),
        scratch_shapes=[
            pltpu.VMEM((T * Bp, H1), jnp.float32),           # layer-1 fwd hiddens
            pltpu.VMEM((T * Bp, H1), jnp.float32),           # layer-1 rev hiddens
            pltpu.VMEM((T * Bp, 8 * H2), jnp.float32),       # layer-2 input gates
            pltpu.VMEM((T * Bp, H2), jnp.float32),           # layer-2 fwd hiddens
            pltpu.VMEM((T * Bp, H2), jnp.float32),           # layer-2 rev hiddens
        ],
        cost_estimate=pl.CostEstimate(flops=flops,
                                      transcendentals=transcend,
                                      bytes_accessed=bytes_accessed),
    )(x_pad, pA, pB)

    # Lane-dense (T*Bp, OW) output; feature column 0 -> (T, Bp) -> (Bp, T) -> (B, T).
    return out[:, 0].reshape(T, Bp).T[:B]


# ----------------------------- parameters & reference -----------------------------


def init_params(key, input_dim, n_features=1):
    """Deterministic synthetic parameters, PyTorch layouts/shapes."""
    hidden_dim = 2 * input_dim
    ks = iter(jax.random.split(key, 32))

    def uni(shape, fan):
        s = 1.0 / float(fan) ** 0.5
        return jax.random.uniform(next(ks), shape, jnp.float32, -s, s)

    def lstm(in_dim, h):
        return dict(w_ih=uni((4 * h, in_dim), h),
                    w_hh=uni((4 * h, h), h),
                    b_ih=uni((4 * h,), h),
                    b_hh=uni((4 * h,), h))

    return dict(
        rnn1_f=lstm(input_dim, input_dim),
        rnn1_r=lstm(input_dim, input_dim),
        rnn2_f=lstm(2 * input_dim, hidden_dim),
        rnn2_r=lstm(2 * input_dim, hidden_dim),
        out=dict(w=uni((n_features, 2 * hidden_dim), 2 * hidden_dim),
                 b=uni((n_features,), 2 * hidden_dim)),
    )


def to_kernel_params(p):
    """Repack PyTorch-layout params into the fused kernel layout:
       gate order [i,f,o|g]; layer-1 fwd/rev fused (block-diag Whh1, interleaved gate
       columns); layer-2 Wih2 split into fwd-h / rev-h row halves; Wout padded to 128
       lanes; everything flattened into two parameter buffers (2 DMAs)."""
    H1 = p["rnn1_f"]["w_hh"].shape[1]
    H2 = p["rnn2_f"]["w_hh"].shape[1]
    D = p["rnn1_f"]["w_ih"].shape[1]
    nF = p["out"]["w"].shape[0]
    assert nF <= 128

    def blocks(w, H):            # torch (4H, in) -> per-gate blocks in [i,f,o,g] order
        return [w[k * H:(k + 1) * H] for k in _TORCH_IFOG]

    def bias(d, H):              # folded b_ih + b_hh, reordered to [i,f,o,g]
        b = d["b_ih"] + d["b_hh"]
        return jnp.concatenate([b[k * H:(k + 1) * H] for k in _TORCH_IFOG])

    f1, r1 = p["rnn1_f"], p["rnn1_r"]
    f2, r2 = p["rnn2_f"], p["rnn2_r"]

    # Layer 1: columns [i_f,i_r, f_f,f_r, o_f,o_r, g_f,g_r].
    wih1 = jnp.concatenate(
        [blk.T for fb, rb in zip(blocks(f1["w_ih"], H1), blocks(r1["w_ih"], H1))
         for blk in (fb, rb)], axis=1)                                    # (D, 8H1)
    b1f, b1r = bias(f1, H1), bias(r1, H1)
    b1 = jnp.concatenate(
        [seg for k in range(4)
         for seg in (b1f[k * H1:(k + 1) * H1], b1r[k * H1:(k + 1) * H1])])  # (8H1,)
    whh1bd = jnp.zeros((2 * H1, 8 * H1), jnp.float32)                     # block-diag
    for j, (fb, rb) in enumerate(zip(blocks(f1["w_hh"], H1), blocks(r1["w_hh"], H1))):
        whh1bd = whh1bd.at[0:H1, (2 * j) * H1:(2 * j + 1) * H1].set(fb.T)
        whh1bd = whh1bd.at[H1:2 * H1, (2 * j + 1) * H1:(2 * j + 2) * H1].set(rb.T)

    # Layer 2: per-direction gate order [i,f,o,g]; fwd gates cols 0:4H2, rev 4H2:8H2;
    # input rows split into fwd-layer1 (top) / rev-layer1 (bottom) feature halves.
    wih2f = jnp.concatenate(blocks(f2["w_ih"], H2), axis=0).T             # (2H1, 4H2)
    wih2r = jnp.concatenate(blocks(r2["w_ih"], H2), axis=0).T
    wih2t = jnp.concatenate([wih2f[:H1], wih2r[:H1]], axis=1)             # (H1, 8H2)
    wih2b = jnp.concatenate([wih2f[H1:], wih2r[H1:]], axis=1)             # (H1, 8H2)
    b2 = jnp.concatenate([bias(f2, H2), bias(r2, H2)])                    # (8H2,)
    whh2f = jnp.concatenate(blocks(f2["w_hh"], H2), axis=0).T             # (H2, 4H2)
    whh2r = jnp.concatenate(blocks(r2["w_hh"], H2), axis=0).T

    # Output layer: zero-padded to 128 lanes, rows split by direction half.
    layout, (rA, wA), (rB, wB) = _param_layout(D, H1, H2)
    OW = layout["woutt"][3]
    wo = p["out"]["w"].T                                                  # (2H2, nF)
    woutt = jnp.zeros((H2, OW), jnp.float32).at[:, :nF].set(wo[:H2])
    woutb = jnp.zeros((H2, OW), jnp.float32).at[:, :nF].set(wo[H2:])
    bout = jnp.zeros((OW,), jnp.float32).at[:nF].set(p["out"]["b"])

    tensors = dict(wih1=wih1, whh1bd=whh1bd, b1=b1[None, :],
                   whh2f=whh2f, whh2r=whh2r,
                   woutt=woutt, woutb=woutb, bout=bout[None, :],
                   wih2t=wih2t, wih2b=wih2b, b2=b2[None, :])
    bufA = jnp.zeros((rA, wA), jnp.float32)
    bufB = jnp.zeros((rB, wB), jnp.float32)
    for name, t in tensors.items():
        buf, r0, nr, nc = layout[name]
        assert t.shape == (nr, nc), (name, t.shape, (nr, nc))
        if buf == "A":
            bufA = bufA.at[r0:r0 + nr, 0:nc].set(t)
        else:
            bufB = bufB.at[r0:r0 + nr, 0:nc].set(t)
    return dict(pA=bufA, pB=bufB, dims=(D, H1, H2, nF))


def reference_forward(x, p, seq_len):
    """Pure-JAX reference mirroring PyTorch semantics (independent of kernel packing)."""
    hi = jax.lax.Precision.HIGHEST

    def lstm_dir(seq, d, reverse):                                        # seq: (T, B, Din)
        w_ih, w_hh = d["w_ih"], d["w_hh"]
        b = d["b_ih"] + d["b_hh"]
        H = w_hh.shape[1]
        T, B, _ = seq.shape
        h = jnp.zeros((B, H), jnp.float32)
        c = jnp.zeros((B, H), jnp.float32)
        outs = [None] * T
        order = range(T - 1, -1, -1) if reverse else range(T)
        for t in order:
            g = (jnp.dot(seq[t], w_ih.T, precision=hi)
                 + jnp.dot(h, w_hh.T, precision=hi) + b)
            i = jax.nn.sigmoid(g[:, 0 * H:1 * H])
            f = jax.nn.sigmoid(g[:, 1 * H:2 * H])
            gg = jnp.tanh(g[:, 2 * H:3 * H])
            o = jax.nn.sigmoid(g[:, 3 * H:4 * H])
            c = f * c + i * gg
            h = o * jnp.tanh(c)
            outs[t] = h
        return jnp.stack(outs)

    T = seq_len
    seq0 = jnp.broadcast_to(x.astype(jnp.float32)[None], (T,) + x.shape)
    f1 = lstm_dir(seq0, p["rnn1_f"], False)
    r1 = lstm_dir(seq0, p["rnn1_r"], True)
    s1 = jnp.concatenate([f1, r1], axis=-1)
    f2 = lstm_dir(s1, p["rnn2_f"], False)
    r2 = lstm_dir(s1, p["rnn2_r"], True)
    s2 = jnp.concatenate([f2, r2], axis=-1)
    out = jnp.dot(s2, p["out"]["w"].T, precision=hi) + p["out"]["b"]      # (T, B, 1)
    return out[..., 0].T                                                  # (B, T)


if __name__ == "__main__":
    SEQ_LEN, INPUT_DIM, N_FEATURES, BATCH = 8, 32, 1, 2

    key = jax.random.PRNGKey(0)
    kx, kparam = jax.random.split(key)
    x = jax.random.normal(kx, (BATCH, INPUT_DIM), jnp.float32)

    params = init_params(kparam, INPUT_DIM, N_FEATURES)
    kparams = to_kernel_params(params)

    out = bilstm_decoder(x, kparams, SEQ_LEN)
    out = jax.block_until_ready(out)

    ref = reference_forward(x, params, SEQ_LEN)
    assert out.shape == (BATCH, SEQ_LEN), out.shape
    assert jnp.allclose(out, ref, atol=1e-4, rtol=1e-4), (
        f"max abs diff {jnp.max(jnp.abs(out - ref))}")

    print("KERNEL_OK")
</pallas_src>

<mosaic_0001>
module attributes {stable_mosaic.version = 11 : i64} {
  func.func @bilstm_decoder_kernel(%arg0: memref<8x32xf32, #tpu.memory_space<vmem>>, %arg1: memref<368x256xf32, #tpu.memory_space<vmem>>, %arg2: memref<72x512xf32, #tpu.memory_space<vmem>>, %arg3: memref<64x128xf32, #tpu.memory_space<vmem>>, %arg4: memref<64x32xf32, #tpu.memory_space<vmem>>, %arg5: memref<64x32xf32, #tpu.memory_space<vmem>>, %arg6: memref<64x512xf32, #tpu.memory_space<vmem>>, %arg7: memref<64x64xf32, #tpu.memory_space<vmem>>, %arg8: memref<64x64xf32, #tpu.memory_space<vmem>>) attributes {dimension_semantics = [], scalar_prefetch = 0 : i64, scratch_operands = 5 : i64, tpu.core_type = #tpu.core_type<tc>} {
    %c0 = arith.constant 0 : index
    %c0_0 = arith.constant 0 : index
    %0 = vector.load %arg0[%c0, %c0_0] : memref<8x32xf32, #tpu.memory_space<vmem>>, vector<8x32xf32>
    %c0_1 = arith.constant 0 : index
    %c0_2 = arith.constant 0 : index
    %1 = vector.load %arg1[%c0_1, %c0_2] : memref<368x256xf32, #tpu.memory_space<vmem>>, vector<32x256xf32>
    %cst = arith.constant dense<0.000000e+00> : vector<8x256xf32>
    %2 = tpu.matmul %0, %1, %cst {dimension_numbers = #tpu.dot_dimension_numbers<[1], [0], [0], [1], [0, 0, 1, 1], [], []>} : vector<8x32xf32>, vector<32x256xf32>, vector<8x256xf32> -> vector<8x256xf32>
    %c96 = arith.constant 96 : index
    %c0_3 = arith.constant 0 : index
    %3 = vector.load %arg1[%c96, %c0_3] : memref<368x256xf32, #tpu.memory_space<vmem>>, vector<1x256xf32>
    %4 = vector.broadcast %3 : vector<1x256xf32> to vector<8x256xf32>
    %5 = arith.addf %2, %4 : vector<8x256xf32>
    %c32 = arith.constant 32 : index
    %c0_4 = arith.constant 0 : index
    %6 = vector.load %arg1[%c32, %c0_4] : memref<368x256xf32, #tpu.memory_space<vmem>>, vector<64x256xf32>
    %cst_5 = arith.constant 0.000000e+00 : f32
    %7 = vector.broadcast %cst_5 : f32 to vector<8x64xf32>
    %cst_6 = arith.constant 0.000000e+00 : f32
    %8 = vector.broadcast %cst_6 : f32 to vector<8x64xf32>
    %cst_7 = arith.constant dense<0.000000e+00> : vector<8x256xf32>
    %9 = tpu.matmul %7, %6, %cst_7 {dimension_numbers = #tpu.dot_dimension_numbers<[1], [0], [0], [1], [0, 0, 1, 1], [], []>} : vector<8x64xf32>, vector<64x256xf32>, vector<8x256xf32> -> vector<8x256xf32>
    %10 = arith.addf %5, %9 : vector<8x256xf32>
    %11 = vector.extract_strided_slice %10 {offsets = [0, 0], sizes = [8, 192], strides = [1, 1]} : vector<8x256xf32> to vector<8x192xf32>
    %12 = arith.negf %11 : vector<8x192xf32>
    %13 = math.exp %12 : vector<8x192xf32>
    %cst_8 = arith.constant 1.000000e+00 : f32
    %14 = vector.broadcast %cst_8 : f32 to vector<8x192xf32>
    %15 = arith.addf %14, %13 : vector<8x192xf32>
    %16 = arith.divf %14, %15 : vector<8x192xf32>
    %17 = vector.extract_strided_slice %10 {offsets = [0, 192], sizes = [8, 64], strides = [1, 1]} : vector<8x256xf32> to vector<8x64xf32>
    %18 = math.tanh %17 : vector<8x64xf32>
    %19 = vector.extract_strided_slice %16 {offsets = [0, 64], sizes = [8, 64], strides = [1, 1]} : vector<8x192xf32> to vector<8x64xf32>
    %20 = arith.mulf %19, %8 : vector<8x64xf32>
    %21 = vector.extract_strided_slice %16 {offsets = [0, 0], sizes = [8, 64], strides = [1, 1]} : vector<8x192xf32> to vector<8x64xf32>
    %22 = arith.mulf %21, %18 : vector<8x64xf32>
    %23 = arith.addf %20, %22 : vector<8x64xf32>
    %24 = vector.extract_strided_slice %16 {offsets = [0, 128], sizes = [8, 64], strides = [1, 1]} : vector<8x192xf32> to vector<8x64xf32>
    %25 = math.tanh %23 : vector<8x64xf32>
    %26 = arith.mulf %24, %25 : vector<8x64xf32>
    %27 = vector.extract_strided_slice %26 {offsets = [0, 0], sizes = [8, 32], strides = [1, 1]} : vector<8x64xf32> to vector<8x32xf32>
    %c0_9 = arith.constant 0 : index
    %c0_10 = arith.constant 0 : index
    %28 = vector.load %arg4[%c0_9, %c0_10] : memref<64x32xf32, #tpu.memory_space<vmem>>, vector<8x32xf32>
    tpu.vector_store %arg4[%c0_9, %c0_10], %27 {strides = array<i32>} : memref<64x32xf32, #tpu.memory_space<vmem>>, vector<8x32xf32>,
    %29 = vector.extract_strided_slice %26 {offsets = [0, 32], sizes = [8, 32], strides = [1, 1]} : vector<8x64xf32> to vector<8x32xf32>
    %c56 = arith.constant 56 : index
    %c0_11 = arith.constant 0 : index
    %30 = vector.load %arg5[%c56, %c0_11] : memref<64x32xf32, #tpu.memory_space<vmem>>, vector<8x32xf32>
    tpu.vector_store %arg5[%c56, %c0_11], %29 {strides = array<i32>} : memref<64x32xf32, #tpu.memory_space<vmem>>, vector<8x32xf32>,
    %cst_12 = arith.constant dense<0.000000e+00> : vector<8x256xf32>
    %31 = tpu.matmul %26, %6, %cst_12 {dimension_numbers = #tpu.dot_dimension_numbers<[1], [0], [0], [1], [0, 0, 1, 1], [], []>} : vector<8x64xf32>, vector<64x256xf32>, vector<8x256xf32> -> vector<8x256xf32>
    %32 = arith.addf %5, %31 : vector<8x256xf32>
    %33 = vector.extract_strided_slice %32 {offsets = [0, 0], sizes = [8, 192], strides = [1, 1]} : vector<8x256xf32> to vector<8x192xf32>
    %34 = arith.negf %33 : vector<8x192xf32>
    %35 = math.exp %34 : vector<8x192xf32>
    %cst_13 = arith.constant 1.000000e+00 : f32
    %36 = vector.broadcast %cst_13 : f32 to vector<8x192xf32>
    %37 = arith.addf %36, %35 : vector<8x192xf32>
    %38 = arith.divf %36, %37 : vector<8x192xf32>
    %39 = vector.extract_strided_slice %32 {offsets = [0, 192], sizes = [8, 64], strides = [1, 1]} : vector<8x256xf32> to vector<8x64xf32>
    %40 = math.tanh %39 : vector<8x64xf32>
    %41 = vector.extract_strided_slice %38 {offsets = [0, 64], sizes = [8, 64], strides = [1, 1]} : vector<8x192xf32> to vector<8x64xf32>
    %42 = arith.mulf %41, %23 : vector<8x64xf32>
    %43 = vector.extract_strided_slice %38 {offsets = [0, 0], sizes = [8, 64], strides = [1, 1]} : vector<8x192xf32> to vector<8x64xf32>
    %44 = arith.mulf %43, %40 : vector<8x64xf32>
    %45 = arith.addf %42, %44 : vector<8x64xf32>
    %46 = vector.extract_strided_slice %38 {offsets = [0, 128], sizes = [8, 64], strides = [1, 1]} : vector<8x192xf32> to vector<8x64xf32>
    %47 = math.tanh %45 : vector<8x64xf32>
    %48 = arith.mulf %46, %47 : vector<8x64xf32>
    %49 = vector.extract_strided_slice %48 {offsets = [0, 0], sizes = [8, 32], strides = [1, 1]} : vector<8x64xf32> to vector<8x32xf32>
    %c8 = arith.constant 8 : index
    %c0_14 = arith.constant 0 : index
    %50 = vector.load %arg4[%c8, %c0_14] : memref<64x32xf32, #tpu.memory_space<vmem>>, vector<8x32xf32>
    tpu.vector_store %arg4[%c8, %c0_14], %49 {strides = array<i32>} : memref<64x32xf32, #tpu.memory_space<vmem>>, vector<8x32xf32>,
    %51 = vector.extract_strided_slice %48 {offsets = [0, 32], sizes = [8, 32], strides = [1, 1]} : vector<8x64xf32> to vector<8x32xf32>
    %c48 = arith.constant 48 : index
    %c0_15 = arith.constant 0 : index
    %52 = vector.load %arg5[%c48, %c0_15] : memref<64x32xf32, #tpu.memory_space<vmem>>, vector<8x32xf32>
    tpu.vector_store %arg5[%c48, %c0_15], %51 {strides = array<i32>} : memref<64x32xf32, #tpu.memory_space<vmem>>, vector<8x32xf32>,
    %cst_16 = arith.constant dense<0.000000e+00> : vector<8x256xf32>
    %53 = tpu.matmul %48, %6, %cst_16 {dimension_numbers = #tpu.dot_dimension_numbers<[1], [0], [0], [1], [0, 0, 1, 1], [], []>} : vector<8x64xf32>, vector<64x256xf32>, vector<8x256xf32> -> vector<8x256xf32>
    %54 = arith.addf %5, %53 : vector<8x256xf32>
    %55 = vector.extract_strided_slice %54 {offsets = [0, 0], sizes = [8, 192], strides = [1, 1]} : vector<8x256xf32> to vector<8x192xf32>
    %56 = arith.negf %55 : vector<8x192xf32>
    %57 = math.exp %56 : vector<8x192xf32>
    %cst_17 = arith.constant 1.000000e+00 : f32
    %58 = vector.broadcast %cst_17 : f32 to vector<8x192xf32>
    %59 = arith.addf %58, %57 : vector<8x192xf32>
    %60 = arith.divf %58, %59 : vector<8x192xf32>
    %61 = vector.extract_strided_slice %54 {offsets = [0, 192], sizes = [8, 64], strides = [1, 1]} : vector<8x256xf32> to vector<8x64xf32>
    %62 = math.tanh %61 : vector<8x64xf32>
    %63 = vector.extract_strided_slice %60 {offsets = [0, 64], sizes = [8, 64], strides = [1, 1]} : vector<8x192xf32> to vector<8x64xf32>
    %64 = arith.mulf %63, %45 : vector<8x64xf32>
    %65 = vector.extract_strided_slice %60 {offsets = [0, 0], sizes = [8, 64], strides = [1, 1]} : vector<8x192xf32> to vector<8x64xf32>
    %66 = arith.mulf %65, %62 : vector<8x64xf32>
    %67 = arith.addf %64, %66 : vector<8x64xf32>
    %68 = vector.extract_strided_slice %60 {offsets = [0, 128], sizes = [8, 64], strides = [1, 1]} : vector<8x192xf32> to vector<8x64xf32>
    %69 = math.tanh %67 : vector<8x64xf32>
    %70 = arith.mulf %68, %69 : vector<8x64xf32>
    %71 = vector.extract_strided_slice %70 {offsets = [0, 0], sizes = [8, 32], strides = [1, 1]} : vector<8x64xf32> to vector<8x32xf32>
    %c16 = arith.constant 16 : index
    %c0_18 = arith.constant 0 : index
    %72 = vector.load %arg4[%c16, %c0_18] : memref<64x32xf32, #tpu.memory_space<vmem>>, vector<8x32xf32>
    tpu.vector_store %arg4[%c16, %c0_18], %71 {strides = array<i32>} : memref<64x32xf32, #tpu.memory_space<vmem>>, vector<8x32xf32>,
    %73 = vector.extract_strided_slice %70 {offsets = [0, 32], sizes = [8, 32], strides = [1, 1]} : vector<8x64xf32> to vector<8x32xf32>
    %c40 = arith.constant 40 : index
    %c0_19 = arith.constant 0 : index
    %74 = vector.load %arg5[%c40, %c0_19] : memref<64x32xf32, #tpu.memory_space<vmem>>, vector<8x32xf32>
    tpu.vector_store %arg5[%c40, %c0_19], %73 {strides = array<i32>} : memref<64x32xf32, #tpu.memory_space<vmem>>, vector<8x32xf32>,
    %cst_20 = arith.constant dense<0.000000e+00> : vector<8x256xf32>
    %75 = tpu.matmul %70, %6, %cst_20 {dimension_numbers = #tpu.dot_dimension_numbers<[1], [0], [0], [1], [0, 0, 1, 1], [], []>} : vector<8x64xf32>, vector<64x256xf32>, vector<8x256xf32> -> vector<8x256xf32>
    %76 = arith.addf %5, %75 : vector<8x256xf32>
    %77 = vector.extract_strided_slice %76 {offsets = [0, 0], sizes = [8, 192], strides = [1, 1]} : vector<8x256xf32> to vector<8x192xf32>
    %78 = arith.negf %77 : vector<8x192xf32>
    %79 = math.exp %78 : vector<8x192xf32>
    %cst_21 = arith.constant 1.000000e+00 : f32
    %80 = vector.broadcast %cst_21 : f32 to vector<8x192xf32>
    %81 = arith.addf %80, %79 : vector<8x192xf32>
    %82 = arith.divf %80, %81 : vector<8x192xf32>
    %83 = vector.extract_strided_slice %76 {offsets = [0, 192], sizes = [8, 64], strides = [1, 1]} : vector<8x256xf32> to vector<8x64xf32>
    %84 = math.tanh %83 : vector<8x64xf32>
    %85 = vector.extract_strided_slice %82 {offsets = [0, 64], sizes = [8, 64], strides = [1, 1]} : vector<8x192xf32> to vector<8x64xf32>
    %86 = arith.mulf %85, %67 : vector<8x64xf32>
    %87 = vector.extract_strided_slice %82 {offsets = [0, 0], sizes = [8, 64], strides = [1, 1]} : vector<8x192xf32> to vector<8x64xf32>
    %88 = arith.mulf %87, %84 : vector<8x64xf32>
    %89 = arith.addf %86, %88 : vector<8x64xf32>
    %90 = vector.extract_strided_slice %82 {offsets = [0, 128], sizes = [8, 64], strides = [1, 1]} : vector<8x192xf32> to vector<8x64xf32>
    %91 = math.tanh %89 : vector<8x64xf32>
    %92 = arith.mulf %90, %91 : vector<8x64xf32>
    %93 = vector.extract_strided_slice %92 {offsets = [0, 0], sizes = [8, 32], strides = [1, 1]} : vector<8x64xf32> to vector<8x32xf32>
    %c24 = arith.constant 24 : index
    %c0_22 = arith.constant 0 : index
    %94 = vector.load %arg4[%c24, %c0_22] : memref<64x32xf32, #tpu.memory_space<vmem>>, vector<8x32xf32>
    tpu.vector_store %arg4[%c24, %c0_22], %93 {strides = array<i32>} : memref<64x32xf32, #tpu.memory_space<vmem>>, vector<8x32xf32>,
    %95 = vector.extract_strided_slice %92 {offsets = [0, 32], sizes = [8, 32], strides = [1, 1]} : vector<8x64xf32> to vector<8x32xf32>
    %c32_23 = arith.constant 32 : index
    %c0_24 = arith.constant 0 : index
    %96 = vector.load %arg5[%c32_23, %c0_24] : memref<64x32xf32, #tpu.memory_space<vmem>>, vector<8x32xf32>
    tpu.vector_store %arg5[%c32_23, %c0_24], %95 {strides = array<i32>} : memref<64x32xf32, #tpu.memory_space<vmem>>, vector<8x32xf32>,
    %cst_25 = arith.constant dense<0.000000e+00> : vector<8x256xf32>
    %97 = tpu.matmul %92, %6, %cst_25 {dimension_numbers = #tpu.dot_dimension_numbers<[1], [0], [0], [1], [0, 0, 1, 1], [], []>} : vector<8x64xf32>, vector<64x256xf32>, vector<8x256xf32> -> vector<8x256xf32>
    %98 = arith.addf %5, %97 : vector<8x256xf32>
    %99 = vector.extract_strided_slice %98 {offsets = [0, 0], sizes = [8, 192], strides = [1, 1]} : vector<8x256xf32> to vector<8x192xf32>
    %100 = arith.negf %99 : vector<8x192xf32>
    %101 = math.exp %100 : vector<8x192xf32>
    %cst_26 = arith.constant 1.000000e+00 : f32
    %102 = vector.broadcast %cst_26 : f32 to vector<8x192xf32>
    %103 = arith.addf %102, %101 : vector<8x192xf32>
    %104 = arith.divf %102, %103 : vector<8x192xf32>
    %105 = vector.extract_strided_slice %98 {offsets = [0, 192], sizes = [8, 64], strides = [1, 1]} : vector<8x256xf32> to vector<8x64xf32>
    %106 = math.tanh %105 : vector<8x64xf32>
    %107 = vector.extract_strided_slice %104 {offsets = [0, 64], sizes = [8, 64], strides = [1, 1]} : vector<8x192xf32> to vector<8x64xf32>
    %108 = arith.mulf %107, %89 : vector<8x64xf32>
    %109 = vector.extract_strided_slice %104 {offsets = [0, 0], sizes = [8, 64], strides = [1, 1]} : vector<8x192xf32> to vector<8x64xf32>
    %110 = arith.mulf %109, %106 : vector<8x64xf32>
    %111 = arith.addf %108, %110 : vector<8x64xf32>
    %112 = vector.extract_strided_slice %104 {offsets = [0, 128], sizes = [8, 64], strides = [1, 1]} : vector<8x192xf32> to vector<8x64xf32>
    %113 = math.tanh %111 : vector<8x64xf32>
    %114 = arith.mulf %112, %113 : vector<8x64xf32>
    %115 = vector.extract_strided_slice %114 {offsets = [0, 0], sizes = [8, 32], strides = [1, 1]} : vector<8x64xf32> to vector<8x32xf32>
    %c32_27 = arith.constant 32 : index
    %c0_28 = arith.constant 0 : index
    %116 = vector.load %arg4[%c32_27, %c0_28] : memref<64x32xf32, #tpu.memory_space<vmem>>, vector<8x32xf32>
    tpu.vector_store %arg4[%c32_27, %c0_28], %115 {strides = array<i32>} : memref<64x32xf32, #tpu.memory_space<vmem>>, vector<8x32xf32>,
    %117 = vector.extract_strided_slice %114 {offsets = [0, 32], sizes = [8, 32], strides = [1, 1]} : vector<8x64xf32> to vector<8x32xf32>
    %c24_29 = arith.constant 24 : index
    %c0_30 = arith.constant 0 : index
    %118 = vector.load %arg5[%c24_29, %c0_30] : memref<64x32xf32, #tpu.memory_space<vmem>>, vector<8x32xf32>
    tpu.vector_store %arg5[%c24_29, %c0_30], %117 {strides = array<i32>} : memref<64x32xf32, #tpu.memory_space<vmem>>, vector<8x32xf32>,
    %cst_31 = arith.constant dense<0.000000e+00> : vector<8x256xf32>
    %119 = tpu.matmul %114, %6, %cst_31 {dimension_numbers = #tpu.dot_dimension_numbers<[1], [0], [0], [1], [0, 0, 1, 1], [], []>} : vector<8x64xf32>, vector<64x256xf32>, vector<8x256xf32> -> vector<8x256xf32>
    %120 = arith.addf %5, %119 : vector<8x256xf32>
    %121 = vector.extract_strided_slice %120 {offsets = [0, 0], sizes = [8, 192], strides = [1, 1]} : vector<8x256xf32> to vector<8x192xf32>
    %122 = arith.negf %121 : vector<8x192xf32>
    %123 = math.exp %122 : vector<8x192xf32>
    %cst_32 = arith.constant 1.000000e+00 : f32
    %124 = vector.broadcast %cst_32 : f32 to vector<8x192xf32>
    %125 = arith.addf %124, %123 : vector<8x192xf32>
    %126 = arith.divf %124, %125 : vector<8x192xf32>
    %127 = vector.extract_strided_slice %120 {offsets = [0, 192], sizes = [8, 64], strides = [1, 1]} : vector<8x256xf32> to vector<8x64xf32>
    %128 = math.tanh %127 : vector<8x64xf32>
    %129 = vector.extract_strided_slice %126 {offsets = [0, 64], sizes = [8, 64], strides = [1, 1]} : vector<8x192xf32> to vector<8x64xf32>
    %130 = arith.mulf %129, %111 : vector<8x64xf32>
    %131 = vector.extract_strided_slice %126 {offsets = [0, 0], sizes = [8, 64], strides = [1, 1]} : vector<8x192xf32> to vector<8x64xf32>
    %132 = arith.mulf %131, %128 : vector<8x64xf32>
    %133 = arith.addf %130, %132 : vector<8x64xf32>
    %134 = vector.extract_strided_slice %126 {offsets = [0, 128], sizes = [8, 64], strides = [1, 1]} : vector<8x192xf32> to vector<8x64xf32>
    %135 = math.tanh %133 : vector<8x64xf32>
    %136 = arith.mulf %134, %135 : vector<8x64xf32>
    %137 = vector.extract_strided_slice %136 {offsets = [0, 0], sizes = [8, 32], strides = [1, 1]} : vector<8x64xf32> to vector<8x32xf32>
    %c40_33 = arith.constant 40 : index
    %c0_34 = arith.constant 0 : index
    %138 = vector.load %arg4[%c40_33, %c0_34] : memref<64x32xf32, #tpu.memory_space<vmem>>, vector<8x32xf32>
    tpu.vector_store %arg4[%c40_33, %c0_34], %137 {strides = array<i32>} : memref<64x32xf32, #tpu.memory_space<vmem>>, vector<8x32xf32>,
    %139 = vector.extract_strided_slice %136 {offsets = [0, 32], sizes = [8, 32], strides = [1, 1]} : vector<8x64xf32> to vector<8x32xf32>
    %c16_35 = arith.constant 16 : index
    %c0_36 = arith.constant 0 : index
    %140 = vector.load %arg5[%c16_35, %c0_36] : memref<64x32xf32, #tpu.memory_space<vmem>>, vector<8x32xf32>
    tpu.vector_store %arg5[%c16_35, %c0_36], %139 {strides = array<i32>} : memref<64x32xf32, #tpu.memory_space<vmem>>, vector<8x32xf32>,
    %cst_37 = arith.constant dense<0.000000e+00> : vector<8x256xf32>
    %141 = tpu.matmul %136, %6, %cst_37 {dimension_numbers = #tpu.dot_dimension_numbers<[1], [0], [0], [1], [0, 0, 1, 1], [], []>} : vector<8x64xf32>, vector<64x256xf32>, vector<8x256xf32> -> vector<8x256xf32>
    %142 = arith.addf %5, %141 : vector<8x256xf32>
    %143 = vector.extract_strided_slice %142 {offsets = [0, 0], sizes = [8, 192], strides = [1, 1]} : vector<8x256xf32> to vector<8x192xf32>
    %144 = arith.negf %143 : vector<8x192xf32>
    %145 = math.exp %144 : vector<8x192xf32>
    %cst_38 = arith.constant 1.000000e+00 : f32
    %146 = vector.broadcast %cst_38 : f32 to vector<8x192xf32>
    %147 = arith.addf %146, %145 : vector<8x192xf32>
    %148 = arith.divf %146, %147 : vector<8x192xf32>
    %149 = vector.extract_strided_slice %142 {offsets = [0, 192], sizes = [8, 64], strides = [1, 1]} : vector<8x256xf32> to vector<8x64xf32>
    %150 = math.tanh %149 : vector<8x64xf32>
    %151 = vector.extract_strided_slice %148 {offsets = [0, 64], sizes = [8, 64], strides = [1, 1]} : vector<8x192xf32> to vector<8x64xf32>
    %152 = arith.mulf %151, %133 : vector<8x64xf32>
    %153 = vector.extract_strided_slice %148 {offsets = [0, 0], sizes = [8, 64], strides = [1, 1]} : vector<8x192xf32> to vector<8x64xf32>
    %154 = arith.mulf %153, %150 : vector<8x64xf32>
    %155 = arith.addf %152, %154 : vector<8x64xf32>
    %156 = vector.extract_strided_slice %148 {offsets = [0, 128], sizes = [8, 64], strides = [1, 1]} : vector<8x192xf32> to vector<8x64xf32>
    %157 = math.tanh %155 : vector<8x64xf32>
    %158 = arith.mulf %156, %157 : vector<8x64xf32>
    %159 = vector.extract_strided_slice %158 {offsets = [0, 0], sizes = [8, 32], strides = [1, 1]} : vector<8x64xf32> to vector<8x32xf32>
    %c48_39 = arith.constant 48 : index
    %c0_40 = arith.constant 0 : index
    %160 = vector.load %arg4[%c48_39, %c0_40] : memref<64x32xf32, #tpu.memory_space<vmem>>, vector<8x32xf32>
    tpu.vector_store %arg4[%c48_39, %c0_40], %159 {strides = array<i32>} : memref<64x32xf32, #tpu.memory_space<vmem>>, vector<8x32xf32>,
    %161 = vector.extract_strided_slice %158 {offsets = [0, 32], sizes = [8, 32], strides = [1, 1]} : vector<8x64xf32> to vector<8x32xf32>
    %c8_41 = arith.constant 8 : index
    %c0_42 = arith.constant 0 : index
    %162 = vector.load %arg5[%c8_41, %c0_42] : memref<64x32xf32, #tpu.memory_space<vmem>>, vector<8x32xf32>
    tpu.vector_store %arg5[%c8_41, %c0_42], %161 {strides = array<i32>} : memref<64x32xf32, #tpu.memory_space<vmem>>, vector<8x32xf32>,
    %cst_43 = arith.constant dense<0.000000e+00> : vector<8x256xf32>
    %163 = tpu.matmul %158, %6, %cst_43 {dimension_numbers = #tpu.dot_dimension_numbers<[1], [0], [0], [1], [0, 0, 1, 1], [], []>} : vector<8x64xf32>, vector<64x256xf32>, vector<8x256xf32> -> vector<8x256xf32>
    %164 = arith.addf %5, %163 : vector<8x256xf32>
    %165 = vector.extract_strided_slice %164 {offsets = [0, 0], sizes = [8, 192], strides = [1, 1]} : vector<8x256xf32> to vector<8x192xf32>
    %166 = arith.negf %165 : vector<8x192xf32>
    %167 = math.exp %166 : vector<8x192xf32>
    %cst_44 = arith.constant 1.000000e+00 : f32
    %168 = vector.broadcast %cst_44 : f32 to vector<8x192xf32>
    %169 = arith.addf %168, %167 : vector<8x192xf32>
    %170 = arith.divf %168, %169 : vector<8x192xf32>
    %171 = vector.extract_strided_slice %164 {offsets = [0, 192], sizes = [8, 64], strides = [1, 1]} : vector<8x256xf32> to vector<8x64xf32>
    %172 = math.tanh %171 : vector<8x64xf32>
    %173 = vector.extract_strided_slice %170 {offsets = [0, 64], sizes = [8, 64], strides = [1, 1]} : vector<8x192xf32> to vector<8x64xf32>
    %174 = arith.mulf %173, %155 : vector<8x64xf32>
    %175 = vector.extract_strided_slice %170 {offsets = [0, 0], sizes = [8, 64], strides = [1, 1]} : vector<8x192xf32> to vector<8x64xf32>
    %176 = arith.mulf %175, %172 : vector<8x64xf32>
    %177 = arith.addf %174, %176 : vector<8x64xf32>
    %178 = vector.extract_strided_slice %170 {offsets = [0, 128], sizes = [8, 64], strides = [1, 1]} : vector<8x192xf32> to vector<8x64xf32>
    %179 = math.tanh %177 : vector<8x64xf32>
    %180 = arith.mulf %178, %179 : vector<8x64xf32>
    %181 = vector.extract_strided_slice %180 {offsets = [0, 0], sizes = [8, 32], strides = [1, 1]} : vector<8x64xf32> to vector<8x32xf32>
    %c56_45 = arith.constant 56 : index
    %c0_46 = arith.constant 0 : index
    %182 = vector.load %arg4[%c56_45, %c0_46] : memref<64x32xf32, #tpu.memory_space<vmem>>, vector<8x32xf32>
    tpu.vector_store %arg4[%c56_45, %c0_46], %181 {strides = array<i32>} : memref<64x32xf32, #tpu.memory_space<vmem>>, vector<8x32xf32>,
    %183 = vector.extract_strided_slice %180 {offsets = [0, 32], sizes = [8, 32], strides = [1, 1]} : vector<8x64xf32> to vector<8x32xf32>
    %c0_47 = arith.constant 0 : index
    %c0_48 = arith.constant 0 : index
    %184 = vector.load %arg5[%c0_47, %c0_48] : memref<64x32xf32, #tpu.memory_space<vmem>>, vector<8x32xf32>
    tpu.vector_store %arg5[%c0_47, %c0_48], %183 {strides = array<i32>} : memref<64x32xf32, #tpu.memory_space<vmem>>, vector<8x32xf32>,
    %c0_49 = arith.constant 0 : index
    %c0_50 = arith.constant 0 : index
    %185 = vector.load %arg4[%c0_49, %c0_50] : memref<64x32xf32, #tpu.memory_space<vmem>>, vector<64x32xf32>
    %c0_51 = arith.constant 0 : index
    %c0_52 = arith.constant 0 : index
    %186 = vector.load %arg2[%c0_51, %c0_52] : memref<72x512xf32, #tpu.memory_space<vmem>>, vector<32x512xf32>
    %cst_53 = arith.constant dense<0.000000e+00> : vector<64x512xf32>
    %187 = tpu.matmul %185, %186, %cst_53 {dimension_numbers = #tpu.dot_dimension_numbers<[1], [0], [0], [1], [0, 0, 1, 1], [], []>} : vector<64x32xf32>, vector<32x512xf32>, vector<64x512xf32> -> vector<64x512xf32>
    %c0_54 = arith.constant 0 : index
    %c0_55 = arith.constant 0 : index
    %188 = vector.load %arg5[%c0_54, %c0_55] : memref<64x32xf32, #tpu.memory_space<vmem>>, vector<64x32xf32>
    %c32_56 = arith.constant 32 : index
    %c0_57 = arith.constant 0 : index
    %189 = vector.load %arg2[%c32_56, %c0_57] : memref<72x512xf32, #tpu.memory_space<vmem>>, vector<32x512xf32>
    %cst_58 = arith.constant dense<0.000000e+00> : vector<64x512xf32>
    %190 = tpu.matmul %188, %189, %cst_58 {dimension_numbers = #tpu.dot_dimension_numbers<[1], [0], [0], [1], [0, 0, 1, 1], [], []>} : vector<64x32xf32>, vector<32x512xf32>, vector<64x512xf32> -> vector<64x512xf32>
    %191 = arith.addf %187, %190 : vector<64x512xf32>
    %c64 = arith.constant 64 : index
    %c0_59 = arith.constant 0 : index
    %192 = vector.load %arg2[%c64, %c0_59] : memref<72x512xf32, #tpu.memory_space<vmem>>, vector<1x512xf32>
    %193 = vector.broadcast %192 : vector<1x512xf32> to vector<64x512xf32>
    %194 = arith.addf %191, %193 : vector<64x512xf32>
    %c0_60 = arith.constant 0 : index
    %c0_61 = arith.constant 0 : index
    %195 = vector.load %arg6[%c0_60, %c0_61] : memref<64x512xf32, #tpu.memory_space<vmem>>, vector<64x512xf32>
    tpu.vector_store %arg6[%c0_60, %c0_61], %194 {strides = array<i32>} : memref<64x512xf32, #tpu.memory_space<vmem>>, vector<64x512xf32>,
    %cst_62 = arith.constant 0.000000e+00 : f32
    %196 = vector.broadcast %cst_62 : f32 to vector<8x64xf32>
    %cst_63 = arith.constant 0.000000e+00 : f32
    %197 = vector.broadcast %cst_63 : f32 to vector<8x64xf32>
    %cst_64 = arith.constant 0.000000e+00 : f32
    %198 = vector.broadcast %cst_64 : f32 to vector<8x64xf32>
    %cst_65 = arith.constant 0.000000e+00 : f32
    %199 = vector.broadcast %cst_65 : f32 to vector<8x64xf32>
    %c0_66 = arith.constant 0 : index
    %c0_67 = arith.constant 0 : index
    %200 = vector.load %arg6[%c0_66, %c0_67] : memref<64x512xf32, #tpu.memory_space<vmem>>, vector<8x256xf32>
    %c104 = arith.constant 104 : index
    %c0_68 = arith.constant 0 : index
    %201 = vector.load %arg1[%c104, %c0_68] : memref<368x256xf32, #tpu.memory_space<vmem>>, vector<64x256xf32>
    %cst_69 = arith.constant dense<0.000000e+00> : vector<8x256xf32>
    %202 = tpu.matmul %196, %201, %cst_69 {dimension_numbers = #tpu.dot_dimension_numbers<[1], [0], [0], [1], [0, 0, 1, 1], [], []>} : vector<8x64xf32>, vector<64x256xf32>, vector<8x256xf32> -> vector<8x256xf32>
    %203 = arith.addf %200, %202 : vector<8x256xf32>
    %c56_70 = arith.constant 56 : index
    %c256 = arith.constant 256 : index
    %204 = vector.load %arg6[%c56_70, %c256] : memref<64x512xf32, #tpu.memory_space<vmem>>, vector<8x256xf32>
    %c168 = arith.constant 168 : index
    %c0_71 = arith.constant 0 : index
    %205 = vector.load %arg1[%c168, %c0_71] : memref<368x256xf32, #tpu.memory_space<vmem>>, vector<64x256xf32>
    %cst_72 = arith.constant dense<0.000000e+00> : vector<8x256xf32>
    %206 = tpu.matmul %198, %205, %cst_72 {dimension_numbers = #tpu.dot_dimension_numbers<[1], [0], [0], [1], [0, 0, 1, 1], [], []>} : vector<8x64xf32>, vector<64x256xf32>, vector<8x256xf32> -> vector<8x256xf32>
    %207 = arith.addf %204, %206 : vector<8x256xf32>
    %208 = vector.extract_strided_slice %203 {offsets = [0, 0], sizes = [8, 192], strides = [1, 1]} : vector<8x256xf32> to vector<8x192xf32>
    %209 = arith.negf %208 : vector<8x192xf32>
    %210 = math.exp %209 : vector<8x192xf32>
    %cst_73 = arith.constant 1.000000e+00 : f32
    %211 = vector.broadcast %cst_73 : f32 to vector<8x192xf32>
    %212 = arith.addf %211, %210 : vector<8x192xf32>
    %213 = arith.divf %211, %212 : vector<8x192xf32>
    %214 = vector.extract_strided_slice %203 {offsets = [0, 192], sizes = [8, 64], strides = [1, 1]} : vector<8x256xf32> to vector<8x64xf32>
    %215 = math.tanh %214 : vector<8x64xf32>
    %216 = vector.extract_strided_slice %207 {offsets = [0, 0], sizes = [8, 192], strides = [1, 1]} : vector<8x256xf32> to vector<8x192xf32>
    %217 = arith.negf %216 : vector<8x192xf32>
    %218 = math.exp %217 : vector<8x192xf32>
    %cst_74 = arith.constant 1.000000e+00 : f32
    %219 = vector.broadcast %cst_74 : f32 to vector<8x192xf32>
    %220 = arith.addf %219, %218 : vector<8x192xf32>
    %221 = arith.divf %219, %220 : vector<8x192xf32>
    %222 = vector.extract_strided_slice %207 {offsets = [0, 192], sizes = [8, 64], strides = [1, 1]} : vector<8x256xf32> to vector<8x64xf32>
    %223 = math.tanh %222 : vector<8x64xf32>
    %224 = vector.extract_strided_slice %213 {offsets = [0, 64], sizes = [8, 64], strides = [1, 1]} : vector<8x192xf32> to vector<8x64xf32>
    %225 = arith.mulf %224, %197 : vector<8x64xf32>
    %226 = vector.extract_strided_slice %213 {offsets = [0, 0], sizes = [8, 64], strides = [1, 1]} : vector<8x192xf32> to vector<8x64xf32>
    %227 = arith.mulf %226, %215 : vector<8x64xf32>
    %228 = arith.addf %225, %227 : vector<8x64xf32>
    %229 = vector.extract_strided_slice %213 {offsets = [0, 128], sizes = [8, 64], strides = [1, 1]} : vector<8x192xf32> to vector<8x64xf32>
    %230 = math.tanh %228 : vector<8x64xf32>
    %231 = arith.mulf %229, %230 : vector<8x64xf32>
    %232 = vector.extract_strided_slice %221 {offsets = [0, 64], sizes = [8, 64], strides = [1, 1]} : vector<8x192xf32> to vector<8x64xf32>
    %233 = arith.mulf %232, %199 : vector<8x64xf32>
    %234 = vector.extract_strided_slice %221 {offsets = [0, 0], sizes = [8, 64], strides = [1, 1]} : vector<8x192xf32> to vector<8x64xf32>
    %235 = arith.mulf %234, %223 : vector<8x64xf32>
    %236 = arith.addf %233, %235 : vector<8x64xf32>
    %237 = vector.extract_strided_slice %221 {offsets = [0, 128], sizes = [8, 64], strides = [1, 1]} : vector<8x192xf32> to vector<8x64xf32>
    %238 = math.tanh %236 : vector<8x64xf32>
    %239 = arith.mulf %237, %238 : vector<8x64xf32>
    %c0_75 = arith.constant 0 : index
    %c0_76 = arith.constant 0 : index
    %240 = vector.load %arg7[%c0_75, %c0_76] : memref<64x64xf32, #tpu.memory_space<vmem>>, vector<8x64xf32>
    tpu.vector_store %arg7[%c0_75, %c0_76], %231 {strides = array<i32>} : memref<64x64xf32, #tpu.memory_space<vmem>>, vector<8x64xf32>,
    %c56_77 = arith.constant 56 : index
    %c0_78 = arith.constant 0 : index
    %241 = vector.load %arg8[%c56_77, %c0_78] : memref<64x64xf32, #tpu.memory_space<vmem>>, vector<8x64xf32>
    tpu.vector_store %arg8[%c56_77, %c0_78], %239 {strides = array<i32>} : memref<64x64xf32, #tpu.memory_space<vmem>>, vector<8x64xf32>,
    %c8_79 = arith.constant 8 : index
    %c0_80 = arith.constant 0 : index
    %242 = vector.load %arg6[%c8_79, %c0_80] : memref<64x512xf32, #tpu.memory_space<vmem>>, vector<8x256xf32>
    %c104_81 = arith.constant 104 : index
    %c0_82 = arith.constant 0 : index
    %243 = vector.load %arg1[%c104_81, %c0_82] : memref<368x256xf32, #tpu.memory_space<vmem>>, vector<64x256xf32>
    %cst_83 = arith.constant dense<0.000000e+00> : vector<8x256xf32>
    %244 = tpu.matmul %231, %243, %cst_83 {dimension_numbers = #tpu.dot_dimension_numbers<[1], [0], [0], [1], [0, 0, 1, 1], [], []>} : vector<8x64xf32>, vector<64x256xf32>, vector<8x256xf32> -> vector<8x256xf32>
    %245 = arith.addf %242, %244 : vector<8x256xf32>
    %c48_84 = arith.constant 48 : index
    %c256_85 = arith.constant 256 : index
    %246 = vector.load %arg6[%c48_84, %c256_85] : memref<64x512xf32, #tpu.memory_space<vmem>>, vector<8x256xf32>
    %c168_86 = arith.constant 168 : index
    %c0_87 = arith.constant 0 : index
    %247 = vector.load %arg1[%c168_86, %c0_87] : memref<368x256xf32, #tpu.memory_space<vmem>>, vector<64x256xf32>
    %cst_88 = arith.constant dense<0.000000e+00> : vector<8x256xf32>
    %248 = tpu.matmul %239, %247, %cst_88 {dimension_numbers = #tpu.dot_dimension_numbers<[1], [0], [0], [1], [0, 0, 1, 1], [], []>} : vector<8x64xf32>, vector<64x256xf32>, vector<8x256xf32> -> vector<8x256xf32>
    %249 = arith.addf %246, %248 : vector<8x256xf32>
    %250 = vector.extract_strided_slice %245 {offsets = [0, 0], sizes = [8, 192], strides = [1, 1]} : vector<8x256xf32> to vector<8x192xf32>
    %251 = arith.negf %250 : vector<8x192xf32>
    %252 = math.exp %251 : vector<8x192xf32>
    %cst_89 = arith.constant 1.000000e+00 : f32
    %253 = vector.broadcast %cst_89 : f32 to vector<8x192xf32>
    %254 = arith.addf %253, %252 : vector<8x192xf32>
    %255 = arith.divf %253, %254 : vector<8x192xf32>
    %256 = vector.extract_strided_slice %245 {offsets = [0, 192], sizes = [8, 64], strides = [1, 1]} : vector<8x256xf32> to vector<8x64xf32>
    %257 = math.tanh %256 : vector<8x64xf32>
    %258 = vector.extract_strided_slice %249 {offsets = [0, 0], sizes = [8, 192], strides = [1, 1]} : vector<8x256xf32> to vector<8x192xf32>
    %259 = arith.negf %258 : vector<8x192xf32>
    %260 = math.exp %259 : vector<8x192xf32>
    %cst_90 = arith.constant 1.000000e+00 : f32
    %261 = vector.broadcast %cst_90 : f32 to vector<8x192xf32>
    %262 = arith.addf %261, %260 : vector<8x192xf32>
    %263 = arith.divf %261, %262 : vector<8x192xf32>
    %264 = vector.extract_strided_slice %249 {offsets = [0, 192], sizes = [8, 64], strides = [1, 1]} : vector<8x256xf32> to vector<8x64xf32>
    %265 = math.tanh %264 : vector<8x64xf32>
    %266 = vector.extract_strided_slice %255 {offsets = [0, 64], sizes = [8, 64], strides = [1, 1]} : vector<8x192xf32> to vector<8x64xf32>
    %267 = arith.mulf %266, %228 : vector<8x64xf32>
    %268 = vector.extract_strided_slice %255 {offsets = [0, 0], sizes = [8, 64], strides = [1, 1]} : vector<8x192xf32> to vector<8x64xf32>
    %269 = arith.mulf %268, %257 : vector<8x64xf32>
    %270 = arith.addf %267, %269 : vector<8x64xf32>
    %271 = vector.extract_strided_slice %255 {offsets = [0, 128], sizes = [8, 64], strides = [1, 1]} : vector<8x192xf32> to vector<8x64xf32>
    %272 = math.tanh %270 : vector<8x64xf32>
    %273 = arith.mulf %271, %272 : vector<8x64xf32>
    %274 = vector.extract_strided_slice %263 {offsets = [0, 64], sizes = [8, 64], strides = [1, 1]} : vector<8x192xf32> to vector<8x64xf32>
    %275 = arith.mulf %274, %236 : vector<8x64xf32>
    %276 = vector.extract_strided_slice %263 {offsets = [0, 0], sizes = [8, 64], strides = [1, 1]} : vector<8x192xf32> to vector<8x64xf32>
    %277 = arith.mulf %276, %265 : vector<8x64xf32>
    %278 = arith.addf %275, %277 : vector<8x64xf32>
    %279 = vector.extract_strided_slice %263 {offsets = [0, 128], sizes = [8, 64], strides = [1, 1]} : vector<8x192xf32> to vector<8x64xf32>
    %280 = math.tanh %278 : vector<8x64xf32>
    %281 = arith.mulf %279, %280 : vector<8x64xf32>
    %c8_91 = arith.constant 8 : index
    %c0_92 = arith.constant 0 : index
    %282 = vector.load %arg7[%c8_91, %c0_92] : memref<64x64xf32, #tpu.memory_space<vmem>>, vector<8x64xf32>
    tpu.vector_store %arg7[%c8_91, %c0_92], %273 {strides = array<i32>} : memref<64x64xf32, #tpu.memory_space<vmem>>, vector<8x64xf32>,
    %c48_93 = arith.constant 48 : index
    %c0_94 = arith.constant 0 : index
    %283 = vector.load %arg8[%c48_93, %c0_94] : memref<64x64xf32, #tpu.memory_space<vmem>>, vector<8x64xf32>
    tpu.vector_store %arg8[%c48_93, %c0_94], %281 {strides = array<i32>} : memref<64x64xf32, #tpu.memory_space<vmem>>, vector<8x64xf32>,
    %c16_95 = arith.constant 16 : index
    %c0_96 = arith.constant 0 : index
    %284 = vector.load %arg6[%c16_95, %c0_96] : memref<64x512xf32, #tpu.memory_space<vmem>>, vector<8x256xf32>
    %c104_97 = arith.constant 104 : index
    %c0_98 = arith.constant 0 : index
    %285 = vector.load %arg1[%c104_97, %c0_98] : memref<368x256xf32, #tpu.memory_space<vmem>>, vector<64x256xf32>
    %cst_99 = arith.constant dense<0.000000e+00> : vector<8x256xf32>
    %286 = tpu.matmul %273, %285, %cst_99 {dimension_numbers = #tpu.dot_dimension_numbers<[1], [0], [0], [1], [0, 0, 1, 1], [], []>} : vector<8x64xf32>, vector<64x256xf32>, vector<8x256xf32> -> vector<8x256xf32>
    %287 = arith.addf %284, %286 : vector<8x256xf32>
    %c40_100 = arith.constant 40 : index
    %c256_101 = arith.constant 256 : index
    %288 = vector.load %arg6[%c40_100, %c256_101] : memref<64x512xf32, #tpu.memory_space<vmem>>, vector<8x256xf32>
    %c168_102 = arith.constant 168 : index
    %c0_103 = arith.constant 0 : index
    %289 = vector.load %arg1[%c168_102, %c0_103] : memref<368x256xf32, #tpu.memory_space<vmem>>, vector<64x256xf32>
    %cst_104 = arith.constant dense<0.000000e+00> : vector<8x256xf32>
    %290 = tpu.matmul %281, %289, %cst_104 {dimension_numbers = #tpu.dot_dimension_numbers<[1], [0], [0], [1], [0, 0, 1, 1], [], []>} : vector<8x64xf32>, vector<64x256xf32>, vector<8x256xf32> -> vector<8x256xf32>
    %291 = arith.addf %288, %290 : vector<8x256xf32>
    %292 = vector.extract_strided_slice %287 {offsets = [0, 0], sizes = [8, 192], strides = [1, 1]} : vector<8x256xf32> to vector<8x192xf32>
    %293 = arith.negf %292 : vector<8x192xf32>
    %294 = math.exp %293 : vector<8x192xf32>
    %cst_105 = arith.constant 1.000000e+00 : f32
    %295 = vector.broadcast %cst_105 : f32 to vector<8x192xf32>
    %296 = arith.addf %295, %294 : vector<8x192xf32>
    %297 = arith.divf %295, %296 : vector<8x192xf32>
    %298 = vector.extract_strided_slice %287 {offsets = [0, 192], sizes = [8, 64], strides = [1, 1]} : vector<8x256xf32> to vector<8x64xf32>
    %299 = math.tanh %298 : vector<8x64xf32>
    %300 = vector.extract_strided_slice %291 {offsets = [0, 0], sizes = [8, 192], strides = [1, 1]} : vector<8x256xf32> to vector<8x192xf32>
    %301 = arith.negf %300 : vector<8x192xf32>
    %302 = math.exp %301 : vector<8x192xf32>
    %cst_106 = arith.constant 1.000000e+00 : f32
    %303 = vector.broadcast %cst_106 : f32 to vector<8x192xf32>
    %304 = arith.addf %303, %302 : vector<8x192xf32>
    %305 = arith.divf %303, %304 : vector<8x192xf32>
    %306 = vector.extract_strided_slice %291 {offsets = [0, 192], sizes = [8, 64], strides = [1, 1]} : vector<8x256xf32> to vector<8x64xf32>
    %307 = math.tanh %306 : vector<8x64xf32>
    %308 = vector.extract_strided_slice %297 {offsets = [0, 64], sizes = [8, 64], strides = [1, 1]} : vector<8x192xf32> to vector<8x64xf32>
    %309 = arith.mulf %308, %270 : vector<8x64xf32>
    %310 = vector.extract_strided_slice %297 {offsets = [0, 0], sizes = [8, 64], strides = [1, 1]} : vector<8x192xf32> to vector<8x64xf32>
    %311 = arith.mulf %310, %299 : vector<8x64xf32>
    %312 = arith.addf %309, %311 : vector<8x64xf32>
    %313 = vector.extract_strided_slice %297 {offsets = [0, 128], sizes = [8, 64], strides = [1, 1]} : vector<8x192xf32> to vector<8x64xf32>
    %314 = math.tanh %312 : vector<8x64xf32>
    %315 = arith.mulf %313, %314 : vector<8x64xf32>
    %316 = vector.extract_strided_slice %305 {offsets = [0, 64], sizes = [8, 64], strides = [1, 1]} : vector<8x192xf32> to vector<8x64xf32>
    %317 = arith.mulf %316, %278 : vector<8x64xf32>
    %318 = vector.extract_strided_slice %305 {offsets = [0, 0], sizes = [8, 64], strides = [1, 1]} : vector<8x192xf32> to vector<8x64xf32>
    %319 = arith.mulf %318, %307 : vector<8x64xf32>
    %320 = arith.addf %317, %319 : vector<8x64xf32>
    %321 = vector.extract_strided_slice %305 {offsets = [0, 128], sizes = [8, 64], strides = [1, 1]} : vector<8x192xf32> to vector<8x64xf32>
    %322 = math.tanh %320 : vector<8x64xf32>
    %323 = arith.mulf %321, %322 : vector<8x64xf32>
    %c16_107 = arith.constant 16 : index
    %c0_108 = arith.constant 0 : index
    %324 = vector.load %arg7[%c16_107, %c0_108] : memref<64x64xf32, #tpu.memory_space<vmem>>, vector<8x64xf32>
    tpu.vector_store %arg7[%c16_107, %c0_108], %315 {strides = array<i32>} : memref<64x64xf32, #tpu.memory_space<vmem>>, vector<8x64xf32>,
    %c40_109 = arith.constant 40 : index
    %c0_110 = arith.constant 0 : index
    %325 = vector.load %arg8[%c40_109, %c0_110] : memref<64x64xf32, #tpu.memory_space<vmem>>, vector<8x64xf32>
    tpu.vector_store %arg8[%c40_109, %c0_110], %323 {strides = array<i32>} : memref<64x64xf32, #tpu.memory_space<vmem>>, vector<8x64xf32>,
    %c24_111 = arith.constant 24 : index
    %c0_112 = arith.constant 0 : index
    %326 = vector.load %arg6[%c24_111, %c0_112] : memref<64x512xf32, #tpu.memory_space<vmem>>, vector<8x256xf32>
    %c104_113 = arith.constant 104 : index
    %c0_114 = arith.constant 0 : index
    %327 = vector.load %arg1[%c104_113, %c0_114] : memref<368x256xf32, #tpu.memory_space<vmem>>, vector<64x256xf32>
    %cst_115 = arith.constant dense<0.000000e+00> : vector<8x256xf32>
    %328 = tpu.matmul %315, %327, %cst_115 {dimension_numbers = #tpu.dot_dimension_numbers<[1], [0], [0], [1], [0, 0, 1, 1], [], []>} : vector<8x64xf32>, vector<64x256xf32>, vector<8x256xf32> -> vector<8x256xf32>
    %329 = arith.addf %326, %328 : vector<8x256xf32>
    %c32_116 = arith.constant 32 : index
    %c256_117 = arith.constant 256 : index
    %330 = vector.load %arg6[%c32_116, %c256_117] : memref<64x512xf32, #tpu.memory_space<vmem>>, vector<8x256xf32>
    %c168_118 = arith.constant 168 : index
    %c0_119 = arith.constant 0 : index
    %331 = vector.load %arg1[%c168_118, %c0_119] : memref<368x256xf32, #tpu.memory_space<vmem>>, vector<64x256xf32>
    %cst_120 = arith.constant dense<0.000000e+00> : vector<8x256xf32>
    %332 = tpu.matmul %323, %331, %cst_120 {dimension_numbers = #tpu.dot_dimension_numbers<[1], [0], [0], [1], [0, 0, 1, 1], [], []>} : vector<8x64xf32>, vector<64x256xf32>, vector<8x256xf32> -> vector<8x256xf32>
    %333 = arith.addf %330, %332 : vector<8x256xf32>
    %334 = vector.extract_strided_slice %329 {offsets = [0, 0], sizes = [8, 192], strides = [1, 1]} : vector<8x256xf32> to vector<8x192xf32>
    %335 = arith.negf %334 : vector<8x192xf32>
    %336 = math.exp %335 : vector<8x192xf32>
    %cst_121 = arith.constant 1.000000e+00 : f32
    %337 = vector.broadcast %cst_121 : f32 to vector<8x192xf32>
    %338 = arith.addf %337, %336 : vector<8x192xf32>
    %339 = arith.divf %337, %338 : vector<8x192xf32>
    %340 = vector.extract_strided_slice %329 {offsets = [0, 192], sizes = [8, 64], strides = [1, 1]} : vector<8x256xf32> to vector<8x64xf32>
    %341 = math.tanh %340 : vector<8x64xf32>
    %342 = vector.extract_strided_slice %333 {offsets = [0, 0], sizes = [8, 192], strides = [1, 1]} : vector<8x256xf32> to vector<8x192xf32>
    %343 = arith.negf %342 : vector<8x192xf32>
    %344 = math.exp %343 : vector<8x192xf32>
    %cst_122 = arith.constant 1.000000e+00 : f32
    %345 = vector.broadcast %cst_122 : f32 to vector<8x192xf32>
    %346 = arith.addf %345, %344 : vector<8x192xf32>
    %347 = arith.divf %345, %346 : vector<8x192xf32>
    %348 = vector.extract_strided_slice %333 {offsets = [0, 192], sizes = [8, 64], strides = [1, 1]} : vector<8x256xf32> to vector<8x64xf32>
    %349 = math.tanh %348 : vector<8x64xf32>
    %350 = vector.extract_strided_slice %339 {offsets = [0, 64], sizes = [8, 64], strides = [1, 1]} : vector<8x192xf32> to vector<8x64xf32>
    %351 = arith.mulf %350, %312 : vector<8x64xf32>
    %352 = vector.extract_strided_slice %339 {offsets = [0, 0], sizes = [8, 64], strides = [1, 1]} : vector<8x192xf32> to vector<8x64xf32>
    %353 = arith.mulf %352, %341 : vector<8x64xf32>
    %354 = arith.addf %351, %353 : vector<8x64xf32>
    %355 = vector.extract_strided_slice %339 {offsets = [0, 128], sizes = [8, 64], strides = [1, 1]} : vector<8x192xf32> to vector<8x64xf32>
    %356 = math.tanh %354 : vector<8x64xf32>
    %357 = arith.mulf %355, %356 : vector<8x64xf32>
    %358 = vector.extract_strided_slice %347 {offsets = [0, 64], sizes = [8, 64], strides = [1, 1]} : vector<8x192xf32> to vector<8x64xf32>
    %359 = arith.mulf %358, %320 : vector<8x64xf32>
    %360 = vector.extract_strided_slice %347 {offsets = [0, 0], sizes = [8, 64], strides = [1, 1]} : vector<8x192xf32> to vector<8x64xf32>
    %361 = arith.mulf %360, %349 : vector<8x64xf32>
    %362 = arith.addf %359, %361 : vector<8x64xf32>
    %363 = vector.extract_strided_slice %347 {offsets = [0, 128], sizes = [8, 64], strides = [1, 1]} : vector<8x192xf32> to vector<8x64xf32>
    %364 = math.tanh %362 : vector<8x64xf32>
    %365 = arith.mulf %363, %364 : vector<8x64xf32>
    %c24_123 = arith.constant 24 : index
    %c0_124 = arith.constant 0 : index
    %366 = vector.load %arg7[%c24_123, %c0_124] : memref<64x64xf32, #tpu.memory_space<vmem>>, vector<8x64xf32>
    tpu.vector_store %arg7[%c24_123, %c0_124], %357 {strides = array<i32>} : memref<64x64xf32, #tpu.memory_space<vmem>>, vector<8x64xf32>,
    %c32_125 = arith.constant 32 : index
    %c0_126 = arith.constant 0 : index
    %367 = vector.load %arg8[%c32_125, %c0_126] : memref<64x64xf32, #tpu.memory_space<vmem>>, vector<8x64xf32>
    tpu.vector_store %arg8[%c32_125, %c0_126], %365 {strides = array<i32>} : memref<64x64xf32, #tpu.memory_space<vmem>>, vector<8x64xf32>,
    %c32_127 = arith.constant 32 : index
    %c0_128 = arith.constant 0 : index
    %368 = vector.load %arg6[%c32_127, %c0_128] : memref<64x512xf32, #tpu.memory_space<vmem>>, vector<8x256xf32>
    %c104_129 = arith.constant 104 : index
    %c0_130 = arith.constant 0 : index
    %369 = vector.load %arg1[%c104_129, %c0_130] : memref<368x256xf32, #tpu.memory_space<vmem>>, vector<64x256xf32>
    %cst_131 = arith.constant dense<0.000000e+00> : vector<8x256xf32>
    %370 = tpu.matmul %357, %369, %cst_131 {dimension_numbers = #tpu.dot_dimension_numbers<[1], [0], [0], [1], [0, 0, 1, 1], [], []>} : vector<8x64xf32>, vector<64x256xf32>, vector<8x256xf32> -> vector<8x256xf32>
    %371 = arith.addf %368, %370 : vector<8x256xf32>
    %c24_132 = arith.constant 24 : index
    %c256_133 = arith.constant 256 : index
    %372 = vector.load %arg6[%c24_132, %c256_133] : memref<64x512xf32, #tpu.memory_space<vmem>>, vector<8x256xf32>
    %c168_134 = arith.constant 168 : index
    %c0_135 = arith.constant 0 : index
    %373 = vector.load %arg1[%c168_134, %c0_135] : memref<368x256xf32, #tpu.memory_space<vmem>>, vector<64x256xf32>
    %cst_136 = arith.constant dense<0.000000e+00> : vector<8x256xf32>
    %374 = tpu.matmul %365, %373, %cst_136 {dimension_numbers = #tpu.dot_dimension_numbers<[1], [0], [0], [1], [0, 0, 1, 1], [], []>} : vector<8x64xf32>, vector<64x256xf32>, vector<8x256xf32> -> vector<8x256xf32>
    %375 = arith.addf %372, %374 : vector<8x256xf32>
    %376 = vector.extract_strided_slice %371 {offsets = [0, 0], sizes = [8, 192], strides = [1, 1]} : vector<8x256xf32> to vector<8x192xf32>
    %377 = arith.negf %376 : vector<8x192xf32>
    %378 = math.exp %377 : vector<8x192xf32>
    %cst_137 = arith.constant 1.000000e+00 : f32
    %379 = vector.broadcast %cst_137 : f32 to vector<8x192xf32>
    %380 = arith.addf %379, %378 : vector<8x192xf32>
    %381 = arith.divf %379, %380 : vector<8x192xf32>
    %382 = vector.extract_strided_slice %371 {offsets = [0, 192], sizes = [8, 64], strides = [1, 1]} : vector<8x256xf32> to vector<8x64xf32>
    %383 = math.tanh %382 : vector<8x64xf32>
    %384 = vector.extract_strided_slice %375 {offsets = [0, 0], sizes = [8, 192], strides = [1, 1]} : vector<8x256xf32> to vector<8x192xf32>
    %385 = arith.negf %384 : vector<8x192xf32>
    %386 = math.exp %385 : vector<8x192xf32>
    %cst_138 = arith.constant 1.000000e+00 : f32
    %387 = vector.broadcast %cst_138 : f32 to vector<8x192xf32>
    %388 = arith.addf %387, %386 : vector<8x192xf32>
    %389 = arith.divf %387, %388 : vector<8x192xf32>
    %390 = vector.extract_strided_slice %375 {offsets = [0, 192], sizes = [8, 64], strides = [1, 1]} : vector<8x256xf32> to vector<8x64xf32>
    %391 = math.tanh %390 : vector<8x64xf32>
    %392 = vector.extract_strided_slice %381 {offsets = [0, 64], sizes = [8, 64], strides = [1, 1]} : vector<8x192xf32> to vector<8x64xf32>
    %393 = arith.mulf %392, %354 : vector<8x64xf32>
    %394 = vector.extract_strided_slice %381 {offsets = [0, 0], sizes = [8, 64], strides = [1, 1]} : vector<8x192xf32> to vector<8x64xf32>
    %395 = arith.mulf %394, %383 : vector<8x64xf32>
    %396 = arith.addf %393, %395 : vector<8x64xf32>
    %397 = vector.extract_strided_slice %381 {offsets = [0, 128], sizes = [8, 64], strides = [1, 1]} : vector<8x192xf32> to vector<8x64xf32>
    %398 = math.tanh %396 : vector<8x64xf32>
    %399 = arith.mulf %397, %398 : vector<8x64xf32>
    %400 = vector.extract_strided_slice %389 {offsets = [0, 64], sizes = [8, 64], strides = [1, 1]} : vector<8x192xf32> to vector<8x64xf32>
    %401 = arith.mulf %400, %362 : vector<8x64xf32>
    %402 = vector.extract_strided_slice %389 {offsets = [0, 0], sizes = [8, 64], strides = [1, 1]} : vector<8x192xf32> to vector<8x64xf32>
    %403 = arith.mulf %402, %391 : vector<8x64xf32>
    %404 = arith.addf %401, %403 : vector<8x64xf32>
    %405 = vector.extract_strided_slice %389 {offsets = [0, 128], sizes = [8, 64], strides = [1, 1]} : vector<8x192xf32> to vector<8x64xf32>
    %406 = math.tanh %404 : vector<8x64xf32>
    %407 = arith.mulf %405, %406 : vector<8x64xf32>
    %c32_139 = arith.constant 32 : index
    %c0_140 = arith.constant 0 : index
    %408 = vector.load %arg7[%c32_139, %c0_140] : memref<64x64xf32, #tpu.memory_space<vmem>>, vector<8x64xf32>
    tpu.vector_store %arg7[%c32_139, %c0_140], %399 {strides = array<i32>} : memref<64x64xf32, #tpu.memory_space<vmem>>, vector<8x64xf32>,
    %c24_141 = arith.constant 24 : index
    %c0_142 = arith.constant 0 : index
    %409 = vector.load %arg8[%c24_141, %c0_142] : memref<64x64xf32, #tpu.memory_space<vmem>>, vector<8x64xf32>
    tpu.vector_store %arg8[%c24_141, %c0_142], %407 {strides = array<i32>} : memref<64x64xf32, #tpu.memory_space<vmem>>, vector<8x64xf32>,
    %c40_143 = arith.constant 40 : index
    %c0_144 = arith.constant 0 : index
    %410 = vector.load %arg6[%c40_143, %c0_144] : memref<64x512xf32, #tpu.memory_space<vmem>>, vector<8x256xf32>
    %c104_145 = arith.constant 104 : index
    %c0_146 = arith.constant 0 : index
    %411 = vector.load %arg1[%c104_145, %c0_146] : memref<368x256xf32, #tpu.memory_space<vmem>>, vector<64x256xf32>
    %cst_147 = arith.constant dense<0.000000e+00> : vector<8x256xf32>
    %412 = tpu.matmul %399, %411, %cst_147 {dimension_numbers = #tpu.dot_dimension_numbers<[1], [0], [0], [1], [0, 0, 1, 1], [], []>} : vector<8x64xf32>, vector<64x256xf32>, vector<8x256xf32> -> vector<8x256xf32>
    %413 = arith.addf %410, %412 : vector<8x256xf32>
    %c16_148 = arith.constant 16 : index
    %c256_149 = arith.constant 256 : index
    %414 = vector.load %arg6[%c16_148, %c256_149] : memref<64x512xf32, #tpu.memory_space<vmem>>, vector<8x256xf32>
    %c168_150 = arith.constant 168 : index
    %c0_151 = arith.constant 0 : index
    %415 = vector.load %arg1[%c168_150, %c0_151] : memref<368x256xf32, #tpu.memory_space<vmem>>, vector<64x256xf32>
    %cst_152 = arith.constant dense<0.000000e+00> : vector<8x256xf32>
    %416 = tpu.matmul %407, %415, %cst_152 {dimension_numbers = #tpu.dot_dimension_numbers<[1], [0], [0], [1], [0, 0, 1, 1], [], []>} : vector<8x64xf32>, vector<64x256xf32>, vector<8x256xf32> -> vector<8x256xf32>
    %417 = arith.addf %414, %416 : vector<8x256xf32>
    %418 = vector.extract_strided_slice %413 {offsets = [0, 0], sizes = [8, 192], strides = [1, 1]} : vector<8x256xf32> to vector<8x192xf32>
    %419 = arith.negf %418 : vector<8x192xf32>
    %420 = math.exp %419 : vector<8x192xf32>
    %cst_153 = arith.constant 1.000000e+00 : f32
    %421 = vector.broadcast %cst_153 : f32 to vector<8x192xf32>
    %422 = arith.addf %421, %420 : vector<8x192xf32>
    %423 = arith.divf %421, %422 : vector<8x192xf32>
    %424 = vector.extract_strided_slice %413 {offsets = [0, 192], sizes = [8, 64], strides = [1, 1]} : vector<8x256xf32> to vector<8x64xf32>
    %425 = math.tanh %424 : vector<8x64xf32>
    %426 = vector.extract_strided_slice %417 {offsets = [0, 0], sizes = [8, 192], strides = [1, 1]} : vector<8x256xf32> to vector<8x192xf32>
    %427 = arith.negf %426 : vector<8x192xf32>
    %428 = math.exp %427 : vector<8x192xf32>
    %cst_154 = arith.constant 1.000000e+00 : f32
    %429 = vector.broadcast %cst_154 : f32 to vector<8x192xf32>
    %430 = arith.addf %429, %428 : vector<8x192xf32>
    %431 = arith.divf %429, %430 : vector<8x192xf32>
    %432 = vector.extract_strided_slice %417 {offsets = [0, 192], sizes = [8, 64], strides = [1, 1]} : vector<8x256xf32> to vector<8x64xf32>
    %433 = math.tanh %432 : vector<8x64xf32>
    %434 = vector.extract_strided_slice %423 {offsets = [0, 64], sizes = [8, 64], strides = [1, 1]} : vector<8x192xf32> to vector<8x64xf32>
    %435 = arith.mulf %434, %396 : vector<8x64xf32>
    %436 = vector.extract_strided_slice %423 {offsets = [0, 0], sizes = [8, 64], strides = [1, 1]} : vector<8x192xf32> to vector<8x64xf32>
    %437 = arith.mulf %436, %425 : vector<8x64xf32>
    %438 = arith.addf %435, %437 : vector<8x64xf32>
    %439 = vector.extract_strided_slice %423 {offsets = [0, 128], sizes = [8, 64], strides = [1, 1]} : vector<8x192xf32> to vector<8x64xf32>
    %440 = math.tanh %438 : vector<8x64xf32>
    %441 = arith.mulf %439, %440 : vector<8x64xf32>
    %442 = vector.extract_strided_slice %431 {offsets = [0, 64], sizes = [8, 64], strides = [1, 1]} : vector<8x192xf32> to vector<8x64xf32>
    %443 = arith.mulf %442, %404 : vector<8x64xf32>
    %444 = vector.extract_strided_slice %431 {offsets = [0, 0], sizes = [8, 64], strides = [1, 1]} : vector<8x192xf32> to vector<8x64xf32>
    %445 = arith.mulf %444, %433 : vector<8x64xf32>
    %446 = arith.addf %443, %445 : vector<8x64xf32>
    %447 = vector.extract_strided_slice %431 {offsets = [0, 128], sizes = [8, 64], strides = [1, 1]} : vector<8x192xf32> to vector<8x64xf32>
    %448 = math.tanh %446 : vector<8x64xf32>
    %449 = arith.mulf %447, %448 : vector<8x64xf32>
    %c40_155 = arith.constant 40 : index
    %c0_156 = arith.constant 0 : index
    %450 = vector.load %arg7[%c40_155, %c0_156] : memref<64x64xf32, #tpu.memory_space<vmem>>, vector<8x64xf32>
    tpu.vector_store %arg7[%c40_155, %c0_156], %441 {strides = array<i32>} : memref<64x64xf32, #tpu.memory_space<vmem>>, vector<8x64xf32>,
    %c16_157 = arith.constant 16 : index
    %c0_158 = arith.constant 0 : index
    %451 = vector.load %arg8[%c16_157, %c0_158] : memref<64x64xf32, #tpu.memory_space<vmem>>, vector<8x64xf32>
    tpu.vector_store %arg8[%c16_157, %c0_158], %449 {strides = array<i32>} : memref<64x64xf32, #tpu.memory_space<vmem>>, vector<8x64xf32>,
    %c48_159 = arith.constant 48 : index
    %c0_160 = arith.constant 0 : index
    %452 = vector.load %arg6[%c48_159, %c0_160] : memref<64x512xf32, #tpu.memory_space<vmem>>, vector<8x256xf32>
    %c104_161 = arith.constant 104 : index
    %c0_162 = arith.constant 0 : index
    %453 = vector.load %arg1[%c104_161, %c0_162] : memref<368x256xf32, #tpu.memory_space<vmem>>, vector<64x256xf32>
    %cst_163 = arith.constant dense<0.000000e+00> : vector<8x256xf32>
    %454 = tpu.matmul %441, %453, %cst_163 {dimension_numbers = #tpu.dot_dimension_numbers<[1], [0], [0], [1], [0, 0, 1, 1], [], []>} : vector<8x64xf32>, vector<64x256xf32>, vector<8x256xf32> -> vector<8x256xf32>
    %455 = arith.addf %452, %454 : vector<8x256xf32>
    %c8_164 = arith.constant 8 : index
    %c256_165 = arith.constant 256 : index
    %456 = vector.load %arg6[%c8_164, %c256_165] : memref<64x512xf32, #tpu.memory_space<vmem>>, vector<8x256xf32>
    %c168_166 = arith.constant 168 : index
    %c0_167 = arith.constant 0 : index
    %457 = vector.load %arg1[%c168_166, %c0_167] : memref<368x256xf32, #tpu.memory_space<vmem>>, vector<64x256xf32>
    %cst_168 = arith.constant dense<0.000000e+00> : vector<8x256xf32>
    %458 = tpu.matmul %449, %457, %cst_168 {dimension_numbers = #tpu.dot_dimension_numbers<[1], [0], [0], [1], [0, 0, 1, 1], [], []>} : vector<8x64xf32>, vector<64x256xf32>, vector<8x256xf32> -> vector<8x256xf32>
    %459 = arith.addf %456, %458 : vector<8x256xf32>
    %460 = vector.extract_strided_slice %455 {offsets = [0, 0], sizes = [8, 192], strides = [1, 1]} : vector<8x256xf32> to vector<8x192xf32>
    %461 = arith.negf %460 : vector<8x192xf32>
    %462 = math.exp %461 : vector<8x192xf32>
    %cst_169 = arith.constant 1.000000e+00 : f32
    %463 = vector.broadcast %cst_169 : f32 to vector<8x192xf32>
    %464 = arith.addf %463, %462 : vector<8x192xf32>
    %465 = arith.divf %463, %464 : vector<8x192xf32>
    %466 = vector.extract_strided_slice %455 {offsets = [0, 192], sizes = [8, 64], strides = [1, 1]} : vector<8x256xf32> to vector<8x64xf32>
    %467 = math.tanh %466 : vector<8x64xf32>
    %468 = vector.extract_strided_slice %459 {offsets = [0, 0], sizes = [8, 192], strides = [1, 1]} : vector<8x256xf32> to vector<8x192xf32>
    %469 = arith.negf %468 : vector<8x192xf32>
    %470 = math.exp %469 : vector<8x192xf32>
    %cst_170 = arith.constant 1.000000e+00 : f32
    %471 = vector.broadcast %cst_170 : f32 to vector<8x192xf32>
    %472 = arith.addf %471, %470 : vector<8x192xf32>
    %473 = arith.divf %471, %472 : vector<8x192xf32>
    %474 = vector.extract_strided_slice %459 {offsets = [0, 192], sizes = [8, 64], strides = [1, 1]} : vector<8x256xf32> to vector<8x64xf32>
    %475 = math.tanh %474 : vector<8x64xf32>
    %476 = vector.extract_strided_slice %465 {offsets = [0, 64], sizes = [8, 64], strides = [1, 1]} : vector<8x192xf32> to vector<8x64xf32>
    %477 = arith.mulf %476, %438 : vector<8x64xf32>
    %478 = vector.extract_strided_slice %465 {offsets = [0, 0], sizes = [8, 64], strides = [1, 1]} : vector<8x192xf32> to vector<8x64xf32>
    %479 = arith.mulf %478, %467 : vector<8x64xf32>
    %480 = arith.addf %477, %479 : vector<8x64xf32>
    %481 = vector.extract_strided_slice %465 {offsets = [0, 128], sizes = [8, 64], strides = [1, 1]} : vector<8x192xf32> to vector<8x64xf32>
    %482 = math.tanh %480 : vector<8x64xf32>
    %483 = arith.mulf %481, %482 : vector<8x64xf32>
    %484 = vector.extract_strided_slice %473 {offsets = [0, 64], sizes = [8, 64], strides = [1, 1]} : vector<8x192xf32> to vector<8x64xf32>
    %485 = arith.mulf %484, %446 : vector<8x64xf32>
    %486 = vector.extract_strided_slice %473 {offsets = [0, 0], sizes = [8, 64], strides = [1, 1]} : vector<8x192xf32> to vector<8x64xf32>
    %487 = arith.mulf %486, %475 : vector<8x64xf32>
    %488 = arith.addf %485, %487 : vector<8x64xf32>
    %489 = vector.extract_strided_slice %473 {offsets = [0, 128], sizes = [8, 64], strides = [1, 1]} : vector<8x192xf32> to vector<8x64xf32>
    %490 = math.tanh %488 : vector<8x64xf32>
    %491 = arith.mulf %489, %490 : vector<8x64xf32>
    %c48_171 = arith.constant 48 : index
    %c0_172 = arith.constant 0 : index
    %492 = vector.load %arg7[%c48_171, %c0_172] : memref<64x64xf32, #tpu.memory_space<vmem>>, vector<8x64xf32>
    tpu.vector_store %arg7[%c48_171, %c0_172], %483 {strides = array<i32>} : memref<64x64xf32, #tpu.memory_space<vmem>>, vector<8x64xf32>,
    %c8_173 = arith.constant 8 : index
    %c0_174 = arith.constant 0 : index
    %493 = vector.load %arg8[%c8_173, %c0_174] : memref<64x64xf32, #tpu.memory_space<vmem>>, vector<8x64xf32>
    tpu.vector_store %arg8[%c8_173, %c0_174], %491 {strides = array<i32>} : memref<64x64xf32, #tpu.memory_space<vmem>>, vector<8x64xf32>,
    %c56_175 = arith.constant 56 : index
    %c0_176 = arith.constant 0 : index
    %494 = vector.load %arg6[%c56_175, %c0_176] : memref<64x512xf32, #tpu.memory_space<vmem>>, vector<8x256xf32>
    %c104_177 = arith.constant 104 : index
    %c0_178 = arith.constant 0 : index
    %495 = vector.load %arg1[%c104_177, %c0_178] : memref<368x256xf32, #tpu.memory_space<vmem>>, vector<64x256xf32>
    %cst_179 = arith.constant dense<0.000000e+00> : vector<8x256xf32>
    %496 = tpu.matmul %483, %495, %cst_179 {dimension_numbers = #tpu.dot_dimension_numbers<[1], [0], [0], [1], [0, 0, 1, 1], [], []>} : vector<8x64xf32>, vector<64x256xf32>, vector<8x256xf32> -> vector<8x256xf32>
    %497 = arith.addf %494, %496 : vector<8x256xf32>
    %c0_180 = arith.constant 0 : index
    %c256_181 = arith.constant 256 : index
    %498 = vector.load %arg6[%c0_180, %c256_181] : memref<64x512xf32, #tpu.memory_space<vmem>>, vector<8x256xf32>
    %c168_182 = arith.constant 168 : index
    %c0_183 = arith.constant 0 : index
    %499 = vector.load %arg1[%c168_182, %c0_183] : memref<368x256xf32, #tpu.memory_space<vmem>>, vector<64x256xf32>
    %cst_184 = arith.constant dense<0.000000e+00> : vector<8x256xf32>
    %500 = tpu.matmul %491, %499, %cst_184 {dimension_numbers = #tpu.dot_dimension_numbers<[1], [0], [0], [1], [0, 0, 1, 1], [], []>} : vector<8x64xf32>, vector<64x256xf32>, vector<8x256xf32> -> vector<8x256xf32>
    %501 = arith.addf %498, %500 : vector<8x256xf32>
    %502 = vector.extract_strided_slice %497 {offsets = [0, 0], sizes = [8, 192], strides = [1, 1]} : vector<8x256xf32> to vector<8x192xf32>
    %503 = arith.negf %502 : vector<8x192xf32>
    %504 = math.exp %503 : vector<8x192xf32>
    %cst_185 = arith.constant 1.000000e+00 : f32
    %505 = vector.broadcast %cst_185 : f32 to vector<8x192xf32>
    %506 = arith.addf %505, %504 : vector<8x192xf32>
    %507 = arith.divf %505, %506 : vector<8x192xf32>
    %508 = vector.extract_strided_slice %497 {offsets = [0, 192], sizes = [8, 64], strides = [1, 1]} : vector<8x256xf32> to vector<8x64xf32>
    %509 = math.tanh %508 : vector<8x64xf32>
    %510 = vector.extract_strided_slice %501 {offsets = [0, 0], sizes = [8, 192], strides = [1, 1]} : vector<8x256xf32> to vector<8x192xf32>
    %511 = arith.negf %510 : vector<8x192xf32>
    %512 = math.exp %511 : vector<8x192xf32>
    %cst_186 = arith.constant 1.000000e+00 : f32
    %513 = vector.broadcast %cst_186 : f32 to vector<8x192xf32>
    %514 = arith.addf %513, %512 : vector<8x192xf32>
    %515 = arith.divf %513, %514 : vector<8x192xf32>
    %516 = vector.extract_strided_slice %501 {offsets = [0, 192], sizes = [8, 64], strides = [1, 1]} : vector<8x256xf32> to vector<8x64xf32>
    %517 = math.tanh %516 : vector<8x64xf32>
    %518 = vector.extract_strided_slice %507 {offsets = [0, 64], sizes = [8, 64], strides = [1, 1]} : vector<8x192xf32> to vector<8x64xf32>
    %519 = arith.mulf %518, %480 : vector<8x64xf32>
    %520 = vector.extract_strided_slice %507 {offsets = [0, 0], sizes = [8, 64], strides = [1, 1]} : vector<8x192xf32> to vector<8x64xf32>
    %521 = arith.mulf %520, %509 : vector<8x64xf32>
    %522 = arith.addf %519, %521 : vector<8x64xf32>
    %523 = vector.extract_strided_slice %507 {offsets = [0, 128], sizes = [8, 64], strides = [1, 1]} : vector<8x192xf32> to vector<8x64xf32>
    %524 = math.tanh %522 : vector<8x64xf32>
    %525 = arith.mulf %523, %524 : vector<8x64xf32>
    %526 = vector.extract_strided_slice %515 {offsets = [0, 64], sizes = [8, 64], strides = [1, 1]} : vector<8x192xf32> to vector<8x64xf32>
    %527 = arith.mulf %526, %488 : vector<8x64xf32>
    %528 = vector.extract_strided_slice %515 {offsets = [0, 0], sizes = [8, 64], strides = [1, 1]} : vector<8x192xf32> to vector<8x64xf32>
    %529 = arith.mulf %528, %517 : vector<8x64xf32>
    %530 = arith.addf %527, %529 : vector<8x64xf32>
    %531 = vector.extract_strided_slice %515 {offsets = [0, 128], sizes = [8, 64], strides = [1, 1]} : vector<8x192xf32> to vector<8x64xf32>
    %532 = math.tanh %530 : vector<8x64xf32>
    %533 = arith.mulf %531, %532 : vector<8x64xf32>
    %c56_187 = arith.constant 56 : index
    %c0_188 = arith.constant 0 : index
    %534 = vector.load %arg7[%c56_187, %c0_188] : memref<64x64xf32, #tpu.memory_space<vmem>>, vector<8x64xf32>
    tpu.vector_store %arg7[%c56_187, %c0_188], %525 {strides = array<i32>} : memref<64x64xf32, #tpu.memory_space<vmem>>, vector<8x64xf32>,
    %c0_189 = arith.constant 0 : index
    %c0_190 = arith.constant 0 : index
    %535 = vector.load %arg8[%c0_189, %c0_190] : memref<64x64xf32, #tpu.memory_space<vmem>>, vector<8x64xf32>
    tpu.vector_store %arg8[%c0_189, %c0_190], %533 {strides = array<i32>} : memref<64x64xf32, #tpu.memory_space<vmem>>, vector<8x64xf32>,
    %c0_191 = arith.constant 0 : index
    %c0_192 = arith.constant 0 : index
    %536 = vector.load %arg7[%c0_191, %c0_192] : memref<64x64xf32, #tpu.memory_space<vmem>>, vector<64x64xf32>
    %c232 = arith.constant 232 : index
    %c0_193 = arith.constant 0 : index
    %537 = vector.load %arg1[%c232, %c0_193] : memref<368x256xf32, #tpu.memory_space<vmem>>, vector<64x128xf32>
    %cst_194 = arith.constant dense<0.000000e+00> : vector<64x128xf32>
    %538 = tpu.matmul %536, %537, %cst_194 {dimension_numbers = #tpu.dot_dimension_numbers<[1], [0], [0], [1], [0, 0, 1, 1], [], []>} : vector<64x64xf32>, vector<64x128xf32>, vector<64x128xf32> -> vector<64x128xf32>
    %c0_195 = arith.constant 0 : index
    %c0_196 = arith.constant 0 : index
    %539 = vector.load %arg8[%c0_195, %c0_196] : memref<64x64xf32, #tpu.memory_space<vmem>>, vector<64x64xf32>
    %c296 = arith.constant 296 : index
    %c0_197 = arith.constant 0 : index
    %540 = vector.load %arg1[%c296, %c0_197] : memref<368x256xf32, #tpu.memory_space<vmem>>, vector<64x128xf32>
    %cst_198 = arith.constant dense<0.000000e+00> : vector<64x128xf32>
    %541 = tpu.matmul %539, %540, %cst_198 {dimension_numbers = #tpu.dot_dimension_numbers<[1], [0], [0], [1], [0, 0, 1, 1], [], []>} : vector<64x64xf32>, vector<64x128xf32>, vector<64x128xf32> -> vector<64x128xf32>
    %542 = arith.addf %538, %541 : vector<64x128xf32>
    %c360 = arith.constant 360 : index
    %c0_199 = arith.constant 0 : index
    %543 = vector.load %arg1[%c360, %c0_199] : memref<368x256xf32, #tpu.memory_space<vmem>>, vector<1x128xf32>
    %544 = vector.broadcast %543 : vector<1x128xf32> to vector<64x128xf32>
    %545 = arith.addf %542, %544 : vector<64x128xf32>
    %c0_200 = arith.constant 0 : index
    %c0_201 = arith.constant 0 : index
    %546 = vector.load %arg3[%c0_200, %c0_201] : memref<64x128xf32, #tpu.memory_space<vmem>>, vector<64x128xf32>
    tpu.vector_store %arg3[%c0_200, %c0_201], %545 {strides = array<i32>} : memref<64x128xf32, #tpu.memory_space<vmem>>, vector<64x128xf32>,
    return
  }
}

</mosaic_0001>

<llo_original>
// kernel: tpu_custom_call.1
$region0: #{tpu_custom_call.1}
  #allocation0 [shape = 'u32[]', space=smem, size = 0x4, offset = 0x4, fixed_abs, tag = 'smem constant byte address 0x4 - core index']
  #allocation1 [shape = 'u32[72,128]{1,0:T(1,128)}', space=vmem, size = 0x9000, scoped, tag = 'internal scratch']
  #allocation2 [shape = 'f32[64,32]{1,0:T(8,128)}', space=vmem, size = 0x8000, scoped, tag = 'scratch operand']
  #allocation3 [shape = 'f32[64,32]{1,0:T(8,128)}', space=vmem, size = 0x8000, scoped, tag = 'scratch operand']
  #allocation4 [shape = 'f32[64,512]{1,0:T(8,128)}', space=vmem, size = 0x20000, scoped, tag = 'scratch operand']
  #allocation5 [shape = 'f32[64,64]{1,0:T(8,128)}', space=vmem, size = 0x8000, scoped, tag = 'scratch operand']
  #allocation6 [shape = 'f32[64,64]{1,0:T(8,128)}', space=vmem, size = 0x8000, scoped, tag = 'scratch operand']
  %s0 = inlined_call_operand.hbm [shape: f32[8,32], index: 0, kind: input, shape index: {}]
  %s1 = inlined_call_operand.hbm [shape: f32[368,256], index: 1, kind: input, shape index: {}]
  %s2 = inlined_call_operand.hbm [shape: f32[72,512], index: 2, kind: input, shape index: {}]
  %s3 = inlined_call_operand.hbm [shape: f32[64,128], index: 3, kind: output, shape index: {}]
  %s4 = sld [smem:[#allocation0]]
  $region34: #{tpu_custom_call.1} parent=0
    _
  %s6 = ssub.s32 1, %s4
  %s7 = scalar_select 0, %s6, %s4
  $region1: #{tpu_custom_call.1} parent=0
    #allocation7 [shape = 'u8[4096]{0}', space=vmem, size = 0x1000, scoped, tag = 'input window, operand 0, single buffered']
    #allocation8 [shape = 's32[1]{0}', space=sflag, size = 0x4, scoped, tag = 'scoped memory for tpu_custom_call.1']
    #allocation9 [shape = 's32[1]{0}', space=sflag, size = 0x4, scoped, tag = 'scoped memory for tpu_custom_call.1']
    #allocation10 [shape = 'u8[376832]{0}', space=vmem, size = 0x5c000, scoped, tag = 'input window, operand 1, single buffered']
    #allocation11 [shape = 's32[1]{0}', space=sflag, size = 0x4, scoped, tag = 'scoped memory for tpu_custom_call.1']
    #allocation12 [shape = 'u8[147456]{0}', space=vmem, size = 0x24000, scoped, tag = 'input window, operand 2, single buffered']
    #allocation13 [shape = 'u8[32768]{0}', space=vmem, size = 0x8000, scoped, tag = 'output window, operand 0, single buffered']
    %8 = vsyncpa [#allocation8], 0
    %9 = vsyncpa [#allocation11], 0
    %10 = vsyncpa [#allocation9], 0
    // Predicated region
    $region2: #{tpu_custom_call.1} parent=1 // pred_check
      _
    $region3: #{tpu_custom_call.1} parent=1 // pred_check_branch
      %12 = sbr.rel (0) target = $region5
    $region4: #{tpu_custom_call.1} parent=1 // pred_region
      %14 = vsyncadd [#allocation8], 0
      %s16 = sshll.u32 %s0, 4
      %s17 = int_to_ptr.hbm [resolvable:$true] %s16
      %s18 = sshll.u32 [#allocation7], 4
      %s19 = int_to_ptr.vmem [resolvable:$true] %s18
      %21 = dma.hbm_to_vmem [thread:$0]  %s17, 128, %s19, [#allocation8]
    $region5: #{tpu_custom_call.1} parent=1 // pred_fallthru
      _
    // Predicated region
    $region6: #{tpu_custom_call.1} parent=1 // pred_check
      _
    $region7: #{tpu_custom_call.1} parent=1 // pred_check_branch
      %23 = sbr.rel (0) target = $region9
    $region8: #{tpu_custom_call.1} parent=1 // pred_region
      %25 = vsyncadd [#allocation11], 0
      %s26 = sshll.u32 %s1, 4
      %s27 = int_to_ptr.hbm [resolvable:$true] %s26
      %s28 = sshll.u32 [#allocation10], 4
      %s29 = int_to_ptr.vmem [resolvable:$true] %s28
      %34 = dma.hbm_to_vmem [thread:$0]  %s27, 11776, %s29, [#allocation11], 256, 256, 16
    $region9: #{tpu_custom_call.1} parent=1 // pred_fallthru
      _
    // Predicated region
    $region10: #{tpu_custom_call.1} parent=1 // pred_check
      _
    $region11: #{tpu_custom_call.1} parent=1 // pred_check_branch
      %36 = sbr.rel (0) target = $region13
    $region12: #{tpu_custom_call.1} parent=1 // pred_region
      %38 = vsyncadd [#allocation11], 0
      %s39 = sshll.u32 %s2, 4
      %s40 = int_to_ptr.hbm [resolvable:$true] %s39
      %s41 = sshll.u32 [#allocation12], 4
      %s42 = int_to_ptr.vmem [resolvable:$true] %s41
      %47 = dma.hbm_to_vmem [thread:$0]  %s40, 4608, %s42, [#allocation11], 512, 512, 32
    $region13: #{tpu_custom_call.1} parent=1 // pred_fallthru
      _
    // Predicated region
    $region14: #{tpu_custom_call.1} parent=1 // pred_check
      _
    $region15: #{tpu_custom_call.1} parent=1 // pred_check_branch
      %49 = sbr.rel (0) target = $region17
    $region16: #{tpu_custom_call.1} parent=1 // pred_region
      %51 = dma.done [#allocation8], 128
    $region17: #{tpu_custom_call.1} parent=1 // pred_fallthru
      _
    // Predicated region
    $region18: #{tpu_custom_call.1} parent=1 // pred_check
      _
    $region19: #{tpu_custom_call.1} parent=1 // pred_check_branch
      %53 = sbr.rel (0) target = $region21
    $region20: #{tpu_custom_call.1} parent=1 // pred_region
      %55 = dma.done [#allocation11], 11776
    $region21: #{tpu_custom_call.1} parent=1 // pred_fallthru
      _
    // Predicated region
    $region22: #{tpu_custom_call.1} parent=1 // pred_check
      _
    $region23: #{tpu_custom_call.1} parent=1 // pred_check_branch
      %57 = sbr.rel (0) target = $region25
    $region24: #{tpu_custom_call.1} parent=1 // pred_region
      %59 = dma.done [#allocation11], 4608
    $region25: #{tpu_custom_call.1} parent=1 // pred_fallthru
      _
    %v60 = vld [vmem:[#allocation7] sm:$0xff]
    %v61 = vld [vmem:[#allocation10] sm:$0xff]
    %v62 = vld [vmem:[#allocation10 + $0x8] sm:$0xff]
    %v63 = vld [vmem:[#allocation10 + $0x10] sm:$0xff]
    %v64 = vld [vmem:[#allocation10 + $0x18] sm:$0xff]
    %v65 = vld [vmem:[#allocation10 + $0x20] sm:$0xff]
    %v66 = vld [vmem:[#allocation10 + $0x28] sm:$0xff]
    %v67 = vld [vmem:[#allocation10 + $0x30] sm:$0xff]
    %v68 = vld [vmem:[#allocation10 + $0x38] sm:$0xff]
    %s69 = scalar_lea.vmem [#allocation10], 192
    %v70 = vld [vmem:[%s69] ss:$8 sm:$0x3]
    %v72 = vperm.slane %v70, 0
    %v73 = vperm.slane %v70, 1
    %vm76 = vcmask 261120
    %v78 = vsel %vm76, %v60, 0
    %80 = vmatpush.msra.mxu0 0.0
    %81 = vmatpush.msra.mxu0 0.0
    %82 = vmatpush.msra.mxu0 0.0
    %83 = vmatpush.msra.mxu0 0.0
    %84 = vmatpush.msra.mxu0 0.0
    %85 = vmatpush.msra.mxu0 0.0
    %86 = vmatpush.msra.mxu0 0.0
    %87 = vmatpush.msra.mxu0 0.0
    %88 = vmatpush.msra.mxu0 0.0
    %89 = vmatpush.msra.mxu0 0.0
    %90 = vmatpush.msra.mxu0 0.0
    %91 = vmatpush.msra.mxu0 0.0
    %92 = vmatpush.msra.mxu0 %v67
    %93 = vmatpush.msra.mxu0 %v65
    %94 = vmatpush.msra.mxu0 %v63
    %95 = vmatpush.msra.mxu0 %v61
    %96 = vmatmul.f32.gmra.mxu0 %v78
    %v97 = vpop.f32.mrf.mxu0
    %v98 = vadd.f32 %v72, %v97
    %99 = vdwg.mxu0
    %100 = vmatpush.msra.mxu0 0.0
    %101 = vmatpush.msra.mxu0 0.0
    %102 = vmatpush.msra.mxu0 0.0
    %103 = vmatpush.msra.mxu0 0.0
    %104 = vmatpush.msra.mxu0 0.0
    %105 = vmatpush.msra.mxu0 0.0
    %106 = vmatpush.msra.mxu0 0.0
    %107 = vmatpush.msra.mxu0 0.0
    %108 = vmatpush.msra.mxu0 0.0
    %109 = vmatpush.msra.mxu0 0.0
    %110 = vmatpush.msra.mxu0 0.0
    %111 = vmatpush.msra.mxu0 0.0
    %112 = vmatpush.msra.mxu0 %v68
    %113 = vmatpush.msra.mxu0 %v66
    %114 = vmatpush.msra.mxu0 %v64
    %115 = vmatpush.msra.mxu0 %v62
    %116 = vmatmul.f32.gmra.mxu0 %v78
    %v117 = vpop.f32.mrf.mxu0
    %v118 = vadd.f32 %v73, %v117
    %119 = vdwg.mxu0
    %v120 = vld [vmem:[#allocation10 + $0x40] sm:$0xff]
    %v121 = vld [vmem:[#allocation10 + $0x48] sm:$0xff]
    %v122 = vld [vmem:[#allocation10 + $0x50] sm:$0xff]
    %v123 = vld [vmem:[#allocation10 + $0x58] sm:$0xff]
    %v124 = vld [vmem:[#allocation10 + $0x60] sm:$0xff]
    %v125 = vld [vmem:[#allocation10 + $0x68] sm:$0xff]
    %v126 = vld [vmem:[#allocation10 + $0x70] sm:$0xff]
    %v127 = vld [vmem:[#allocation10 + $0x78] sm:$0xff]
    %v128 = vld [vmem:[#allocation10 + $0x80] sm:$0xff]
    %v129 = vld [vmem:[#allocation10 + $0x88] sm:$0xff]
    %v130 = vld [vmem:[#allocation10 + $0x90] sm:$0xff]
    %v131 = vld [vmem:[#allocation10 + $0x98] sm:$0xff]
    %v132 = vld [vmem:[#allocation10 + $0xa0] sm:$0xff]
    %v133 = vld [vmem:[#allocation10 + $0xa8] sm:$0xff]
    %v134 = vld [vmem:[#allocation10 + $0xb0] sm:$0xff]
    %v135 = vld [vmem:[#allocation10 + $0xb8] sm:$0xff]
    %vm136 = vcmask 523264
    %v138 = vsel %vm136, 0.0, 0
    %140 = vmatpush.msra.mxu0 0.0
    %141 = vmatpush.msra.mxu0 0.0
    %142 = vmatpush.msra.mxu0 0.0
    %143 = vmatpush.msra.mxu0 0.0
    %144 = vmatpush.msra.mxu0 0.0
    %145 = vmatpush.msra.mxu0 0.0
    %146 = vmatpush.msra.mxu0 0.0
    %147 = vmatpush.msra.mxu0 0.0
    %148 = vmatpush.msra.mxu0 %v134
    %149 = vmatpush.msra.mxu0 %v132
    %150 = vmatpush.msra.mxu0 %v130
    %151 = vmatpush.msra.mxu0 %v128
    %152 = vmatpush.msra.mxu0 %v126
    %153 = vmatpush.msra.mxu0 %v124
    %154 = vmatpush.msra.mxu0 %v122
    %155 = vmatpush.msra.mxu0 %v120
    %156 = vmatmul.f32.gmra.mxu0 %v138
    %v157 = vpop.f32.mrf.mxu0
    %v158 = vadd.f32 0.0, %v157
    %159 = vdwg.mxu0
    %160 = vmatpush.msra.mxu0 0.0
    %161 = vmatpush.msra.mxu0 0.0
    %162 = vmatpush.msra.mxu0 0.0
    %163 = vmatpush.msra.mxu0 0.0
    %164 = vmatpush.msra.mxu0 0.0
    %165 = vmatpush.msra.mxu0 0.0
    %166 = vmatpush.msra.mxu0 0.0
    %167 = vmatpush.msra.mxu0 0.0
    %168 = vmatpush.msra.mxu0 %v135
    %169 = vmatpush.msra.mxu0 %v133
    %170 = vmatpush.msra.mxu0 %v131
    %171 = vmatpush.msra.mxu0 %v129
    %172 = vmatpush.msra.mxu0 %v127
    %173 = vmatpush.msra.mxu0 %v125
    %174 = vmatpush.msra.mxu0 %v123
    %175 = vmatpush.msra.mxu0 %v121
    %176 = vmatmul.f32.gmra.mxu0 %v138
    %v177 = vpop.f32.mrf.mxu0
    %v178 = vadd.f32 0.0, %v177
    %179 = vdwg.mxu0
    %v180 = vadd.f32 %v98, %v158
    %v181 = vadd.f32 %v118, %v178
    %v182 = vxor.u32 %v180, 2147483648
    %v183 = vxor.u32 %v181, 2147483648
    %v184 = vmul.f32 %v182, 1.442695
    %v185 = vpow.pop %v184
    %v186 = vmul.f32 %v183, 1.442695
    %v187 = vpow.pop %v186
    %v188 = vadd.f32 %v185, 1.0
    %v189 = vadd.f32 %v187, 1.0
    %v190 = vrcp.pop %v188
    %v191 = vmul.f32 %v188, %v190
    %v192 = vsub.f32 1.0, %v191
    %v193 = vmul.f32 %v190, %v192
    %v194 = vadd.f32 %v190, %v193
    %vm195 = vweird.f32 %v188
    %vm196 = vweird.f32 %v190
    %vm197 = vmor %vm195, %vm196
    %v198 = vsel %vm197, %v190, %v194
    %v199 = vand.u32 2147483647, %v188
    %vm200 = vcmp.eq.f32.partialorder %v199, 8.507059e+37
    %v201 = vand.u32 %v188, 2147483648
    %v202 = vor.u32 1.1754944e-38, %v201
    %v203 = vsel %vm200, %v202, %v198
    %v204 = vmul.f32 1.0, %v203
    %v205 = vrcp.pop %v189
    %v206 = vmul.f32 %v189, %v205
    %v207 = vsub.f32 1.0, %v206
    %v208 = vmul.f32 %v205, %v207
    %v209 = vadd.f32 %v205, %v208
    %vm210 = vweird.f32 %v189
    %vm211 = vweird.f32 %v205
    %vm212 = vmor %vm210, %vm211
    %v213 = vsel %vm212, %v205, %v209
    %v214 = vand.u32 2147483647, %v189
    %vm215 = vcmp.eq.f32.partialorder %v214, 8.507059e+37
    %v216 = vand.u32 %v189, 2147483648
    %v217 = vor.u32 1.1754944e-38, %v216
    %v218 = vsel %vm215, %v217, %v213
    %v219 = vmul.f32 1.0, %v218
    %v220 = vtanh.pop %v181
    %v221 = vmul.f32 %v204, 0.0
    %223 = vrot.lane.b32.xlu0 %v220, 64
    %v224 = vpop.permute.xlu0 %223
    %v226 = vmul.f32 %v204, %v224
    %228 = vrot.lane.b32.xlu0 %v226, 64
    %v229 = vpop.permute.xlu0 %228
    %v231 = vadd.f32 %v221, %v229
    %v232 = vtanh.pop %v231
    %234 = vrot.lane.b32.xlu0 %v232, 64
    %v235 = vpop.permute.xlu0 %234
    %v237 = vmul.f32 %v219, %v235
    %238 = vst.msk [vmem:[#allocation2] sm:$0xff] %vm76, %v237
    %240 = vrot.lane.b32.xlu0 %v237, 96
    %v241 = vpop.permute.xlu0 %240
    %243 = vst.msk [vmem:[#allocation3 + $0x38] sm:$0xff] %vm76, %v241
    %v244 = vsel %vm136, %v237, 0
    %246 = vmatpush.msra.mxu0 0.0
    %247 = vmatpush.msra.mxu0 0.0
    %248 = vmatpush.msra.mxu0 0.0
    %249 = vmatpush.msra.mxu0 0.0
    %250 = vmatpush.msra.mxu0 0.0
    %251 = vmatpush.msra.mxu0 0.0
    %252 = vmatpush.msra.mxu0 0.0
    %253 = vmatpush.msra.mxu0 0.0
    %254 = vmatpush.msra.mxu0 %v134
    %255 = vmatpush.msra.mxu0 %v132
    %256 = vmatpush.msra.mxu0 %v130
    %257 = vmatpush.msra.mxu0 %v128
    %258 = vmatpush.msra.mxu0 %v126
    %259 = vmatpush.msra.mxu0 %v124
    %260 = vmatpush.msra.mxu0 %v122
    %261 = vmatpush.msra.mxu0 %v120
    %262 = vmatmul.f32.gmra.mxu0 %v244
    %v263 = vpop.f32.mrf.mxu0
    %v264 = vadd.f32 0.0, %v263
    %265 = vdwg.mxu0
    %266 = vmatpush.msra.mxu0 0.0
    %267 = vmatpush.msra.mxu0 0.0
    %268 = vmatpush.msra.mxu0 0.0
    %269 = vmatpush.msra.mxu0 0.0
    %270 = vmatpush.msra.mxu0 0.0
    %271 = vmatpush.msra.mxu0 0.0
    %272 = vmatpush.msra.mxu0 0.0
    %273 = vmatpush.msra.mxu0 0.0
    %274 = vmatpush.msra.mxu0 %v135
    %275 = vmatpush.msra.mxu0 %v133
    %276 = vmatpush.msra.mxu0 %v131
    %277 = vmatpush.msra.mxu0 %v129
    %278 = vmatpush.msra.mxu0 %v127
    %279 = vmatpush.msra.mxu0 %v125
    %280 = vmatpush.msra.mxu0 %v123
    %281 = vmatpush.msra.mxu0 %v121
    %282 = vmatmul.f32.gmra.mxu0 %v244
    %v283 = vpop.f32.mrf.mxu0
    %v284 = vadd.f32 0.0, %v283
    %285 = vdwg.mxu0
    %v286 = vadd.f32 %v98, %v264
    %v287 = vadd.f32 %v118, %v284
    %v288 = vxor.u32 %v286, 2147483648
    %v289 = vxor.u32 %v287, 2147483648
    %v290 = vmul.f32 %v288, 1.442695
    %v291 = vpow.pop %v290
    %v292 = vmul.f32 %v289, 1.442695
    %v293 = vpow.pop %v292
    %v294 = vadd.f32 %v291, 1.0
    %v295 = vadd.f32 %v293, 1.0
    %v296 = vrcp.pop %v294
    %v297 = vmul.f32 %v294, %v296
    %v298 = vsub.f32 1.0, %v297
    %v299 = vmul.f32 %v296, %v298
    %v300 = vadd.f32 %v296, %v299
    %vm301 = vweird.f32 %v294
    %vm302 = vweird.f32 %v296
    %vm303 = vmor %vm301, %vm302
    %v304 = vsel %vm303, %v296, %v300
    %v305 = vand.u32 2147483647, %v294
    %vm306 = vcmp.eq.f32.partialorder %v305, 8.507059e+37
    %v307 = vand.u32 %v294, 2147483648
    %v308 = vor.u32 1.1754944e-38, %v307
    %v309 = vsel %vm306, %v308, %v304
    %v310 = vmul.f32 1.0, %v309
    %v311 = vrcp.pop %v295
    %v312 = vmul.f32 %v295, %v311
    %v313 = vsub.f32 1.0, %v312
    %v314 = vmul.f32 %v311, %v313
    %v315 = vadd.f32 %v311, %v314
    %vm316 = vweird.f32 %v295
    %vm317 = vweird.f32 %v311
    %vm318 = vmor %vm316, %vm317
    %v319 = vsel %vm318, %v311, %v315
    %v320 = vand.u32 2147483647, %v295
    %vm321 = vcmp.eq.f32.partialorder %v320, 8.507059e+37
    %v322 = vand.u32 %v295, 2147483648
    %v323 = vor.u32 1.1754944e-38, %v322
    %v324 = vsel %vm321, %v323, %v319
    %v325 = vmul.f32 1.0, %v324
    %v326 = vtanh.pop %v287
    %v327 = vmul.f32 %v310, %v231
    %329 = vrot.lane.b32.xlu0 %v326, 64
    %v330 = vpop.permute.xlu0 %329
    %v332 = vmul.f32 %v310, %v330
    %334 = vrot.lane.b32.xlu0 %v332, 64
    %v335 = vpop.permute.xlu0 %334
    %v337 = vadd.f32 %v327, %v335
    %v338 = vtanh.pop %v337
    %340 = vrot.lane.b32.xlu0 %v338, 64
    %v341 = vpop.permute.xlu0 %340
    %v343 = vmul.f32 %v325, %v341
    %344 = vst.msk [vmem:[#allocation2 + $0x8] sm:$0xff] %vm76, %v343
    %346 = vrot.lane.b32.xlu0 %v343, 96
    %v347 = vpop.permute.xlu0 %346
    %349 = vst.msk [vmem:[#allocation3 + $0x30] sm:$0xff] %vm76, %v347
    %v350 = vsel %vm136, %v343, 0
    %352 = vmatpush.msra.mxu0 0.0
    %353 = vmatpush.msra.mxu0 0.0
    %354 = vmatpush.msra.mxu0 0.0
    %355 = vmatpush.msra.mxu0 0.0
    %356 = vmatpush.msra.mxu0 0.0
    %357 = vmatpush.msra.mxu0 0.0
    %358 = vmatpush.msra.mxu0 0.0
    %359 = vmatpush.msra.mxu0 0.0
    %360 = vmatpush.msra.mxu0 %v134
    %361 = vmatpush.msra.mxu0 %v132
    %362 = vmatpush.msra.mxu0 %v130
    %363 = vmatpush.msra.mxu0 %v128
    %364 = vmatpush.msra.mxu0 %v126
    %365 = vmatpush.msra.mxu0 %v124
    %366 = vmatpush.msra.mxu0 %v122
    %367 = vmatpush.msra.mxu0 %v120
    %368 = vmatmul.f32.gmra.mxu0 %v350
    %v369 = vpop.f32.mrf.mxu0
    %v370 = vadd.f32 0.0, %v369
    %371 = vdwg.mxu0
    %372 = vmatpush.msra.mxu0 0.0
    %373 = vmatpush.msra.mxu0 0.0
    %374 = vmatpush.msra.mxu0 0.0
    %375 = vmatpush.msra.mxu0 0.0
    %376 = vmatpush.msra.mxu0 0.0
    %377 = vmatpush.msra.mxu0 0.0
    %378 = vmatpush.msra.mxu0 0.0
    %379 = vmatpush.msra.mxu0 0.0
    %380 = vmatpush.msra.mxu0 %v135
    %381 = vmatpush.msra.mxu0 %v133
    %382 = vmatpush.msra.mxu0 %v131
    %383 = vmatpush.msra.mxu0 %v129
    %384 = vmatpush.msra.mxu0 %v127
    %385 = vmatpush.msra.mxu0 %v125
    %386 = vmatpush.msra.mxu0 %v123
    %387 = vmatpush.msra.mxu0 %v121
    %388 = vmatmul.f32.gmra.mxu0 %v350
    %v389 = vpop.f32.mrf.mxu0
    %v390 = vadd.f32 0.0, %v389
    %391 = vdwg.mxu0
    %v392 = vadd.f32 %v98, %v370
    %v393 = vadd.f32 %v118, %v390
    %v394 = vxor.u32 %v392, 2147483648
    %v395 = vxor.u32 %v393, 2147483648
    %v396 = vmul.f32 %v394, 1.442695
    %v397 = vpow.pop %v396
    %v398 = vmul.f32 %v395, 1.442695
    %v399 = vpow.pop %v398
    %v400 = vadd.f32 %v397, 1.0
    %v401 = vadd.f32 %v399, 1.0
    %v402 = vrcp.pop %v400
    %v403 = vmul.f32 %v400, %v402
    %v404 = vsub.f32 1.0, %v403
    %v405 = vmul.f32 %v402, %v404
    %v406 = vadd.f32 %v402, %v405
    %vm407 = vweird.f32 %v400
    %vm408 = vweird.f32 %v402
    %vm409 = vmor %vm407, %vm408
    %v410 = vsel %vm409, %v402, %v406
    %v411 = vand.u32 2147483647, %v400
    %vm412 = vcmp.eq.f32.partialorder %v411, 8.507059e+37
    %v413 = vand.u32 %v400, 2147483648
    %v414 = vor.u32 1.1754944e-38, %v413
    %v415 = vsel %vm412, %v414, %v410
    %v416 = vmul.f32 1.0, %v415
    %v417 = vrcp.pop %v401
    %v418 = vmul.f32 %v401, %v417
    %v419 = vsub.f32 1.0, %v418
    %v420 = vmul.f32 %v417, %v419
    %v421 = vadd.f32 %v417, %v420
    %vm422 = vweird.f32 %v401
    %vm423 = vweird.f32 %v417
    %vm424 = vmor %vm422, %vm423
    %v425 = vsel %vm424, %v417, %v421
    %v426 = vand.u32 2147483647, %v401
    %vm427 = vcmp.eq.f32.partialorder %v426, 8.507059e+37
    %v428 = vand.u32 %v401, 2147483648
    %v429 = vor.u32 1.1754944e-38, %v428
    %v430 = vsel %vm427, %v429, %v425
    %v431 = vmul.f32 1.0, %v430
    %v432 = vtanh.pop %v393
    %v433 = vmul.f32 %v416, %v337
    %435 = vrot.lane.b32.xlu0 %v432, 64
    %v436 = vpop.permute.xlu0 %435
    %v438 = vmul.f32 %v416, %v436
    %440 = vrot.lane.b32.xlu0 %v438, 64
    %v441 = vpop.permute.xlu0 %440
    %v443 = vadd.f32 %v433, %v441
    %v444 = vtanh.pop %v443
    %446 = vrot.lane.b32.xlu0 %v444, 64
    %v447 = vpop.permute.xlu0 %446
    %v449 = vmul.f32 %v431, %v447
    %450 = vst.msk [vmem:[#allocation2 + $0x10] sm:$0xff] %vm76, %v449
    %452 = vrot.lane.b32.xlu0 %v449, 96
    %v453 = vpop.permute.xlu0 %452
    %455 = vst.msk [vmem:[#allocation3 + $0x28] sm:$0xff] %vm76, %v453
    %v456 = vsel %vm136, %v449, 0
    %458 = vmatpush.msra.mxu0 0.0
    %459 = vmatpush.msra.mxu0 0.0
    %460 = vmatpush.msra.mxu0 0.0
    %461 = vmatpush.msra.mxu0 0.0
    %462 = vmatpush.msra.mxu0 0.0
    %463 = vmatpush.msra.mxu0 0.0
    %464 = vmatpush.msra.mxu0 0.0
    %465 = vmatpush.msra.mxu0 0.0
    %466 = vmatpush.msra.mxu0 %v134
    %467 = vmatpush.msra.mxu0 %v132
    %468 = vmatpush.msra.mxu0 %v130
    %469 = vmatpush.msra.mxu0 %v128
    %470 = vmatpush.msra.mxu0 %v126
    %471 = vmatpush.msra.mxu0 %v124
    %472 = vmatpush.msra.mxu0 %v122
    %473 = vmatpush.msra.mxu0 %v120
    %474 = vmatmul.f32.gmra.mxu0 %v456
    %v475 = vpop.f32.mrf.mxu0
    %v476 = vadd.f32 0.0, %v475
    %477 = vdwg.mxu0
    %478 = vmatpush.msra.mxu0 0.0
    %479 = vmatpush.msra.mxu0 0.0
    %480 = vmatpush.msra.mxu0 0.0
    %481 = vmatpush.msra.mxu0 0.0
    %482 = vmatpush.msra.mxu0 0.0
    %483 = vmatpush.msra.mxu0 0.0
    %484 = vmatpush.msra.mxu0 0.0
    %485 = vmatpush.msra.mxu0 0.0
    %486 = vmatpush.msra.mxu0 %v135
    %487 = vmatpush.msra.mxu0 %v133
    %488 = vmatpush.msra.mxu0 %v131
    %489 = vmatpush.msra.mxu0 %v129
    %490 = vmatpush.msra.mxu0 %v127
    %491 = vmatpush.msra.mxu0 %v125
    %492 = vmatpush.msra.mxu0 %v123
    %493 = vmatpush.msra.mxu0 %v121
    %494 = vmatmul.f32.gmra.mxu0 %v456
    %v495 = vpop.f32.mrf.mxu0
    %v496 = vadd.f32 0.0, %v495
    %497 = vdwg.mxu0
    %v498 = vadd.f32 %v98, %v476
    %v499 = vadd.f32 %v118, %v496
    %v500 = vxor.u32 %v498, 2147483648
    %v501 = vxor.u32 %v499, 2147483648
    %v502 = vmul.f32 %v500, 1.442695
    %v503 = vpow.pop %v502
    %v504 = vmul.f32 %v501, 1.442695
    %v505 = vpow.pop %v504
    %v506 = vadd.f32 %v503, 1.0
    %v507 = vadd.f32 %v505, 1.0
    %v508 = vrcp.pop %v506
    %v509 = vmul.f32 %v506, %v508
    %v510 = vsub.f32 1.0, %v509
    %v511 = vmul.f32 %v508, %v510
    %v512 = vadd.f32 %v508, %v511
    %vm513 = vweird.f32 %v506
    %vm514 = vweird.f32 %v508
    %vm515 = vmor %vm513, %vm514
    %v516 = vsel %vm515, %v508, %v512
    %v517 = vand.u32 2147483647, %v506
    %vm518 = vcmp.eq.f32.partialorder %v517, 8.507059e+37
    %v519 = vand.u32 %v506, 2147483648
    %v520 = vor.u32 1.1754944e-38, %v519
    %v521 = vsel %vm518, %v520, %v516
    %v522 = vmul.f32 1.0, %v521
    %v523 = vrcp.pop %v507
    %v524 = vmul.f32 %v507, %v523
    %v525 = vsub.f32 1.0, %v524
    %v526 = vmul.f32 %v523, %v525
    %v527 = vadd.f32 %v523, %v526
    %vm528 = vweird.f32 %v507
    %vm529 = vweird.f32 %v523
    %vm530 = vmor %vm528, %vm529
    %v531 = vsel %vm530, %v523, %v527
    %v532 = vand.u32 2147483647, %v507
    %vm533 = vcmp.eq.f32.partialorder %v532, 8.507059e+37
    %v534 = vand.u32 %v507, 2147483648
    %v535 = vor.u32 1.1754944e-38, %v534
    %v536 = vsel %vm533, %v535, %v531
    %v537 = vmul.f32 1.0, %v536
    %v538 = vtanh.pop %v499
    %v539 = vmul.f32 %v522, %v443
    %541 = vrot.lane.b32.xlu0 %v538, 64
    %v542 = vpop.permute.xlu0 %541
    %v544 = vmul.f32 %v522, %v542
    %546 = vrot.lane.b32.xlu0 %v544, 64
    %v547 = vpop.permute.xlu0 %546
    %v549 = vadd.f32 %v539, %v547
    %v550 = vtanh.pop %v549
    %552 = vrot.lane.b32.xlu0 %v550, 64
    %v553 = vpop.permute.xlu0 %552
    %v555 = vmul.f32 %v537, %v553
    %556 = vst.msk [vmem:[#allocation2 + $0x18] sm:$0xff] %vm76, %v555
    %558 = vrot.lane.b32.xlu0 %v555, 96
    %v559 = vpop.permute.xlu0 %558
    %561 = vst.msk [vmem:[#allocation3 + $0x20] sm:$0xff] %vm76, %v559
    %v562 = vsel %vm136, %v555, 0
    %564 = vmatpush.msra.mxu0 0.0
    %565 = vmatpush.msra.mxu0 0.0
    %566 = vmatpush.msra.mxu0 0.0
    %567 = vmatpush.msra.mxu0 0.0
    %568 = vmatpush.msra.mxu0 0.0
    %569 = vmatpush.msra.mxu0 0.0
    %570 = vmatpush.msra.mxu0 0.0
    %571 = vmatpush.msra.mxu0 0.0
    %572 = vmatpush.msra.mxu0 %v134
    %573 = vmatpush.msra.mxu0 %v132
    %574 = vmatpush.msra.mxu0 %v130
    %575 = vmatpush.msra.mxu0 %v128
    %576 = vmatpush.msra.mxu0 %v126
    %577 = vmatpush.msra.mxu0 %v124
    %578 = vmatpush.msra.mxu0 %v122
    %579 = vmatpush.msra.mxu0 %v120
    %580 = vmatmul.f32.gmra.mxu0 %v562
    %v581 = vpop.f32.mrf.mxu0
    %v582 = vadd.f32 0.0, %v581
    %583 = vdwg.mxu0
    %584 = vmatpush.msra.mxu0 0.0
    %585 = vmatpush.msra.mxu0 0.0
    %586 = vmatpush.msra.mxu0 0.0
    %587 = vmatpush.msra.mxu0 0.0
    %588 = vmatpush.msra.mxu0 0.0
    %589 = vmatpush.msra.mxu0 0.0
    %590 = vmatpush.msra.mxu0 0.0
    %591 = vmatpush.msra.mxu0 0.0
    %592 = vmatpush.msra.mxu0 %v135
    %593 = vmatpush.msra.mxu0 %v133
    %594 = vmatpush.msra.mxu0 %v131
    %595 = vmatpush.msra.mxu0 %v129
    %596 = vmatpush.msra.mxu0 %v127
    %597 = vmatpush.msra.mxu0 %v125
    %598 = vmatpush.msra.mxu0 %v123
    %599 = vmatpush.msra.mxu0 %v121
    %600 = vmatmul.f32.gmra.mxu0 %v562
    %v601 = vpop.f32.mrf.mxu0
    %v602 = vadd.f32 0.0, %v601
    %603 = vdwg.mxu0
    %v604 = vadd.f32 %v98, %v582
    %v605 = vadd.f32 %v118, %v602
    %v606 = vxor.u32 %v604, 2147483648
    %v607 = vxor.u32 %v605, 2147483648
    %v608 = vmul.f32 %v606, 1.442695
    %v609 = vpow.pop %v608
    %v610 = vmul.f32 %v607, 1.442695
    %v611 = vpow.pop %v610
    %v612 = vadd.f32 %v609, 1.0
    %v613 = vadd.f32 %v611, 1.0
    %v614 = vrcp.pop %v612
    %v615 = vmul.f32 %v612, %v614
    %v616 = vsub.f32 1.0, %v615
    %v617 = vmul.f32 %v614, %v616
    %v618 = vadd.f32 %v614, %v617
    %vm619 = vweird.f32 %v612
    %vm620 = vweird.f32 %v614
    %vm621 = vmor %vm619, %vm620
    %v622 = vsel %vm621, %v614, %v618
    %v623 = vand.u32 2147483647, %v612
    %vm624 = vcmp.eq.f32.partialorder %v623, 8.507059e+37
    %v625 = vand.u32 %v612, 2147483648
    %v626 = vor.u32 1.1754944e-38, %v625
    %v627 = vsel %vm624, %v626, %v622
    %v628 = vmul.f32 1.0, %v627
    %v629 = vrcp.pop %v613
    %v630 = vmul.f32 %v613, %v629
    %v631 = vsub.f32 1.0, %v630
    %v632 = vmul.f32 %v629, %v631
    %v633 = vadd.f32 %v629, %v632
    %vm634 = vweird.f32 %v613
    %vm635 = vweird.f32 %v629
    %vm636 = vmor %vm634, %vm635
    %v637 = vsel %vm636, %v629, %v633
    %v638 = vand.u32 2147483647, %v613
    %vm639 = vcmp.eq.f32.partialorder %v638, 8.507059e+37
    %v640 = vand.u32 %v613, 2147483648
    %v641 = vor.u32 1.1754944e-38, %v640
    %v642 = vsel %vm639, %v641, %v637
    %v643 = vmul.f32 1.0, %v642
    %v644 = vtanh.pop %v605
    %v645 = vmul.f32 %v628, %v549
    %647 = vrot.lane.b32.xlu0 %v644, 64
    %v648 = vpop.permute.xlu0 %647
    %v650 = vmul.f32 %v628, %v648
    %652 = vrot.lane.b32.xlu0 %v650, 64
    %v653 = vpop.permute.xlu0 %652
    %v655 = vadd.f32 %v645, %v653
    %v656 = vtanh.pop %v655
    %658 = vrot.lane.b32.xlu0 %v656, 64
    %v659 = vpop.permute.xlu0 %658
    %v661 = vmul.f32 %v643, %v659
    %662 = vst.msk [vmem:[#allocation2 + $0x20] sm:$0xff] %vm76, %v661
    %664 = vrot.lane.b32.xlu0 %v661, 96
    %v665 = vpop.permute.xlu0 %664
    %667 = vst.msk [vmem:[#allocation3 + $0x18] sm:$0xff] %vm76, %v665
    %v668 = vsel %vm136, %v661, 0
    %670 = vmatpush.msra.mxu0 0.0
    %671 = vmatpush.msra.mxu0 0.0
    %672 = vmatpush.msra.mxu0 0.0
    %673 = vmatpush.msra.mxu0 0.0
    %674 = vmatpush.msra.mxu0 0.0
    %675 = vmatpush.msra.mxu0 0.0
    %676 = vmatpush.msra.mxu0 0.0
    %677 = vmatpush.msra.mxu0 0.0
    %678 = vmatpush.msra.mxu0 %v134
    %679 = vmatpush.msra.mxu0 %v132
    %680 = vmatpush.msra.mxu0 %v130
    %681 = vmatpush.msra.mxu0 %v128
    %682 = vmatpush.msra.mxu0 %v126
    %683 = vmatpush.msra.mxu0 %v124
    %684 = vmatpush.msra.mxu0 %v122
    %685 = vmatpush.msra.mxu0 %v120
    %686 = vmatmul.f32.gmra.mxu0 %v668
    %v687 = vpop.f32.mrf.mxu0
    %v688 = vadd.f32 0.0, %v687
    %689 = vdwg.mxu0
    %690 = vmatpush.msra.mxu0 0.0
    %691 = vmatpush.msra.mxu0 0.0
    %692 = vmatpush.msra.mxu0 0.0
    %693 = vmatpush.msra.mxu0 0.0
    %694 = vmatpush.msra.mxu0 0.0
    %695 = vmatpush.msra.mxu0 0.0
    %696 = vmatpush.msra.mxu0 0.0
    %697 = vmatpush.msra.mxu0 0.0
    %698 = vmatpush.msra.mxu0 %v135
    %699 = vmatpush.msra.mxu0 %v133
    %700 = vmatpush.msra.mxu0 %v131
    %701 = vmatpush.msra.mxu0 %v129
    %702 = vmatpush.msra.mxu0 %v127
    %703 = vmatpush.msra.mxu0 %v125
    %704 = vmatpush.msra.mxu0 %v123
    %705 = vmatpush.msra.mxu0 %v121
    %706 = vmatmul.f32.gmra.mxu0 %v668
    %v707 = vpop.f32.mrf.mxu0
    %v708 = vadd.f32 0.0, %v707
    %709 = vdwg.mxu0
    %v710 = vadd.f32 %v98, %v688
    %v711 = vadd.f32 %v118, %v708
    %v712 = vxor.u32 %v710, 2147483648
    %v713 = vxor.u32 %v711, 2147483648
    %v714 = vmul.f32 %v712, 1.442695
    %v715 = vpow.pop %v714
    %v716 = vmul.f32 %v713, 1.442695
    %v717 = vpow.pop %v716
    %v718 = vadd.f32 %v715, 1.0
    %v719 = vadd.f32 %v717, 1.0
    %v720 = vrcp.pop %v718
    %v721 = vmul.f32 %v718, %v720
    %v722 = vsub.f32 1.0, %v721
    %v723 = vmul.f32 %v720, %v722
    %v724 = vadd.f32 %v720, %v723
    %vm725 = vweird.f32 %v718
    %vm726 = vweird.f32 %v720
    %vm727 = vmor %vm725, %vm726
    %v728 = vsel %vm727, %v720, %v724
    %v729 = vand.u32 2147483647, %v718
    %vm730 = vcmp.eq.f32.partialorder %v729, 8.507059e+37
    %v731 = vand.u32 %v718, 2147483648
    %v732 = vor.u32 1.1754944e-38, %v731
    %v733 = vsel %vm730, %v732, %v728
    %v734 = vmul.f32 1.0, %v733
    %v735 = vrcp.pop %v719
    %v736 = vmul.f32 %v719, %v735
    %v737 = vsub.f32 1.0, %v736
    %v738 = vmul.f32 %v735, %v737
    %v739 = vadd.f32 %v735, %v738
    %vm740 = vweird.f32 %v719
    %vm741 = vweird.f32 %v735
    %vm742 = vmor %vm740, %vm741
    %v743 = vsel %vm742, %v735, %v739
    %v744 = vand.u32 2147483647, %v719
    %vm745 = vcmp.eq.f32.partialorder %v744, 8.507059e+37
    %v746 = vand.u32 %v719, 2147483648
    %v747 = vor.u32 1.1754944e-38, %v746
    %v748 = vsel %vm745, %v747, %v743
    %v749 = vmul.f32 1.0, %v748
    %v750 = vtanh.pop %v711
    %v751 = vmul.f32 %v734, %v655
    %753 = vrot.lane.b32.xlu0 %v750, 64
    %v754 = vpop.permute.xlu0 %753
    %v756 = vmul.f32 %v734, %v754
    %758 = vrot.lane.b32.xlu0 %v756, 64
    %v759 = vpop.permute.xlu0 %758
    %v761 = vadd.f32 %v751, %v759
    %v762 = vtanh.pop %v761
    %764 = vrot.lane.b32.xlu0 %v762, 64
    %v765 = vpop.permute.xlu0 %764
    %v767 = vmul.f32 %v749, %v765
    %768 = vst.msk [vmem:[#allocation2 + $0x28] sm:$0xff] %vm76, %v767
    %770 = vrot.lane.b32.xlu0 %v767, 96
    %v771 = vpop.permute.xlu0 %770
    %773 = vst.msk [vmem:[#allocation3 + $0x10] sm:$0xff] %vm76, %v771
    %v774 = vsel %vm136, %v767, 0
    %776 = vmatpush.msra.mxu0 0.0
    %777 = vmatpush.msra.mxu0 0.0
    %778 = vmatpush.msra.mxu0 0.0
    %779 = vmatpush.msra.mxu0 0.0
    %780 = vmatpush.msra.mxu0 0.0
    %781 = vmatpush.msra.mxu0 0.0
    %782 = vmatpush.msra.mxu0 0.0
    %783 = vmatpush.msra.mxu0 0.0
    %784 = vmatpush.msra.mxu0 %v134
    %785 = vmatpush.msra.mxu0 %v132
    %786 = vmatpush.msra.mxu0 %v130
    %787 = vmatpush.msra.mxu0 %v128
    %788 = vmatpush.msra.mxu0 %v126
    %789 = vmatpush.msra.mxu0 %v124
    %790 = vmatpush.msra.mxu0 %v122
    %791 = vmatpush.msra.mxu0 %v120
    %792 = vmatmul.f32.gmra.mxu0 %v774
    %v793 = vpop.f32.mrf.mxu0
    %v794 = vadd.f32 0.0, %v793
    %795 = vdwg.mxu0
    %796 = vmatpush.msra.mxu0 0.0
    %797 = vmatpush.msra.mxu0 0.0
    %798 = vmatpush.msra.mxu0 0.0
    %799 = vmatpush.msra.mxu0 0.0
    %800 = vmatpush.msra.mxu0 0.0
    %801 = vmatpush.msra.mxu0 0.0
    %802 = vmatpush.msra.mxu0 0.0
    %803 = vmatpush.msra.mxu0 0.0
    %804 = vmatpush.msra.mxu0 %v135
    %805 = vmatpush.msra.mxu0 %v133
    %806 = vmatpush.msra.mxu0 %v131
    %807 = vmatpush.msra.mxu0 %v129
    %808 = vmatpush.msra.mxu0 %v127
    %809 = vmatpush.msra.mxu0 %v125
    %810 = vmatpush.msra.mxu0 %v123
    %811 = vmatpush.msra.mxu0 %v121
    %812 = vmatmul.f32.gmra.mxu0 %v774
    %v813 = vpop.f32.mrf.mxu0
    %v814 = vadd.f32 0.0, %v813
    %815 = vdwg.mxu0
    %v816 = vadd.f32 %v98, %v794
    %v817 = vadd.f32 %v118, %v814
    %v818 = vxor.u32 %v816, 2147483648
    %v819 = vxor.u32 %v817, 2147483648
    %v820 = vmul.f32 %v818, 1.442695
    %v821 = vpow.pop %v820
    %v822 = vmul.f32 %v819, 1.442695
    %v823 = vpow.pop %v822
    %v824 = vadd.f32 %v821, 1.0
    %v825 = vadd.f32 %v823, 1.0
    %v826 = vrcp.pop %v824
    %v827 = vmul.f32 %v824, %v826
    %v828 = vsub.f32 1.0, %v827
    %v829 = vmul.f32 %v826, %v828
    %v830 = vadd.f32 %v826, %v829
    %vm831 = vweird.f32 %v824
    %vm832 = vweird.f32 %v826
    %vm833 = vmor %vm831, %vm832
    %v834 = vsel %vm833, %v826, %v830
    %v835 = vand.u32 2147483647, %v824
    %vm836 = vcmp.eq.f32.partialorder %v835, 8.507059e+37
    %v837 = vand.u32 %v824, 2147483648
    %v838 = vor.u32 1.1754944e-38, %v837
    %v839 = vsel %vm836, %v838, %v834
    %v840 = vmul.f32 1.0, %v839
    %v841 = vrcp.pop %v825
    %v842 = vmul.f32 %v825, %v841
    %v843 = vsub.f32 1.0, %v842
    %v844 = vmul.f32 %v841, %v843
    %v845 = vadd.f32 %v841, %v844
    %vm846 = vweird.f32 %v825
    %vm847 = vweird.f32 %v841
    %vm848 = vmor %vm846, %vm847
    %v849 = vsel %vm848, %v841, %v845
    %v850 = vand.u32 2147483647, %v825
    %vm851 = vcmp.eq.f32.partialorder %v850, 8.507059e+37
    %v852 = vand.u32 %v825, 2147483648
    %v853 = vor.u32 1.1754944e-38, %v852
    %v854 = vsel %vm851, %v853, %v849
    %v855 = vmul.f32 1.0, %v854
    %v856 = vtanh.pop %v817
    %v857 = vmul.f32 %v840, %v761
    %859 = vrot.lane.b32.xlu0 %v856, 64
    %v860 = vpop.permute.xlu0 %859
    %v862 = vmul.f32 %v840, %v860
    %864 = vrot.lane.b32.xlu0 %v862, 64
    %v865 = vpop.permute.xlu0 %864
    %v867 = vadd.f32 %v857, %v865
    %v868 = vtanh.pop %v867
    %870 = vrot.lane.b32.xlu0 %v868, 64
    %v871 = vpop.permute.xlu0 %870
    %v873 = vmul.f32 %v855, %v871
    %874 = vst.msk [vmem:[#allocation2 + $0x30] sm:$0xff] %vm76, %v873
    %876 = vrot.lane.b32.xlu0 %v873, 96
    %v877 = vpop.permute.xlu0 %876
    %879 = vst.msk [vmem:[#allocation3 + $0x8] sm:$0xff] %vm76, %v877
    %v880 = vsel %vm136, %v873, 0
    %882 = vmatpush.msra.mxu0 0.0
    %883 = vmatpush.msra.mxu0 0.0
    %884 = vmatpush.msra.mxu0 0.0
    %885 = vmatpush.msra.mxu0 0.0
    %886 = vmatpush.msra.mxu0 0.0
    %887 = vmatpush.msra.mxu0 0.0
    %888 = vmatpush.msra.mxu0 0.0
    %889 = vmatpush.msra.mxu0 0.0
    %890 = vmatpush.msra.mxu0 %v134
    %891 = vmatpush.msra.mxu0 %v132
    %892 = vmatpush.msra.mxu0 %v130
    %893 = vmatpush.msra.mxu0 %v128
    %894 = vmatpush.msra.mxu0 %v126
    %895 = vmatpush.msra.mxu0 %v124
    %896 = vmatpush.msra.mxu0 %v122
    %897 = vmatpush.msra.mxu0 %v120
    %898 = vmatmul.f32.gmra.mxu0 %v880
    %v899 = vpop.f32.mrf.mxu0
    %v900 = vadd.f32 0.0, %v899
    %901 = vdwg.mxu0
    %902 = vmatpush.msra.mxu0 0.0
    %903 = vmatpush.msra.mxu0 0.0
    %904 = vmatpush.msra.mxu0 0.0
    %905 = vmatpush.msra.mxu0 0.0
    %906 = vmatpush.msra.mxu0 0.0
    %907 = vmatpush.msra.mxu0 0.0
    %908 = vmatpush.msra.mxu0 0.0
    %909 = vmatpush.msra.mxu0 0.0
    %910 = vmatpush.msra.mxu0 %v135
    %911 = vmatpush.msra.mxu0 %v133
    %912 = vmatpush.msra.mxu0 %v131
    %913 = vmatpush.msra.mxu0 %v129
    %914 = vmatpush.msra.mxu0 %v127
    %915 = vmatpush.msra.mxu0 %v125
    %916 = vmatpush.msra.mxu0 %v123
    %917 = vmatpush.msra.mxu0 %v121
    %918 = vmatmul.f32.gmra.mxu0 %v880
    %v919 = vpop.f32.mrf.mxu0
    %v920 = vadd.f32 0.0, %v919
    %921 = vdwg.mxu0
    %v922 = vadd.f32 %v98, %v900
    %v923 = vadd.f32 %v118, %v920
    %v924 = vxor.u32 %v922, 2147483648
    %v925 = vxor.u32 %v923, 2147483648
    %v926 = vmul.f32 %v924, 1.442695
    %v927 = vpow.pop %v926
    %v928 = vmul.f32 %v925, 1.442695
    %v929 = vpow.pop %v928
    %v930 = vadd.f32 %v927, 1.0
    %v931 = vadd.f32 %v929, 1.0
    %v932 = vrcp.pop %v930
    %v933 = vmul.f32 %v930, %v932
    %v934 = vsub.f32 1.0, %v933
    %v935 = vmul.f32 %v932, %v934
    %v936 = vadd.f32 %v932, %v935
    %vm937 = vweird.f32 %v930
    %vm938 = vweird.f32 %v932
    %vm939 = vmor %vm937, %vm938
    %v940 = vsel %vm939, %v932, %v936
    %v941 = vand.u32 2147483647, %v930
    %vm942 = vcmp.eq.f32.partialorder %v941, 8.507059e+37
    %v943 = vand.u32 %v930, 2147483648
    %v944 = vor.u32 1.1754944e-38, %v943
    %v945 = vsel %vm942, %v944, %v940
    %v946 = vmul.f32 1.0, %v945
    %v947 = vrcp.pop %v931
    %v948 = vmul.f32 %v931, %v947
    %v949 = vsub.f32 1.0, %v948
    %v950 = vmul.f32 %v947, %v949
    %v951 = vadd.f32 %v947, %v950
    %vm952 = vweird.f32 %v931
    %vm953 = vweird.f32 %v947
    %vm954 = vmor %vm952, %vm953
    %v955 = vsel %vm954, %v947, %v951
    %v956 = vand.u32 2147483647, %v931
    %vm957 = vcmp.eq.f32.partialorder %v956, 8.507059e+37
    %v958 = vand.u32 %v931, 2147483648
    %v959 = vor.u32 1.1754944e-38, %v958
    %v960 = vsel %vm957, %v959, %v955
    %v961 = vmul.f32 1.0, %v960
    %v962 = vtanh.pop %v923
    %v963 = vmul.f32 %v946, %v867
    %965 = vrot.lane.b32.xlu0 %v962, 64
    %v966 = vpop.permute.xlu0 %965
    %v968 = vmul.f32 %v946, %v966
    %970 = vrot.lane.b32.xlu0 %v968, 64
    %v971 = vpop.permute.xlu0 %970
    %v973 = vadd.f32 %v963, %v971
    %v974 = vtanh.pop %v973
    %976 = vrot.lane.b32.xlu0 %v974, 64
    %v977 = vpop.permute.xlu0 %976
    %v979 = vmul.f32 %v961, %v977
    %980 = vst.msk [vmem:[#allocation2 + $0x38] sm:$0xff] %vm76, %v979
    %982 = vrot.lane.b32.xlu0 %v979, 96
    %v983 = vpop.permute.xlu0 %982
    %985 = vst.msk [vmem:[#allocation3] sm:$0xff] %vm76, %v983
    %v986 = vld [vmem:[#allocation2] sm:$0xff]
    %v987 = vld [vmem:[#allocation2 + $0x8] sm:$0xff]
    %v988 = vld [vmem:[#allocation2 + $0x10] sm:$0xff]
    %v989 = vld [vmem:[#allocation2 + $0x18] sm:$0xff]
    %v990 = vld [vmem:[#allocation2 + $0x20] sm:$0xff]
    %v991 = vld [vmem:[#allocation2 + $0x28] sm:$0xff]
    %v992 = vld [vmem:[#allocation2 + $0x30] sm:$0xff]
    %v993 = vld [vmem:[#allocation2 + $0x38] sm:$0xff]
    %v994 = vld [vmem:[#allocation12] sm:$0xff]
    %v995 = vld [vmem:[#allocation12 + $0x8] sm:$0xff]
    %v996 = vld [vmem:[#allocation12 + $0x10] sm:$0xff]
    %v997 = vld [vmem:[#allocation12 + $0x18] sm:$0xff]
    %v998 = vld [vmem:[#allocation12 + $0x20] sm:$0xff]
    %v999 = vld [vmem:[#allocation12 + $0x28] sm:$0xff]
    %v1000 = vld [vmem:[#allocation12 + $0x30] sm:$0xff]
    %v1001 = vld [vmem:[#allocation12 + $0x38] sm:$0xff]
    %v1002 = vld [vmem:[#allocation12 + $0x40] sm:$0xff]
    %v1003 = vld [vmem:[#allocation12 + $0x48] sm:$0xff]
    %v1004 = vld [vmem:[#allocation12 + $0x50] sm:$0xff]
    %v1005 = vld [vmem:[#allocation12 + $0x58] sm:$0xff]
    %v1006 = vld [vmem:[#allocation12 + $0x60] sm:$0xff]
    %v1007 = vld [vmem:[#allocation12 + $0x68] sm:$0xff]
    %v1008 = vld [vmem:[#allocation12 + $0x70] sm:$0xff]
    %v1009 = vld [vmem:[#allocation12 + $0x78] sm:$0xff]
    %v1010 = vld [vmem:[#allocation3] sm:$0xff]
    %v1011 = vld [vmem:[#allocation3 + $0x8] sm:$0xff]
    %v1012 = vld [vmem:[#allocation3 + $0x10] sm:$0xff]
    %v1013 = vld [vmem:[#allocation3 + $0x18] sm:$0xff]
    %v1014 = vld [vmem:[#allocation3 + $0x20] sm:$0xff]
    %v1015 = vld [vmem:[#allocation3 + $0x28] sm:$0xff]
    %v1016 = vld [vmem:[#allocation3 + $0x30] sm:$0xff]
    %v1017 = vld [vmem:[#allocation3 + $0x38] sm:$0xff]
    %v1018 = vld [vmem:[#allocation12 + $0x80] sm:$0xff]
    %v1019 = vld [vmem:[#allocation12 + $0x88] sm:$0xff]
    %v1020 = vld [vmem:[#allocation12 + $0x90] sm:$0xff]
    %v1021 = vld [vmem:[#allocation12 + $0x98] sm:$0xff]
    %v1022 = vld [vmem:[#allocation12 + $0xa0] sm:$0xff]
    %v1023 = vld [vmem:[#allocation12 + $0xa8] sm:$0xff]
    %v1024 = vld [vmem:[#allocation12 + $0xb0] sm:$0xff]
    %v1025 = vld [vmem:[#allocation12 + $0xb8] sm:$0xff]
    %v1026 = vld [vmem:[#allocation12 + $0xc0] sm:$0xff]
    %v1027 = vld [vmem:[#allocation12 + $0xc8] sm:$0xff]
    %v1028 = vld [vmem:[#allocation12 + $0xd0] sm:$0xff]
    %v1029 = vld [vmem:[#allocation12 + $0xd8] sm:$0xff]
    %v1030 = vld [vmem:[#allocation12 + $0xe0] sm:$0xff]
    %v1031 = vld [vmem:[#allocation12 + $0xe8] sm:$0xff]
    %v1032 = vld [vmem:[#allocation12 + $0xf0] sm:$0xff]
    %v1033 = vld [vmem:[#allocation12 + $0xf8] sm:$0xff]
    %v1035 = vsel %vm76, %v1010, 0
    %v1038 = vsel %vm76, %v1011, 0
    %v1041 = vsel %vm76, %v1012, 0
    %v1044 = vsel %vm76, %v1013, 0
    %v1047 = vsel %vm76, %v1014, 0
    %v1050 = vsel %vm76, %v1015, 0
    %v1053 = vsel %vm76, %v1016, 0
    %v1056 = vsel %vm76, %v1017, 0
    %1058 = vmatpush.msra.mxu0 0.0
    %1059 = vmatpush.msra.mxu0 0.0
    %1060 = vmatpush.msra.mxu0 0.0
    %1061 = vmatpush.msra.mxu0 0.0
    %1062 = vmatpush.msra.mxu0 0.0
    %1063 = vmatpush.msra.mxu0 0.0
    %1064 = vmatpush.msra.mxu0 0.0
    %1065 = vmatpush.msra.mxu0 0.0
    %1066 = vmatpush.msra.mxu0 0.0
    %1067 = vmatpush.msra.mxu0 0.0
    %1068 = vmatpush.msra.mxu0 0.0
    %1069 = vmatpush.msra.mxu0 0.0
    %1070 = vmatpush.msra.mxu0 %v1030
    %1071 = vmatpush.msra.mxu0 %v1026
    %1072 = vmatpush.msra.mxu0 %v1022
    %1073 = vmatpush.msra.mxu0 %v1018
    %1074 = vmatmul.f32.gmra.mxu0 %v1035
    %v1075 = vpop.f32.mrf.mxu0
    %v1076 = vadd.f32 0.0, %v1075
    %1077 = vmatmul.f32.gmra.mxu0 %v1038
    %v1078 = vpop.f32.mrf.mxu0
    %v1079 = vadd.f32 0.0, %v1078
    %1080 = vmatmul.f32.gmra.mxu0 %v1041
    %v1081 = vpop.f32.mrf.mxu0
    %v1082 = vadd.f32 0.0, %v1081
    %1083 = vmatmul.f32.gmra.mxu0 %v1044
    %v1084 = vpop.f32.mrf.mxu0
    %v1085 = vadd.f32 0.0, %v1084
    %1086 = vmatmul.f32.gmra.mxu0 %v1047
    %v1087 = vpop.f32.mrf.mxu0
    %v1088 = vadd.f32 0.0, %v1087
    %1089 = vmatmul.f32.gmra.mxu0 %v1050
    %v1090 = vpop.f32.mrf.mxu0
    %v1091 = vadd.f32 0.0, %v1090
    %1092 = vmatmul.f32.gmra.mxu0 %v1053
    %v1093 = vpop.f32.mrf.mxu0
    %v1094 = vadd.f32 0.0, %v1093
    %1095 = vmatmul.f32.gmra.mxu0 %v1056
    %v1096 = vpop.f32.mrf.mxu0
    %v1097 = vadd.f32 0.0, %v1096
    %1098 = vdwg.mxu0
    %1099 = vmatpush.msra.mxu0 0.0
    %1100 = vmatpush.msra.mxu0 0.0
    %1101 = vmatpush.msra.mxu0 0.0
    %1102 = vmatpush.msra.mxu0 0.0
    %1103 = vmatpush.msra.mxu0 0.0
    %1104 = vmatpush.msra.mxu0 0.0
    %1105 = vmatpush.msra.mxu0 0.0
    %1106 = vmatpush.msra.mxu0 0.0
    %1107 = vmatpush.msra.mxu0 0.0
    %1108 = vmatpush.msra.mxu0 0.0
    %1109 = vmatpush.msra.mxu0 0.0
    %1110 = vmatpush.msra.mxu0 0.0
    %1111 = vmatpush.msra.mxu0 %v1031
    %1112 = vmatpush.msra.mxu0 %v1027
    %1113 = vmatpush.msra.mxu0 %v1023
    %1114 = vmatpush.msra.mxu0 %v1019
    %1115 = vmatmul.f32.gmra.mxu0 %v1035
    %v1116 = vpop.f32.mrf.mxu0
    %v1117 = vadd.f32 0.0, %v1116
    %1118 = vmatmul.f32.gmra.mxu0 %v1038
    %v1119 = vpop.f32.mrf.mxu0
    %v1120 = vadd.f32 0.0, %v1119
    %1121 = vmatmul.f32.gmra.mxu0 %v1041
    %v1122 = vpop.f32.mrf.mxu0
    %v1123 = vadd.f32 0.0, %v1122
    %1124 = vmatmul.f32.gmra.mxu0 %v1044
    %v1125 = vpop.f32.mrf.mxu0
    %v1126 = vadd.f32 0.0, %v1125
    %1127 = vmatmul.f32.gmra.mxu0 %v1047
    %v1128 = vpop.f32.mrf.mxu0
    %v1129 = vadd.f32 0.0, %v1128
    %1130 = vmatmul.f32.gmra.mxu0 %v1050
    %v1131 = vpop.f32.mrf.mxu0
    %v1132 = vadd.f32 0.0, %v1131
    %1133 = vmatmul.f32.gmra.mxu0 %v1053
    %v1134 = vpop.f32.mrf.mxu0
    %v1135 = vadd.f32 0.0, %v1134
    %1136 = vmatmul.f32.gmra.mxu0 %v1056
    %v1137 = vpop.f32.mrf.mxu0
    %v1138 = vadd.f32 0.0, %v1137
    %1139 = vdwg.mxu0
    %1140 = vmatpush.msra.mxu0 0.0
    %1141 = vmatpush.msra.mxu0 0.0
    %1142 = vmatpush.msra.mxu0 0.0
    %1143 = vmatpush.msra.mxu0 0.0
    %1144 = vmatpush.msra.mxu0 0.0
    %1145 = vmatpush.msra.mxu0 0.0
    %1146 = vmatpush.msra.mxu0 0.0
    %1147 = vmatpush.msra.mxu0 0.0
    %1148 = vmatpush.msra.mxu0 0.0
    %1149 = vmatpush.msra.mxu0 0.0
    %1150 = vmatpush.msra.mxu0 0.0
    %1151 = vmatpush.msra.mxu0 0.0
    %1152 = vmatpush.msra.mxu0 %v1032
    %1153 = vmatpush.msra.mxu0 %v1028
    %1154 = vmatpush.msra.mxu0 %v1024
    %1155 = vmatpush.msra.mxu0 %v1020
    %1156 = vmatmul.f32.gmra.mxu0 %v1035
    %v1157 = vpop.f32.mrf.mxu0
    %v1158 = vadd.f32 0.0, %v1157
    %1159 = vmatmul.f32.gmra.mxu0 %v1038
    %v1160 = vpop.f32.mrf.mxu0
    %v1161 = vadd.f32 0.0, %v1160
    %1162 = vmatmul.f32.gmra.mxu0 %v1041
    %v1163 = vpop.f32.mrf.mxu0
    %v1164 = vadd.f32 0.0, %v1163
    %1165 = vmatmul.f32.gmra.mxu0 %v1044
    %v1166 = vpop.f32.mrf.mxu0
    %v1167 = vadd.f32 0.0, %v1166
    %1168 = vmatmul.f32.gmra.mxu0 %v1047
    %v1169 = vpop.f32.mrf.mxu0
    %v1170 = vadd.f32 0.0, %v1169
    %1171 = vmatmul.f32.gmra.mxu0 %v1050
    %v1172 = vpop.f32.mrf.mxu0
    %v1173 = vadd.f32 0.0, %v1172
    %1174 = vmatmul.f32.gmra.mxu0 %v1053
    %v1175 = vpop.f32.mrf.mxu0
    %v1176 = vadd.f32 0.0, %v1175
    %1177 = vmatmul.f32.gmra.mxu0 %v1056
    %v1178 = vpop.f32.mrf.mxu0
    %v1179 = vadd.f32 0.0, %v1178
    %1180 = vdwg.mxu0
    %1181 = vmatpush.msra.mxu0 0.0
    %1182 = vmatpush.msra.mxu0 0.0
    %1183 = vmatpush.msra.mxu0 0.0
    %1184 = vmatpush.msra.mxu0 0.0
    %1185 = vmatpush.msra.mxu0 0.0
    %1186 = vmatpush.msra.mxu0 0.0
    %1187 = vmatpush.msra.mxu0 0.0
    %1188 = vmatpush.msra.mxu0 0.0
    %1189 = vmatpush.msra.mxu0 0.0
    %1190 = vmatpush.msra.mxu0 0.0
    %1191 = vmatpush.msra.mxu0 0.0
    %1192 = vmatpush.msra.mxu0 0.0
    %1193 = vmatpush.msra.mxu0 %v1033
    %1194 = vmatpush.msra.mxu0 %v1029
    %1195 = vmatpush.msra.mxu0 %v1025
    %1196 = vmatpush.msra.mxu0 %v1021
    %1197 = vmatmul.f32.gmra.mxu0 %v1035
    %v1198 = vpop.f32.mrf.mxu0
    %v1199 = vadd.f32 0.0, %v1198
    %1200 = vmatmul.f32.gmra.mxu0 %v1038
    %v1201 = vpop.f32.mrf.mxu0
    %v1202 = vadd.f32 0.0, %v1201
    %1203 = vmatmul.f32.gmra.mxu0 %v1041
    %v1204 = vpop.f32.mrf.mxu0
    %v1205 = vadd.f32 0.0, %v1204
    %1206 = vmatmul.f32.gmra.mxu0 %v1044
    %v1207 = vpop.f32.mrf.mxu0
    %v1208 = vadd.f32 0.0, %v1207
    %1209 = vmatmul.f32.gmra.mxu0 %v1047
    %v1210 = vpop.f32.mrf.mxu0
    %v1211 = vadd.f32 0.0, %v1210
    %1212 = vmatmul.f32.gmra.mxu0 %v1050
    %v1213 = vpop.f32.mrf.mxu0
    %v1214 = vadd.f32 0.0, %v1213
    %1215 = vmatmul.f32.gmra.mxu0 %v1053
    %v1216 = vpop.f32.mrf.mxu0
    %v1217 = vadd.f32 0.0, %v1216
    %1218 = vmatmul.f32.gmra.mxu0 %v1056
    %v1219 = vpop.f32.mrf.mxu0
    %v1220 = vadd.f32 0.0, %v1219
    %1221 = vdwg.mxu0
    %v1223 = vsel %vm76, %v986, 0
    %v1226 = vsel %vm76, %v987, 0
    %v1229 = vsel %vm76, %v988, 0
    %v1232 = vsel %vm76, %v989, 0
    %v1235 = vsel %vm76, %v990, 0
    %v1238 = vsel %vm76, %v991, 0
    %v1241 = vsel %vm76, %v992, 0
    %v1244 = vsel %vm76, %v993, 0
    %1246 = vmatpush.msra.mxu0 0.0
    %1247 = vmatpush.msra.mxu0 0.0
    %1248 = vmatpush.msra.mxu0 0.0
    %1249 = vmatpush.msra.mxu0 0.0
    %1250 = vmatpush.msra.mxu0 0.0
    %1251 = vmatpush.msra.mxu0 0.0
    %1252 = vmatpush.msra.mxu0 0.0
    %1253 = vmatpush.msra.mxu0 0.0
    %1254 = vmatpush.msra.mxu0 0.0
    %1255 = vmatpush.msra.mxu0 0.0
    %1256 = vmatpush.msra.mxu0 0.0
    %1257 = vmatpush.msra.mxu0 0.0
    %1258 = vmatpush.msra.mxu0 %v1006
    %1259 = vmatpush.msra.mxu0 %v1002
    %1260 = vmatpush.msra.mxu0 %v998
    %1261 = vmatpush.msra.mxu0 %v994
    %1262 = vmatmul.f32.gmra.mxu0 %v1223
    %v1263 = vpop.f32.mrf.mxu0
    %v1264 = vadd.f32 %v1076, %v1263
    %1265 = vmatmul.f32.gmra.mxu0 %v1226
    %v1266 = vpop.f32.mrf.mxu0
    %v1267 = vadd.f32 %v1079, %v1266
    %1268 = vmatmul.f32.gmra.mxu0 %v1229
    %v1269 = vpop.f32.mrf.mxu0
    %v1270 = vadd.f32 %v1082, %v1269
    %1271 = vmatmul.f32.gmra.mxu0 %v1232
    %v1272 = vpop.f32.mrf.mxu0
    %v1273 = vadd.f32 %v1085, %v1272
    %1274 = vmatmul.f32.gmra.mxu0 %v1235
    %v1275 = vpop.f32.mrf.mxu0
    %v1276 = vadd.f32 %v1088, %v1275
    %1277 = vmatmul.f32.gmra.mxu0 %v1238
    %v1278 = vpop.f32.mrf.mxu0
    %v1279 = vadd.f32 %v1091, %v1278
    %1280 = vmatmul.f32.gmra.mxu0 %v1241
    %v1281 = vpop.f32.mrf.mxu0
    %v1282 = vadd.f32 %v1094, %v1281
    %1283 = vmatmul.f32.gmra.mxu0 %v1244
    %v1284 = vpop.f32.mrf.mxu0
    %v1285 = vadd.f32 %v1097, %v1284
    %1286 = vdwg.mxu0
    %1287 = vmatpush.msra.mxu0 0.0
    %1288 = vmatpush.msra.mxu0 0.0
    %1289 = vmatpush.msra.mxu0 0.0
    %1290 = vmatpush.msra.mxu0 0.0
    %1291 = vmatpush.msra.mxu0 0.0
    %1292 = vmatpush.msra.mxu0 0.0
    %1293 = vmatpush.msra.mxu0 0.0
    %1294 = vmatpush.msra.mxu0 0.0
    %1295 = vmatpush.msra.mxu0 0.0
    %1296 = vmatpush.msra.mxu0 0.0
    %1297 = vmatpush.msra.mxu0 0.0
    %1298 = vmatpush.msra.mxu0 0.0
    %1299 = vmatpush.msra.mxu0 %v1007
    %1300 = vmatpush.msra.mxu0 %v1003
    %1301 = vmatpush.msra.mxu0 %v999
    %1302 = vmatpush.msra.mxu0 %v995
    %1303 = vmatmul.f32.gmra.mxu0 %v1223
    %v1304 = vpop.f32.mrf.mxu0
    %v1305 = vadd.f32 %v1117, %v1304
    %1306 = vmatmul.f32.gmra.mxu0 %v1226
    %v1307 = vpop.f32.mrf.mxu0
    %v1308 = vadd.f32 %v1120, %v1307
    %1309 = vmatmul.f32.gmra.mxu0 %v1229
    %v1310 = vpop.f32.mrf.mxu0
    %v1311 = vadd.f32 %v1123, %v1310
    %1312 = vmatmul.f32.gmra.mxu0 %v1232
    %v1313 = vpop.f32.mrf.mxu0
    %v1314 = vadd.f32 %v1126, %v1313
    %1315 = vmatmul.f32.gmra.mxu0 %v1235
    %v1316 = vpop.f32.mrf.mxu0
    %v1317 = vadd.f32 %v1129, %v1316
    %1318 = vmatmul.f32.gmra.mxu0 %v1238
    %v1319 = vpop.f32.mrf.mxu0
    %v1320 = vadd.f32 %v1132, %v1319
    %1321 = vmatmul.f32.gmra.mxu0 %v1241
    %v1322 = vpop.f32.mrf.mxu0
    %v1323 = vadd.f32 %v1135, %v1322
    %1324 = vmatmul.f32.gmra.mxu0 %v1244
    %v1325 = vpop.f32.mrf.mxu0
    %v1326 = vadd.f32 %v1138, %v1325
    %1327 = vdwg.mxu0
    %1328 = vmatpush.msra.mxu0 0.0
    %1329 = vmatpush.msra.mxu0 0.0
    %1330 = vmatpush.msra.mxu0 0.0
    %1331 = vmatpush.msra.mxu0 0.0
    %1332 = vmatpush.msra.mxu0 0.0
    %1333 = vmatpush.msra.mxu0 0.0
    %1334 = vmatpush.msra.mxu0 0.0
    %1335 = vmatpush.msra.mxu0 0.0
    %1336 = vmatpush.msra.mxu0 0.0
    %1337 = vmatpush.msra.mxu0 0.0
    %1338 = vmatpush.msra.mxu0 0.0
    %1339 = vmatpush.msra.mxu0 0.0
    %1340 = vmatpush.msra.mxu0 %v1008
    %1341 = vmatpush.msra.mxu0 %v1004
    %1342 = vmatpush.msra.mxu0 %v1000
    %1343 = vmatpush.msra.mxu0 %v996
    %1344 = vmatmul.f32.gmra.mxu0 %v1223
    %v1345 = vpop.f32.mrf.mxu0
    %v1346 = vadd.f32 %v1158, %v1345
    %1347 = vmatmul.f32.gmra.mxu0 %v1226
    %v1348 = vpop.f32.mrf.mxu0
    %v1349 = vadd.f32 %v1161, %v1348
    %1350 = vmatmul.f32.gmra.mxu0 %v1229
    %v1351 = vpop.f32.mrf.mxu0
    %v1352 = vadd.f32 %v1164, %v1351
    %1353 = vmatmul.f32.gmra.mxu0 %v1232
    %v1354 = vpop.f32.mrf.mxu0
    %v1355 = vadd.f32 %v1167, %v1354
    %1356 = vmatmul.f32.gmra.mxu0 %v1235
    %v1357 = vpop.f32.mrf.mxu0
    %v1358 = vadd.f32 %v1170, %v1357
    %1359 = vmatmul.f32.gmra.mxu0 %v1238
    %v1360 = vpop.f32.mrf.mxu0
    %v1361 = vadd.f32 %v1173, %v1360
    %1362 = vmatmul.f32.gmra.mxu0 %v1241
    %v1363 = vpop.f32.mrf.mxu0
    %v1364 = vadd.f32 %v1176, %v1363
    %1365 = vmatmul.f32.gmra.mxu0 %v1244
    %v1366 = vpop.f32.mrf.mxu0
    %v1367 = vadd.f32 %v1179, %v1366
    %1368 = vdwg.mxu0
    %1369 = vmatpush.msra.mxu0 0.0
    %1370 = vmatpush.msra.mxu0 0.0
    %1371 = vmatpush.msra.mxu0 0.0
    %1372 = vmatpush.msra.mxu0 0.0
    %1373 = vmatpush.msra.mxu0 0.0
    %1374 = vmatpush.msra.mxu0 0.0
    %1375 = vmatpush.msra.mxu0 0.0
    %1376 = vmatpush.msra.mxu0 0.0
    %1377 = vmatpush.msra.mxu0 0.0
    %1378 = vmatpush.msra.mxu0 0.0
    %1379 = vmatpush.msra.mxu0 0.0
    %1380 = vmatpush.msra.mxu0 0.0
    %1381 = vmatpush.msra.mxu0 %v1009
    %1382 = vmatpush.msra.mxu0 %v1005
    %1383 = vmatpush.msra.mxu0 %v1001
    %1384 = vmatpush.msra.mxu0 %v997
    %1385 = vmatmul.f32.gmra.mxu0 %v1223
    %v1386 = vpop.f32.mrf.mxu0
    %v1387 = vadd.f32 %v1199, %v1386
    %1388 = vmatmul.f32.gmra.mxu0 %v1226
    %v1389 = vpop.f32.mrf.mxu0
    %v1390 = vadd.f32 %v1202, %v1389
    %1391 = vmatmul.f32.gmra.mxu0 %v1229
    %v1392 = vpop.f32.mrf.mxu0
    %v1393 = vadd.f32 %v1205, %v1392
    %1394 = vmatmul.f32.gmra.mxu0 %v1232
    %v1395 = vpop.f32.mrf.mxu0
    %v1396 = vadd.f32 %v1208, %v1395
    %1397 = vmatmul.f32.gmra.mxu0 %v1235
    %v1398 = vpop.f32.mrf.mxu0
    %v1399 = vadd.f32 %v1211, %v1398
    %1400 = vmatmul.f32.gmra.mxu0 %v1238
    %v1401 = vpop.f32.mrf.mxu0
    %v1402 = vadd.f32 %v1214, %v1401
    %1403 = vmatmul.f32.gmra.mxu0 %v1241
    %v1404 = vpop.f32.mrf.mxu0
    %v1405 = vadd.f32 %v1217, %v1404
    %1406 = vmatmul.f32.gmra.mxu0 %v1244
    %v1407 = vpop.f32.mrf.mxu0
    %v1408 = vadd.f32 %v1220, %v1407
    %1409 = vdwg.mxu0
    %s1410 = scalar_lea.vmem [#allocation12], 256
    %v1411 = vld [vmem:[%s1410] ss:$8 sm:$0xf]
    %v1413 = vperm.slane %v1411, 0
    %v1414 = vperm.slane %v1411, 1
    %v1415 = vperm.slane %v1411, 2
    %v1416 = vperm.slane %v1411, 3
    %v1421 = vadd.f32 %v1264, %v1413
    %v1422 = vadd.f32 %v1305, %v1414
    %v1423 = vadd.f32 %v1346, %v1415
    %v1424 = vadd.f32 %v1387, %v1416
    %v1425 = vadd.f32 %v1267, %v1413
    %v1426 = vadd.f32 %v1308, %v1414
    %v1427 = vadd.f32 %v1349, %v1415
    %v1428 = vadd.f32 %v1390, %v1416
    %v1429 = vadd.f32 %v1270, %v1413
    %v1430 = vadd.f32 %v1311, %v1414
    %v1431 = vadd.f32 %v1352, %v1415
    %v1432 = vadd.f32 %v1393, %v1416
    %v1433 = vadd.f32 %v1273, %v1413
    %v1434 = vadd.f32 %v1314, %v1414
    %v1435 = vadd.f32 %v1355, %v1415
    %v1436 = vadd.f32 %v1396, %v1416
    %v1437 = vadd.f32 %v1276, %v1413
    %v1438 = vadd.f32 %v1317, %v1414
    %v1439 = vadd.f32 %v1358, %v1415
    %v1440 = vadd.f32 %v1399, %v1416
    %v1441 = vadd.f32 %v1279, %v1413
    %v1442 = vadd.f32 %v1320, %v1414
    %v1443 = vadd.f32 %v1361, %v1415
    %v1444 = vadd.f32 %v1402, %v1416
    %v1445 = vadd.f32 %v1282, %v1413
    %v1446 = vadd.f32 %v1323, %v1414
    %v1447 = vadd.f32 %v1364, %v1415
    %v1448 = vadd.f32 %v1405, %v1416
    %v1449 = vadd.f32 %v1285, %v1413
    %v1450 = vadd.f32 %v1326, %v1414
    %v1451 = vadd.f32 %v1367, %v1415
    %v1452 = vadd.f32 %v1408, %v1416
    %1453 = vst [vmem:[#allocation4] sm:$0xff] %v1421
    %1454 = vst [vmem:[#allocation4 + $0x8] sm:$0xff] %v1422
    %1455 = vst [vmem:[#allocation4 + $0x10] sm:$0xff] %v1423
    %1456 = vst [vmem:[#allocation4 + $0x18] sm:$0xff] %v1424
    %1457 = vst [vmem:[#allocation4 + $0x20] sm:$0xff] %v1425
    %1458 = vst [vmem:[#allocation4 + $0x28] sm:$0xff] %v1426
    %1459 = vst [vmem:[#allocation4 + $0x30] sm:$0xff] %v1427
    %1460 = vst [vmem:[#allocation4 + $0x38] sm:$0xff] %v1428
    %1461 = vst [vmem:[#allocation4 + $0x40] sm:$0xff] %v1429
    %1462 = vst [vmem:[#allocation4 + $0x48] sm:$0xff] %v1430
    %1463 = vst [vmem:[#allocation4 + $0x50] sm:$0xff] %v1431
    %1464 = vst [vmem:[#allocation4 + $0x58] sm:$0xff] %v1432
    %1465 = vst [vmem:[#allocation4 + $0x60] sm:$0xff] %v1433
    %1466 = vst [vmem:[#allocation4 + $0x68] sm:$0xff] %v1434
    %1467 = vst [vmem:[#allocation4 + $0x70] sm:$0xff] %v1435
    %1468 = vst [vmem:[#allocation4 + $0x78] sm:$0xff] %v1436
    %1469 = vst [vmem:[#allocation4 + $0x80] sm:$0xff] %v1437
    %1470 = vst [vmem:[#allocation4 + $0x88] sm:$0xff] %v1438
    %1471 = vst [vmem:[#allocation4 + $0x90] sm:$0xff] %v1439
    %1472 = vst [vmem:[#allocation4 + $0x98] sm:$0xff] %v1440
    %1473 = vst [vmem:[#allocation4 + $0xa0] sm:$0xff] %v1441
    %1474 = vst [vmem:[#allocation4 + $0xa8] sm:$0xff] %v1442
    %1475 = vst [vmem:[#allocation4 + $0xb0] sm:$0xff] %v1443
    %1476 = vst [vmem:[#allocation4 + $0xb8] sm:$0xff] %v1444
    %1477 = vst [vmem:[#allocation4 + $0xc0] sm:$0xff] %v1445
    %1478 = vst [vmem:[#allocation4 + $0xc8] sm:$0xff] %v1446
    %1479 = vst [vmem:[#allocation4 + $0xd0] sm:$0xff] %v1447
    %1480 = vst [vmem:[#allocation4 + $0xd8] sm:$0xff] %v1448
    %1481 = vst [vmem:[#allocation4 + $0xe0] sm:$0xff] %v1449
    %1482 = vst [vmem:[#allocation4 + $0xe8] sm:$0xff] %v1450
    %1483 = vst [vmem:[#allocation4 + $0xf0] sm:$0xff] %v1451
    %1484 = vst [vmem:[#allocation4 + $0xf8] sm:$0xff] %v1452
    %v1485 = vld [vmem:[#allocation4] sm:$0xff]
    %v1486 = vld [vmem:[#allocation4 + $0x8] sm:$0xff]
    %v1487 = vld [vmem:[#allocation10 + $0xd0] sm:$0xff]
    %v1488 = vld [vmem:[#allocation10 + $0xd8] sm:$0xff]
    %v1489 = vld [vmem:[#allocation10 + $0xe0] sm:$0xff]
    %v1490 = vld [vmem:[#allocation10 + $0xe8] sm:$0xff]
    %v1491 = vld [vmem:[#allocation10 + $0xf0] sm:$0xff]
    %v1492 = vld [vmem:[#allocation10 + $0xf8] sm:$0xff]
    %v1493 = vld [vmem:[#allocation10 + $0x100] sm:$0xff]
    %v1494 = vld [vmem:[#allocation10 + $0x108] sm:$0xff]
    %v1495 = vld [vmem:[#allocation10 + $0x110] sm:$0xff]
    %v1496 = vld [vmem:[#allocation10 + $0x118] sm:$0xff]
    %v1497 = vld [vmem:[#allocation10 + $0x120] sm:$0xff]
    %v1498 = vld [vmem:[#allocation10 + $0x128] sm:$0xff]
    %v1499 = vld [vmem:[#allocation10 + $0x130] sm:$0xff]
    %v1500 = vld [vmem:[#allocation10 + $0x138] sm:$0xff]
    %v1501 = vld [vmem:[#allocation10 + $0x140] sm:$0xff]
    %v1502 = vld [vmem:[#allocation10 + $0x148] sm:$0xff]
    %1503 = vmatpush.msra.mxu0 0.0
    %1504 = vmatpush.msra.mxu0 0.0
    %1505 = vmatpush.msra.mxu0 0.0
    %1506 = vmatpush.msra.mxu0 0.0
    %1507 = vmatpush.msra.mxu0 0.0
    %1508 = vmatpush.msra.mxu0 0.0
    %1509 = vmatpush.msra.mxu0 0.0
    %1510 = vmatpush.msra.mxu0 0.0
    %1511 = vmatpush.msra.mxu0 %v1501
    %1512 = vmatpush.msra.mxu0 %v1499
    %1513 = vmatpush.msra.mxu0 %v1497
    %1514 = vmatpush.msra.mxu0 %v1495
    %1515 = vmatpush.msra.mxu0 %v1493
    %1516 = vmatpush.msra.mxu0 %v1491
    %1517 = vmatpush.msra.mxu0 %v1489
    %1518 = vmatpush.msra.mxu0 %v1487
    %1519 = vmatmul.f32.gmra.mxu0 %v138
    %v1520 = vpop.f32.mrf.mxu0
    %v1521 = vadd.f32 0.0, %v1520
    %1522 = vdwg.mxu0
    %1523 = vmatpush.msra.mxu0 0.0
    %1524 = vmatpush.msra.mxu0 0.0
    %1525 = vmatpush.msra.mxu0 0.0
    %1526 = vmatpush.msra.mxu0 0.0
    %1527 = vmatpush.msra.mxu0 0.0
    %1528 = vmatpush.msra.mxu0 0.0
    %1529 = vmatpush.msra.mxu0 0.0
    %1530 = vmatpush.msra.mxu0 0.0
    %1531 = vmatpush.msra.mxu0 %v1502
    %1532 = vmatpush.msra.mxu0 %v1500
    %1533 = vmatpush.msra.mxu0 %v1498
    %1534 = vmatpush.msra.mxu0 %v1496
    %1535 = vmatpush.msra.mxu0 %v1494
    %1536 = vmatpush.msra.mxu0 %v1492
    %1537 = vmatpush.msra.mxu0 %v1490
    %1538 = vmatpush.msra.mxu0 %v1488
    %1539 = vmatmul.f32.gmra.mxu0 %v138
    %v1540 = vpop.f32.mrf.mxu0
    %v1541 = vadd.f32 0.0, %v1540
    %1542 = vdwg.mxu0
    %v1543 = vadd.f32 %v1485, %v1521
    %v1544 = vadd.f32 %v1486, %v1541
    %v1545 = vld [vmem:[#allocation4 + $0xf0] sm:$0xff]
    %v1546 = vld [vmem:[#allocation4 + $0xf8] sm:$0xff]
    %v1547 = vld [vmem:[#allocation10 + $0x150] sm:$0xff]
    %v1548 = vld [vmem:[#allocation10 + $0x158] sm:$0xff]
    %v1549 = vld [vmem:[#allocation10 + $0x160] sm:$0xff]
    %v1550 = vld [vmem:[#allocation10 + $0x168] sm:$0xff]
    %v1551 = vld [vmem:[#allocation10 + $0x170] sm:$0xff]
    %v1552 = vld [vmem:[#allocation10 + $0x178] sm:$0xff]
    %v1553 = vld [vmem:[#allocation10 + $0x180] sm:$0xff]
    %v1554 = vld [vmem:[#allocation10 + $0x188] sm:$0xff]
    %v1555 = vld [vmem:[#allocation10 + $0x190] sm:$0xff]
    %v1556 = vld [vmem:[#allocation10 + $0x198] sm:$0xff]
    %v1557 = vld [vmem:[#allocation10 + $0x1a0] sm:$0xff]
    %v1558 = vld [vmem:[#allocation10 + $0x1a8] sm:$0xff]
    %v1559 = vld [vmem:[#allocation10 + $0x1b0] sm:$0xff]
    %v1560 = vld [vmem:[#allocation10 + $0x1b8] sm:$0xff]
    %v1561 = vld [vmem:[#allocation10 + $0x1c0] sm:$0xff]
    %v1562 = vld [vmem:[#allocation10 + $0x1c8] sm:$0xff]
    %1563 = vmatpush.msra.mxu0 0.0
    %1564 = vmatpush.msra.mxu0 0.0
    %1565 = vmatpush.msra.mxu0 0.0
    %1566 = vmatpush.msra.mxu0 0.0
    %1567 = vmatpush.msra.mxu0 0.0
    %1568 = vmatpush.msra.mxu0 0.0
    %1569 = vmatpush.msra.mxu0 0.0
    %1570 = vmatpush.msra.mxu0 0.0
    %1571 = vmatpush.msra.mxu0 %v1561
    %1572 = vmatpush.msra.mxu0 %v1559
    %1573 = vmatpush.msra.mxu0 %v1557
    %1574 = vmatpush.msra.mxu0 %v1555
    %1575 = vmatpush.msra.mxu0 %v1553
    %1576 = vmatpush.msra.mxu0 %v1551
    %1577 = vmatpush.msra.mxu0 %v1549
    %1578 = vmatpush.msra.mxu0 %v1547
    %1579 = vmatmul.f32.gmra.mxu0 %v138
    %v1580 = vpop.f32.mrf.mxu0
    %v1581 = vadd.f32 0.0, %v1580
    %1582 = vdwg.mxu0
    %1583 = vmatpush.msra.mxu0 0.0
    %1584 = vmatpush.msra.mxu0 0.0
    %1585 = vmatpush.msra.mxu0 0.0
    %1586 = vmatpush.msra.mxu0 0.0
    %1587 = vmatpush.msra.mxu0 0.0
    %1588 = vmatpush.msra.mxu0 0.0
    %1589 = vmatpush.msra.mxu0 0.0
    %1590 = vmatpush.msra.mxu0 0.0
    %1591 = vmatpush.msra.mxu0 %v1562
    %1592 = vmatpush.msra.mxu0 %v1560
    %1593 = vmatpush.msra.mxu0 %v1558
    %1594 = vmatpush.msra.mxu0 %v1556
    %1595 = vmatpush.msra.mxu0 %v1554
    %1596 = vmatpush.msra.mxu0 %v1552
    %1597 = vmatpush.msra.mxu0 %v1550
    %1598 = vmatpush.msra.mxu0 %v1548
    %1599 = vmatmul.f32.gmra.mxu0 %v138
    %v1600 = vpop.f32.mrf.mxu0
    %v1601 = vadd.f32 0.0, %v1600
    %1602 = vdwg.mxu0
    %v1603 = vadd.f32 %v1545, %v1581
    %v1604 = vadd.f32 %v1546, %v1601
    %v1605 = vxor.u32 %v1543, 2147483648
    %v1606 = vxor.u32 %v1544, 2147483648
    %v1607 = vmul.f32 %v1605, 1.442695
    %v1608 = vpow.pop %v1607
    %v1609 = vmul.f32 %v1606, 1.442695
    %v1610 = vpow.pop %v1609
    %v1611 = vadd.f32 %v1608, 1.0
    %v1612 = vadd.f32 %v1610, 1.0
    %v1613 = vrcp.pop %v1611
    %v1614 = vmul.f32 %v1611, %v1613
    %v1615 = vsub.f32 1.0, %v1614
    %v1616 = vmul.f32 %v1613, %v1615
    %v1617 = vadd.f32 %v1613, %v1616
    %vm1618 = vweird.f32 %v1611
    %vm1619 = vweird.f32 %v1613
    %vm1620 = vmor %vm1618, %vm1619
    %v1621 = vsel %vm1620, %v1613, %v1617
    %v1622 = vand.u32 2147483647, %v1611
    %vm1623 = vcmp.eq.f32.partialorder %v1622, 8.507059e+37
    %v1624 = vand.u32 %v1611, 2147483648
    %v1625 = vor.u32 1.1754944e-38, %v1624
    %v1626 = vsel %vm1623, %v1625, %v1621
    %v1627 = vmul.f32 1.0, %v1626
    %v1628 = vrcp.pop %v1612
    %v1629 = vmul.f32 %v1612, %v1628
    %v1630 = vsub.f32 1.0, %v1629
    %v1631 = vmul.f32 %v1628, %v1630
    %v1632 = vadd.f32 %v1628, %v1631
    %vm1633 = vweird.f32 %v1612
    %vm1634 = vweird.f32 %v1628
    %vm1635 = vmor %vm1633, %vm1634
    %v1636 = vsel %vm1635, %v1628, %v1632
    %v1637 = vand.u32 2147483647, %v1612
    %vm1638 = vcmp.eq.f32.partialorder %v1637, 8.507059e+37
    %v1639 = vand.u32 %v1612, 2147483648
    %v1640 = vor.u32 1.1754944e-38, %v1639
    %v1641 = vsel %vm1638, %v1640, %v1636
    %v1642 = vmul.f32 1.0, %v1641
    %v1643 = vtanh.pop %v1544
    %v1644 = vxor.u32 %v1603, 2147483648
    %v1645 = vxor.u32 %v1604, 2147483648
    %v1646 = vmul.f32 %v1644, 1.442695
    %v1647 = vpow.pop %v1646
    %v1648 = vmul.f32 %v1645, 1.442695
    %v1649 = vpow.pop %v1648
    %v1650 = vadd.f32 %v1647, 1.0
    %v1651 = vadd.f32 %v1649, 1.0
    %v1652 = vrcp.pop %v1650
    %v1653 = vmul.f32 %v1650, %v1652
    %v1654 = vsub.f32 1.0, %v1653
    %v1655 = vmul.f32 %v1652, %v1654
    %v1656 = vadd.f32 %v1652, %v1655
    %vm1657 = vweird.f32 %v1650
    %vm1658 = vweird.f32 %v1652
    %vm1659 = vmor %vm1657, %vm1658
    %v1660 = vsel %vm1659, %v1652, %v1656
    %v1661 = vand.u32 2147483647, %v1650
    %vm1662 = vcmp.eq.f32.partialorder %v1661, 8.507059e+37
    %v1663 = vand.u32 %v1650, 2147483648
    %v1664 = vor.u32 1.1754944e-38, %v1663
    %v1665 = vsel %vm1662, %v1664, %v1660
    %v1666 = vmul.f32 1.0, %v1665
    %v1667 = vrcp.pop %v1651
    %v1668 = vmul.f32 %v1651, %v1667
    %v1669 = vsub.f32 1.0, %v1668
    %v1670 = vmul.f32 %v1667, %v1669
    %v1671 = vadd.f32 %v1667, %v1670
    %vm1672 = vweird.f32 %v1651
    %vm1673 = vweird.f32 %v1667
    %vm1674 = vmor %vm1672, %vm1673
    %v1675 = vsel %vm1674, %v1667, %v1671
    %v1676 = vand.u32 2147483647, %v1651
    %vm1677 = vcmp.eq.f32.partialorder %v1676, 8.507059e+37
    %v1678 = vand.u32 %v1651, 2147483648
    %v1679 = vor.u32 1.1754944e-38, %v1678
    %v1680 = vsel %vm1677, %v1679, %v1675
    %v1681 = vmul.f32 1.0, %v1680
    %v1682 = vtanh.pop %v1604
    %v1683 = vmul.f32 %v1627, 0.0
    %1685 = vrot.lane.b32.xlu0 %v1643, 64
    %v1686 = vpop.permute.xlu0 %1685
    %v1688 = vmul.f32 %v1627, %v1686
    %1690 = vrot.lane.b32.xlu0 %v1688, 64
    %v1691 = vpop.permute.xlu0 %1690
    %v1693 = vadd.f32 %v1683, %v1691
    %v1694 = vtanh.pop %v1693
    %1696 = vrot.lane.b32.xlu0 %v1694, 64
    %v1697 = vpop.permute.xlu0 %1696
    %v1699 = vmul.f32 %v1642, %v1697
    %v1700 = vmul.f32 %v1666, 0.0
    %1702 = vrot.lane.b32.xlu0 %v1682, 64
    %v1703 = vpop.permute.xlu0 %1702
    %v1705 = vmul.f32 %v1666, %v1703
    %1707 = vrot.lane.b32.xlu0 %v1705, 64
    %v1708 = vpop.permute.xlu0 %1707
    %v1710 = vadd.f32 %v1700, %v1708
    %v1711 = vtanh.pop %v1710
    %1713 = vrot.lane.b32.xlu0 %v1711, 64
    %v1714 = vpop.permute.xlu0 %1713
    %v1716 = vmul.f32 %v1681, %v1714
    %1717 = vst.msk [vmem:[#allocation5] sm:$0xff] %vm136, %v1699
    %1718 = vst.msk [vmem:[#allocation6 + $0x38] sm:$0xff] %vm136, %v1716
    %v1719 = vld [vmem:[#allocation4 + $0x20] sm:$0xff]
    %v1720 = vld [vmem:[#allocation4 + $0x28] sm:$0xff]
    %v1721 = vld [vmem:[#allocation10 + $0xd0] sm:$0xff]
    %v1722 = vld [vmem:[#allocation10 + $0xd8] sm:$0xff]
    %v1723 = vld [vmem:[#allocation10 + $0xe0] sm:$0xff]
    %v1724 = vld [vmem:[#allocation10 + $0xe8] sm:$0xff]
    %v1725 = vld [vmem:[#allocation10 + $0xf0] sm:$0xff]
    %v1726 = vld [vmem:[#allocation10 + $0xf8] sm:$0xff]
    %v1727 = vld [vmem:[#allocation10 + $0x100] sm:$0xff]
    %v1728 = vld [vmem:[#allocation10 + $0x108] sm:$0xff]
    %v1729 = vld [vmem:[#allocation10 + $0x110] sm:$0xff]
    %v1730 = vld [vmem:[#allocation10 + $0x118] sm:$0xff]
    %v1731 = vld [vmem:[#allocation10 + $0x120] sm:$0xff]
    %v1732 = vld [vmem:[#allocation10 + $0x128] sm:$0xff]
    %v1733 = vld [vmem:[#allocation10 + $0x130] sm:$0xff]
    %v1734 = vld [vmem:[#allocation10 + $0x138] sm:$0xff]
    %v1735 = vld [vmem:[#allocation10 + $0x140] sm:$0xff]
    %v1736 = vld [vmem:[#allocation10 + $0x148] sm:$0xff]
    %v1738 = vsel %vm136, %v1699, 0
    %1740 = vmatpush.msra.mxu0 0.0
    %1741 = vmatpush.msra.mxu0 0.0
    %1742 = vmatpush.msra.mxu0 0.0
    %1743 = vmatpush.msra.mxu0 0.0
    %1744 = vmatpush.msra.mxu0 0.0
    %1745 = vmatpush.msra.mxu0 0.0
    %1746 = vmatpush.msra.mxu0 0.0
    %1747 = vmatpush.msra.mxu0 0.0
    %1748 = vmatpush.msra.mxu0 %v1735
    %1749 = vmatpush.msra.mxu0 %v1733
    %1750 = vmatpush.msra.mxu0 %v1731
    %1751 = vmatpush.msra.mxu0 %v1729
    %1752 = vmatpush.msra.mxu0 %v1727
    %1753 = vmatpush.msra.mxu0 %v1725
    %1754 = vmatpush.msra.mxu0 %v1723
    %1755 = vmatpush.msra.mxu0 %v1721
    %1756 = vmatmul.f32.gmra.mxu0 %v1738
    %v1757 = vpop.f32.mrf.mxu0
    %v1758 = vadd.f32 0.0, %v1757
    %1759 = vdwg.mxu0
    %1760 = vmatpush.msra.mxu0 0.0
    %1761 = vmatpush.msra.mxu0 0.0
    %1762 = vmatpush.msra.mxu0 0.0
    %1763 = vmatpush.msra.mxu0 0.0
    %1764 = vmatpush.msra.mxu0 0.0
    %1765 = vmatpush.msra.mxu0 0.0
    %1766 = vmatpush.msra.mxu0 0.0
    %1767 = vmatpush.msra.mxu0 0.0
    %1768 = vmatpush.msra.mxu0 %v1736
    %1769 = vmatpush.msra.mxu0 %v1734
    %1770 = vmatpush.msra.mxu0 %v1732
    %1771 = vmatpush.msra.mxu0 %v1730
    %1772 = vmatpush.msra.mxu0 %v1728
    %1773 = vmatpush.msra.mxu0 %v1726
    %1774 = vmatpush.msra.mxu0 %v1724
    %1775 = vmatpush.msra.mxu0 %v1722
    %1776 = vmatmul.f32.gmra.mxu0 %v1738
    %v1777 = vpop.f32.mrf.mxu0
    %v1778 = vadd.f32 0.0, %v1777
    %1779 = vdwg.mxu0
    %v1780 = vadd.f32 %v1719, %v1758
    %v1781 = vadd.f32 %v1720, %v1778
    %v1782 = vld [vmem:[#allocation4 + $0xd0] sm:$0xff]
    %v1783 = vld [vmem:[#allocation4 + $0xd8] sm:$0xff]
    %v1784 = vld [vmem:[#allocation10 + $0x150] sm:$0xff]
    %v1785 = vld [vmem:[#allocation10 + $0x158] sm:$0xff]
    %v1786 = vld [vmem:[#allocation10 + $0x160] sm:$0xff]
    %v1787 = vld [vmem:[#allocation10 + $0x168] sm:$0xff]
    %v1788 = vld [vmem:[#allocation10 + $0x170] sm:$0xff]
    %v1789 = vld [vmem:[#allocation10 + $0x178] sm:$0xff]
    %v1790 = vld [vmem:[#allocation10 + $0x180] sm:$0xff]
    %v1791 = vld [vmem:[#allocation10 + $0x188] sm:$0xff]
    %v1792 = vld [vmem:[#allocation10 + $0x190] sm:$0xff]
    %v1793 = vld [vmem:[#allocation10 + $0x198] sm:$0xff]
    %v1794 = vld [vmem:[#allocation10 + $0x1a0] sm:$0xff]
    %v1795 = vld [vmem:[#allocation10 + $0x1a8] sm:$0xff]
    %v1796 = vld [vmem:[#allocation10 + $0x1b0] sm:$0xff]
    %v1797 = vld [vmem:[#allocation10 + $0x1b8] sm:$0xff]
    %v1798 = vld [vmem:[#allocation10 + $0x1c0] sm:$0xff]
    %v1799 = vld [vmem:[#allocation10 + $0x1c8] sm:$0xff]
    %v1801 = vsel %vm136, %v1716, 0
    %1803 = vmatpush.msra.mxu0 0.0
    %1804 = vmatpush.msra.mxu0 0.0
    %1805 = vmatpush.msra.mxu0 0.0
    %1806 = vmatpush.msra.mxu0 0.0
    %1807 = vmatpush.msra.mxu0 0.0
    %1808 = vmatpush.msra.mxu0 0.0
    %1809 = vmatpush.msra.mxu0 0.0
    %1810 = vmatpush.msra.mxu0 0.0
    %1811 = vmatpush.msra.mxu0 %v1798
    %1812 = vmatpush.msra.mxu0 %v1796
    %1813 = vmatpush.msra.mxu0 %v1794
    %1814 = vmatpush.msra.mxu0 %v1792
    %1815 = vmatpush.msra.mxu0 %v1790
    %1816 = vmatpush.msra.mxu0 %v1788
    %1817 = vmatpush.msra.mxu0 %v1786
    %1818 = vmatpush.msra.mxu0 %v1784
    %1819 = vmatmul.f32.gmra.mxu0 %v1801
    %v1820 = vpop.f32.mrf.mxu0
    %v1821 = vadd.f32 0.0, %v1820
    %1822 = vdwg.mxu0
    %1823 = vmatpush.msra.mxu0 0.0
    %1824 = vmatpush.msra.mxu0 0.0
    %1825 = vmatpush.msra.mxu0 0.0
    %1826 = vmatpush.msra.mxu0 0.0
    %1827 = vmatpush.msra.mxu0 0.0
    %1828 = vmatpush.msra.mxu0 0.0
    %1829 = vmatpush.msra.mxu0 0.0
    %1830 = vmatpush.msra.mxu0 0.0
    %1831 = vmatpush.msra.mxu0 %v1799
    %1832 = vmatpush.msra.mxu0 %v1797
    %1833 = vmatpush.msra.mxu0 %v1795
    %1834 = vmatpush.msra.mxu0 %v1793
    %1835 = vmatpush.msra.mxu0 %v1791
    %1836 = vmatpush.msra.mxu0 %v1789
    %1837 = vmatpush.msra.mxu0 %v1787
    %1838 = vmatpush.msra.mxu0 %v1785
    %1839 = vmatmul.f32.gmra.mxu0 %v1801
    %v1840 = vpop.f32.mrf.mxu0
    %v1841 = vadd.f32 0.0, %v1840
    %1842 = vdwg.mxu0
    %v1843 = vadd.f32 %v1782, %v1821
    %v1844 = vadd.f32 %v1783, %v1841
    %v1845 = vxor.u32 %v1780, 2147483648
    %v1846 = vxor.u32 %v1781, 2147483648
    %v1847 = vmul.f32 %v1845, 1.442695
    %v1848 = vpow.pop %v1847
    %v1849 = vmul.f32 %v1846, 1.442695
    %v1850 = vpow.pop %v1849
    %v1851 = vadd.f32 %v1848, 1.0
    %v1852 = vadd.f32 %v1850, 1.0
    %v1853 = vrcp.pop %v1851
    %v1854 = vmul.f32 %v1851, %v1853
    %v1855 = vsub.f32 1.0, %v1854
    %v1856 = vmul.f32 %v1853, %v1855
    %v1857 = vadd.f32 %v1853, %v1856
    %vm1858 = vweird.f32 %v1851
    %vm1859 = vweird.f32 %v1853
    %vm1860 = vmor %vm1858, %vm1859
    %v1861 = vsel %vm1860, %v1853, %v1857
    %v1862 = vand.u32 2147483647, %v1851
    %vm1863 = vcmp.eq.f32.partialorder %v1862, 8.507059e+37
    %v1864 = vand.u32 %v1851, 2147483648
    %v1865 = vor.u32 1.1754944e-38, %v1864
    %v1866 = vsel %vm1863, %v1865, %v1861
    %v1867 = vmul.f32 1.0, %v1866
    %v1868 = vrcp.pop %v1852
    %v1869 = vmul.f32 %v1852, %v1868
    %v1870 = vsub.f32 1.0, %v1869
    %v1871 = vmul.f32 %v1868, %v1870
    %v1872 = vadd.f32 %v1868, %v1871
    %vm1873 = vweird.f32 %v1852
    %vm1874 = vweird.f32 %v1868
    %vm1875 = vmor %vm1873, %vm1874
    %v1876 = vsel %vm1875, %v1868, %v1872
    %v1877 = vand.u32 2147483647, %v1852
    %vm1878 = vcmp.eq.f32.partialorder %v1877, 8.507059e+37
    %v1879 = vand.u32 %v1852, 2147483648
    %v1880 = vor.u32 1.1754944e-38, %v1879
    %v1881 = vsel %vm1878, %v1880, %v1876
    %v1882 = vmul.f32 1.0, %v1881
    %v1883 = vtanh.pop %v1781
    %v1884 = vxor.u32 %v1843, 2147483648
    %v1885 = vxor.u32 %v1844, 2147483648
    %v1886 = vmul.f32 %v1884, 1.442695
    %v1887 = vpow.pop %v1886
    %v1888 = vmul.f32 %v1885, 1.442695
    %v1889 = vpow.pop %v1888
    %v1890 = vadd.f32 %v1887, 1.0
    %v1891 = vadd.f32 %v1889, 1.0
    %v1892 = vrcp.pop %v1890
    %v1893 = vmul.f32 %v1890, %v1892
    %v1894 = vsub.f32 1.0, %v1893
    %v1895 = vmul.f32 %v1892, %v1894
    %v1896 = vadd.f32 %v1892, %v1895
    %vm1897 = vweird.f32 %v1890
    %vm1898 = vweird.f32 %v1892
    %vm1899 = vmor %vm1897, %vm1898
    %v1900 = vsel %vm1899, %v1892, %v1896
    %v1901 = vand.u32 2147483647, %v1890
    %vm1902 = vcmp.eq.f32.partialorder %v1901, 8.507059e+37
    %v1903 = vand.u32 %v1890, 2147483648
    %v1904 = vor.u32 1.1754944e-38, %v1903
    %v1905 = vsel %vm1902, %v1904, %v1900
    %v1906 = vmul.f32 1.0, %v1905
    %v1907 = vrcp.pop %v1891
    %v1908 = vmul.f32 %v1891, %v1907
    %v1909 = vsub.f32 1.0, %v1908
    %v1910 = vmul.f32 %v1907, %v1909
    %v1911 = vadd.f32 %v1907, %v1910
    %vm1912 = vweird.f32 %v1891
    %vm1913 = vweird.f32 %v1907
    %vm1914 = vmor %vm1912, %vm1913
    %v1915 = vsel %vm1914, %v1907, %v1911
    %v1916 = vand.u32 2147483647, %v1891
    %vm1917 = vcmp.eq.f32.partialorder %v1916, 8.507059e+37
    %v1918 = vand.u32 %v1891, 2147483648
    %v1919 = vor.u32 1.1754944e-38, %v1918
    %v1920 = vsel %vm1917, %v1919, %v1915
    %v1921 = vmul.f32 1.0, %v1920
    %v1922 = vtanh.pop %v1844
    %v1923 = vmul.f32 %v1867, %v1693
    %1925 = vrot.lane.b32.xlu0 %v1883, 64
    %v1926 = vpop.permute.xlu0 %1925
    %v1928 = vmul.f32 %v1867, %v1926
    %1930 = vrot.lane.b32.xlu0 %v1928, 64
    %v1931 = vpop.permute.xlu0 %1930
    %v1933 = vadd.f32 %v1923, %v1931
    %v1934 = vtanh.pop %v1933
    %1936 = vrot.lane.b32.xlu0 %v1934, 64
    %v1937 = vpop.permute.xlu0 %1936
    %v1939 = vmul.f32 %v1882, %v1937
    %v1940 = vmul.f32 %v1906, %v1710
    %1942 = vrot.lane.b32.xlu0 %v1922, 64
    %v1943 = vpop.permute.xlu0 %1942
    %v1945 = vmul.f32 %v1906, %v1943
    %1947 = vrot.lane.b32.xlu0 %v1945, 64
    %v1948 = vpop.permute.xlu0 %1947
    %v1950 = vadd.f32 %v1940, %v1948
    %v1951 = vtanh.pop %v1950
    %1953 = vrot.lane.b32.xlu0 %v1951, 64
    %v1954 = vpop.permute.xlu0 %1953
    %v1956 = vmul.f32 %v1921, %v1954
    %1957 = vst.msk [vmem:[#allocation5 + $0x8] sm:$0xff] %vm136, %v1939
    %1958 = vst.msk [vmem:[#allocation6 + $0x30] sm:$0xff] %vm136, %v1956
    %v1959 = vld [vmem:[#allocation4 + $0x40] sm:$0xff]
    %v1960 = vld [vmem:[#allocation4 + $0x48] sm:$0xff]
    %v1961 = vld [vmem:[#allocation10 + $0xd0] sm:$0xff]
    %v1962 = vld [vmem:[#allocation10 + $0xd8] sm:$0xff]
    %v1963 = vld [vmem:[#allocation10 + $0xe0] sm:$0xff]
    %v1964 = vld [vmem:[#allocation10 + $0xe8] sm:$0xff]
    %v1965 = vld [vmem:[#allocation10 + $0xf0] sm:$0xff]
    %v1966 = vld [vmem:[#allocation10 + $0xf8] sm:$0xff]
    %v1967 = vld [vmem:[#allocation10 + $0x100] sm:$0xff]
    %v1968 = vld [vmem:[#allocation10 + $0x108] sm:$0xff]
    %v1969 = vld [vmem:[#allocation10 + $0x110] sm:$0xff]
    %v1970 = vld [vmem:[#allocation10 + $0x118] sm:$0xff]
    %v1971 = vld [vmem:[#allocation10 + $0x120] sm:$0xff]
    %v1972 = vld [vmem:[#allocation10 + $0x128] sm:$0xff]
    %v1973 = vld [vmem:[#allocation10 + $0x130] sm:$0xff]
    %v1974 = vld [vmem:[#allocation10 + $0x138] sm:$0xff]
    %v1975 = vld [vmem:[#allocation10 + $0x140] sm:$0xff]
    %v1976 = vld [vmem:[#allocation10 + $0x148] sm:$0xff]
    %v1978 = vsel %vm136, %v1939, 0
    %1980 = vmatpush.msra.mxu0 0.0
    %1981 = vmatpush.msra.mxu0 0.0
    %1982 = vmatpush.msra.mxu0 0.0
    %1983 = vmatpush.msra.mxu0 0.0
    %1984 = vmatpush.msra.mxu0 0.0
    %1985 = vmatpush.msra.mxu0 0.0
    %1986 = vmatpush.msra.mxu0 0.0
    %1987 = vmatpush.msra.mxu0 0.0
    %1988 = vmatpush.msra.mxu0 %v1975
    %1989 = vmatpush.msra.mxu0 %v1973
    %1990 = vmatpush.msra.mxu0 %v1971
    %1991 = vmatpush.msra.mxu0 %v1969
    %1992 = vmatpush.msra.mxu0 %v1967
    %1993 = vmatpush.msra.mxu0 %v1965
    %1994 = vmatpush.msra.mxu0 %v1963
    %1995 = vmatpush.msra.mxu0 %v1961
    %1996 = vmatmul.f32.gmra.mxu0 %v1978
    %v1997 = vpop.f32.mrf.mxu0
    %v1998 = vadd.f32 0.0, %v1997
    %1999 = vdwg.mxu0
    %2000 = vmatpush.msra.mxu0 0.0
    %2001 = vmatpush.msra.mxu0 0.0
    %2002 = vmatpush.msra.mxu0 0.0
    %2003 = vmatpush.msra.mxu0 0.0
    %2004 = vmatpush.msra.mxu0 0.0
    %2005 = vmatpush.msra.mxu0 0.0
    %2006 = vmatpush.msra.mxu0 0.0
    %2007 = vmatpush.msra.mxu0 0.0
    %2008 = vmatpush.msra.mxu0 %v1976
    %2009 = vmatpush.msra.mxu0 %v1974
    %2010 = vmatpush.msra.mxu0 %v1972
    %2011 = vmatpush.msra.mxu0 %v1970
    %2012 = vmatpush.msra.mxu0 %v1968
    %2013 = vmatpush.msra.mxu0 %v1966
    %2014 = vmatpush.msra.mxu0 %v1964
    %2015 = vmatpush.msra.mxu0 %v1962
    %2016 = vmatmul.f32.gmra.mxu0 %v1978
    %v2017 = vpop.f32.mrf.mxu0
    %v2018 = vadd.f32 0.0, %v2017
    %2019 = vdwg.mxu0
    %v2020 = vadd.f32 %v1959, %v1998
    %v2021 = vadd.f32 %v1960, %v2018
    %v2022 = vld [vmem:[#allocation4 + $0xb0] sm:$0xff]
    %v2023 = vld [vmem:[#allocation4 + $0xb8] sm:$0xff]
    %v2024 = vld [vmem:[#allocation10 + $0x150] sm:$0xff]
    %v2025 = vld [vmem:[#allocation10 + $0x158] sm:$0xff]
    %v2026 = vld [vmem:[#allocation10 + $0x160] sm:$0xff]
    %v2027 = vld [vmem:[#allocation10 + $0x168] sm:$0xff]
    %v2028 = vld [vmem:[#allocation10 + $0x170] sm:$0xff]
    %v2029 = vld [vmem:[#allocation10 + $0x178] sm:$0xff]
    %v2030 = vld [vmem:[#allocation10 + $0x180] sm:$0xff]
    %v2031 = vld [vmem:[#allocation10 + $0x188] sm:$0xff]
    %v2032 = vld [vmem:[#allocation10 + $0x190] sm:$0xff]
    %v2033 = vld [vmem:[#allocation10 + $0x198] sm:$0xff]
    %v2034 = vld [vmem:[#allocation10 + $0x1a0] sm:$0xff]
    %v2035 = vld [vmem:[#allocation10 + $0x1a8] sm:$0xff]
    %v2036 = vld [vmem:[#allocation10 + $0x1b0] sm:$0xff]
    %v2037 = vld [vmem:[#allocation10 + $0x1b8] sm:$0xff]
    %v2038 = vld [vmem:[#allocation10 + $0x1c0] sm:$0xff]
    %v2039 = vld [vmem:[#allocation10 + $0x1c8] sm:$0xff]
    %v2041 = vsel %vm136, %v1956, 0
    %2043 = vmatpush.msra.mxu0 0.0
    %2044 = vmatpush.msra.mxu0 0.0
    %2045 = vmatpush.msra.mxu0 0.0
    %2046 = vmatpush.msra.mxu0 0.0
    %2047 = vmatpush.msra.mxu0 0.0
    %2048 = vmatpush.msra.mxu0 0.0
    %2049 = vmatpush.msra.mxu0 0.0
    %2050 = vmatpush.msra.mxu0 0.0
    %2051 = vmatpush.msra.mxu0 %v2038
    %2052 = vmatpush.msra.mxu0 %v2036
    %2053 = vmatpush.msra.mxu0 %v2034
    %2054 = vmatpush.msra.mxu0 %v2032
    %2055 = vmatpush.msra.mxu0 %v2030
    %2056 = vmatpush.msra.mxu0 %v2028
    %2057 = vmatpush.msra.mxu0 %v2026
    %2058 = vmatpush.msra.mxu0 %v2024
    %2059 = vmatmul.f32.gmra.mxu0 %v2041
    %v2060 = vpop.f32.mrf.mxu0
    %v2061 = vadd.f32 0.0, %v2060
    %2062 = vdwg.mxu0
    %2063 = vmatpush.msra.mxu0 0.0
    %2064 = vmatpush.msra.mxu0 0.0
    %2065 = vmatpush.msra.mxu0 0.0
    %2066 = vmatpush.msra.mxu0 0.0
    %2067 = vmatpush.msra.mxu0 0.0
    %2068 = vmatpush.msra.mxu0 0.0
    %2069 = vmatpush.msra.mxu0 0.0
    %2070 = vmatpush.msra.mxu0 0.0
    %2071 = vmatpush.msra.mxu0 %v2039
    %2072 = vmatpush.msra.mxu0 %v2037
    %2073 = vmatpush.msra.mxu0 %v2035
    %2074 = vmatpush.msra.mxu0 %v2033
    %2075 = vmatpush.msra.mxu0 %v2031
    %2076 = vmatpush.msra.mxu0 %v2029
    %2077 = vmatpush.msra.mxu0 %v2027
    %2078 = vmatpush.msra.mxu0 %v2025
    %2079 = vmatmul.f32.gmra.mxu0 %v2041
    %v2080 = vpop.f32.mrf.mxu0
    %v2081 = vadd.f32 0.0, %v2080
    %2082 = vdwg.mxu0
    %v2083 = vadd.f32 %v2022, %v2061
    %v2084 = vadd.f32 %v2023, %v2081
    %v2085 = vxor.u32 %v2020, 2147483648
    %v2086 = vxor.u32 %v2021, 2147483648
    %v2087 = vmul.f32 %v2085, 1.442695
    %v2088 = vpow.pop %v2087
    %v2089 = vmul.f32 %v2086, 1.442695
    %v2090 = vpow.pop %v2089
    %v2091 = vadd.f32 %v2088, 1.0
    %v2092 = vadd.f32 %v2090, 1.0
    %v2093 = vrcp.pop %v2091
    %v2094 = vmul.f32 %v2091, %v2093
    %v2095 = vsub.f32 1.0, %v2094
    %v2096 = vmul.f32 %v2093, %v2095
    %v2097 = vadd.f32 %v2093, %v2096
    %vm2098 = vweird.f32 %v2091
    %vm2099 = vweird.f32 %v2093
    %vm2100 = vmor %vm2098, %vm2099
    %v2101 = vsel %vm2100, %v2093, %v2097
    %v2102 = vand.u32 2147483647, %v2091
    %vm2103 = vcmp.eq.f32.partialorder %v2102, 8.507059e+37
    %v2104 = vand.u32 %v2091, 2147483648
    %v2105 = vor.u32 1.1754944e-38, %v2104
    %v2106 = vsel %vm2103, %v2105, %v2101
    %v2107 = vmul.f32 1.0, %v2106
    %v2108 = vrcp.pop %v2092
    %v2109 = vmul.f32 %v2092, %v2108
    %v2110 = vsub.f32 1.0, %v2109
    %v2111 = vmul.f32 %v2108, %v2110
    %v2112 = vadd.f32 %v2108, %v2111
    %vm2113 = vweird.f32 %v2092
    %vm2114 = vweird.f32 %v2108
    %vm2115 = vmor %vm2113, %vm2114
    %v2116 = vsel %vm2115, %v2108, %v2112
    %v2117 = vand.u32 2147483647, %v2092
    %vm2118 = vcmp.eq.f32.partialorder %v2117, 8.507059e+37
    %v2119 = vand.u32 %v2092, 2147483648
    %v2120 = vor.u32 1.1754944e-38, %v2119
    %v2121 = vsel %vm2118, %v2120, %v2116
    %v2122 = vmul.f32 1.0, %v2121
    %v2123 = vtanh.pop %v2021
    %v2124 = vxor.u32 %v2083, 2147483648
    %v2125 = vxor.u32 %v2084, 2147483648
    %v2126 = vmul.f32 %v2124, 1.442695
    %v2127 = vpow.pop %v2126
    %v2128 = vmul.f32 %v2125, 1.442695
    %v2129 = vpow.pop %v2128
    %v2130 = vadd.f32 %v2127, 1.0
    %v2131 = vadd.f32 %v2129, 1.0
    %v2132 = vrcp.pop %v2130
    %v2133 = vmul.f32 %v2130, %v2132
    %v2134 = vsub.f32 1.0, %v2133
    %v2135 = vmul.f32 %v2132, %v2134
    %v2136 = vadd.f32 %v2132, %v2135
    %vm2137 = vweird.f32 %v2130
    %vm2138 = vweird.f32 %v2132
    %vm2139 = vmor %vm2137, %vm2138
    %v2140 = vsel %vm2139, %v2132, %v2136
    %v2141 = vand.u32 2147483647, %v2130
    %vm2142 = vcmp.eq.f32.partialorder %v2141, 8.507059e+37
    %v2143 = vand.u32 %v2130, 2147483648
    %v2144 = vor.u32 1.1754944e-38, %v2143
    %v2145 = vsel %vm2142, %v2144, %v2140
    %v2146 = vmul.f32 1.0, %v2145
    %v2147 = vrcp.pop %v2131
    %v2148 = vmul.f32 %v2131, %v2147
    %v2149 = vsub.f32 1.0, %v2148
    %v2150 = vmul.f32 %v2147, %v2149
    %v2151 = vadd.f32 %v2147, %v2150
    %vm2152 = vweird.f32 %v2131
    %vm2153 = vweird.f32 %v2147
    %vm2154 = vmor %vm2152, %vm2153
    %v2155 = vsel %vm2154, %v2147, %v2151
    %v2156 = vand.u32 2147483647, %v2131
    %vm2157 = vcmp.eq.f32.partialorder %v2156, 8.507059e+37
    %v2158 = vand.u32 %v2131, 2147483648
    %v2159 = vor.u32 1.1754944e-38, %v2158
    %v2160 = vsel %vm2157, %v2159, %v2155
    %v2161 = vmul.f32 1.0, %v2160
    %v2162 = vtanh.pop %v2084
    %v2163 = vmul.f32 %v2107, %v1933
    %2165 = vrot.lane.b32.xlu0 %v2123, 64
    %v2166 = vpop.permute.xlu0 %2165
    %v2168 = vmul.f32 %v2107, %v2166
    %2170 = vrot.lane.b32.xlu0 %v2168, 64
    %v2171 = vpop.permute.xlu0 %2170
    %v2173 = vadd.f32 %v2163, %v2171
    %v2174 = vtanh.pop %v2173
    %2176 = vrot.lane.b32.xlu0 %v2174, 64
    %v2177 = vpop.permute.xlu0 %2176
    %v2179 = vmul.f32 %v2122, %v2177
    %v2180 = vmul.f32 %v2146, %v1950
    %2182 = vrot.lane.b32.xlu0 %v2162, 64
    %v2183 = vpop.permute.xlu0 %2182
    %v2185 = vmul.f32 %v2146, %v2183
    %2187 = vrot.lane.b32.xlu0 %v2185, 64
    %v2188 = vpop.permute.xlu0 %2187
    %v2190 = vadd.f32 %v2180, %v2188
    %v2191 = vtanh.pop %v2190
    %2193 = vrot.lane.b32.xlu0 %v2191, 64
    %v2194 = vpop.permute.xlu0 %2193
    %v2196 = vmul.f32 %v2161, %v2194
    %2197 = vst.msk [vmem:[#allocation5 + $0x10] sm:$0xff] %vm136, %v2179
    %2198 = vst.msk [vmem:[#allocation6 + $0x28] sm:$0xff] %vm136, %v2196
    %v2199 = vld [vmem:[#allocation4 + $0x60] sm:$0xff]
    %v2200 = vld [vmem:[#allocation4 + $0x68] sm:$0xff]
    %v2201 = vld [vmem:[#allocation10 + $0xd0] sm:$0xff]
    %v2202 = vld [vmem:[#allocation10 + $0xd8] sm:$0xff]
    %v2203 = vld [vmem:[#allocation10 + $0xe0] sm:$0xff]
    %v2204 = vld [vmem:[#allocation10 + $0xe8] sm:$0xff]
    %v2205 = vld [vmem:[#allocation10 + $0xf0] sm:$0xff]
    %v2206 = vld [vmem:[#allocation10 + $0xf8] sm:$0xff]
    %v2207 = vld [vmem:[#allocation10 + $0x100] sm:$0xff]
    %v2208 = vld [vmem:[#allocation10 + $0x108] sm:$0xff]
    %v2209 = vld [vmem:[#allocation10 + $0x110] sm:$0xff]
    %v2210 = vld [vmem:[#allocation10 + $0x118] sm:$0xff]
    %v2211 = vld [vmem:[#allocation10 + $0x120] sm:$0xff]
    %v2212 = vld [vmem:[#allocation10 + $0x128] sm:$0xff]
    %v2213 = vld [vmem:[#allocation10 + $0x130] sm:$0xff]
    %v2214 = vld [vmem:[#allocation10 + $0x138] sm:$0xff]
    %v2215 = vld [vmem:[#allocation10 + $0x140] sm:$0xff]
    %v2216 = vld [vmem:[#allocation10 + $0x148] sm:$0xff]
    %v2218 = vsel %vm136, %v2179, 0
    %2220 = vmatpush.msra.mxu0 0.0
    %2221 = vmatpush.msra.mxu0 0.0
    %2222 = vmatpush.msra.mxu0 0.0
    %2223 = vmatpush.msra.mxu0 0.0
    %2224 = vmatpush.msra.mxu0 0.0
    %2225 = vmatpush.msra.mxu0 0.0
    %2226 = vmatpush.msra.mxu0 0.0
    %2227 = vmatpush.msra.mxu0 0.0
    %2228 = vmatpush.msra.mxu0 %v2215
    %2229 = vmatpush.msra.mxu0 %v2213
    %2230 = vmatpush.msra.mxu0 %v2211
    %2231 = vmatpush.msra.mxu0 %v2209
    %2232 = vmatpush.msra.mxu0 %v2207
    %2233 = vmatpush.msra.mxu0 %v2205
    %2234 = vmatpush.msra.mxu0 %v2203
    %2235 = vmatpush.msra.mxu0 %v2201
    %2236 = vmatmul.f32.gmra.mxu0 %v2218
    %v2237 = vpop.f32.mrf.mxu0
    %v2238 = vadd.f32 0.0, %v2237
    %2239 = vdwg.mxu0
    %2240 = vmatpush.msra.mxu0 0.0
    %2241 = vmatpush.msra.mxu0 0.0
    %2242 = vmatpush.msra.mxu0 0.0
    %2243 = vmatpush.msra.mxu0 0.0
    %2244 = vmatpush.msra.mxu0 0.0
    %2245 = vmatpush.msra.mxu0 0.0
    %2246 = vmatpush.msra.mxu0 0.0
    %2247 = vmatpush.msra.mxu0 0.0
    %2248 = vmatpush.msra.mxu0 %v2216
    %2249 = vmatpush.msra.mxu0 %v2214
    %2250 = vmatpush.msra.mxu0 %v2212
    %2251 = vmatpush.msra.mxu0 %v2210
    %2252 = vmatpush.msra.mxu0 %v2208
    %2253 = vmatpush.msra.mxu0 %v2206
    %2254 = vmatpush.msra.mxu0 %v2204
    %2255 = vmatpush.msra.mxu0 %v2202
    %2256 = vmatmul.f32.gmra.mxu0 %v2218
    %v2257 = vpop.f32.mrf.mxu0
    %v2258 = vadd.f32 0.0, %v2257
    %2259 = vdwg.mxu0
    %v2260 = vadd.f32 %v2199, %v2238
    %v2261 = vadd.f32 %v2200, %v2258
    %v2262 = vld [vmem:[#allocation4 + $0x90] sm:$0xff]
    %v2263 = vld [vmem:[#allocation4 + $0x98] sm:$0xff]
    %v2264 = vld [vmem:[#allocation10 + $0x150] sm:$0xff]
    %v2265 = vld [vmem:[#allocation10 + $0x158] sm:$0xff]
    %v2266 = vld [vmem:[#allocation10 + $0x160] sm:$0xff]
    %v2267 = vld [vmem:[#allocation10 + $0x168] sm:$0xff]
    %v2268 = vld [vmem:[#allocation10 + $0x170] sm:$0xff]
    %v2269 = vld [vmem:[#allocation10 + $0x178] sm:$0xff]
    %v2270 = vld [vmem:[#allocation10 + $0x180] sm:$0xff]
    %v2271 = vld [vmem:[#allocation10 + $0x188] sm:$0xff]
    %v2272 = vld [vmem:[#allocation10 + $0x190] sm:$0xff]
    %v2273 = vld [vmem:[#allocation10 + $0x198] sm:$0xff]
    %v2274 = vld [vmem:[#allocation10 + $0x1a0] sm:$0xff]
    %v2275 = vld [vmem:[#allocation10 + $0x1a8] sm:$0xff]
    %v2276 = vld [vmem:[#allocation10 + $0x1b0] sm:$0xff]
    %v2277 = vld [vmem:[#allocation10 + $0x1b8] sm:$0xff]
    %v2278 = vld [vmem:[#allocation10 + $0x1c0] sm:$0xff]
    %v2279 = vld [vmem:[#allocation10 + $0x1c8] sm:$0xff]
    %v2281 = vsel %vm136, %v2196, 0
    %2283 = vmatpush.msra.mxu0 0.0
    %2284 = vmatpush.msra.mxu0 0.0
    %2285 = vmatpush.msra.mxu0 0.0
    %2286 = vmatpush.msra.mxu0 0.0
    %2287 = vmatpush.msra.mxu0 0.0
    %2288 = vmatpush.msra.mxu0 0.0
    %2289 = vmatpush.msra.mxu0 0.0
    %2290 = vmatpush.msra.mxu0 0.0
    %2291 = vmatpush.msra.mxu0 %v2278
    %2292 = vmatpush.msra.mxu0 %v2276
    %2293 = vmatpush.msra.mxu0 %v2274
    %2294 = vmatpush.msra.mxu0 %v2272
    %2295 = vmatpush.msra.mxu0 %v2270
    %2296 = vmatpush.msra.mxu0 %v2268
    %2297 = vmatpush.msra.mxu0 %v2266
    %2298 = vmatpush.msra.mxu0 %v2264
    %2299 = vmatmul.f32.gmra.mxu0 %v2281
    %v2300 = vpop.f32.mrf.mxu0
    %v2301 = vadd.f32 0.0, %v2300
    %2302 = vdwg.mxu0
    %2303 = vmatpush.msra.mxu0 0.0
    %2304 = vmatpush.msra.mxu0 0.0
    %2305 = vmatpush.msra.mxu0 0.0
    %2306 = vmatpush.msra.mxu0 0.0
    %2307 = vmatpush.msra.mxu0 0.0
    %2308 = vmatpush.msra.mxu0 0.0
    %2309 = vmatpush.msra.mxu0 0.0
    %2310 = vmatpush.msra.mxu0 0.0
    %2311 = vmatpush.msra.mxu0 %v2279
    %2312 = vmatpush.msra.mxu0 %v2277
    %2313 = vmatpush.msra.mxu0 %v2275
    %2314 = vmatpush.msra.mxu0 %v2273
    %2315 = vmatpush.msra.mxu0 %v2271
    %2316 = vmatpush.msra.mxu0 %v2269
    %2317 = vmatpush.msra.mxu0 %v2267
    %2318 = vmatpush.msra.mxu0 %v2265
    %2319 = vmatmul.f32.gmra.mxu0 %v2281
    %v2320 = vpop.f32.mrf.mxu0
    %v2321 = vadd.f32 0.0, %v2320
    %2322 = vdwg.mxu0
    %v2323 = vadd.f32 %v2262, %v2301
    %v2324 = vadd.f32 %v2263, %v2321
    %v2325 = vxor.u32 %v2260, 2147483648
    %v2326 = vxor.u32 %v2261, 2147483648
    %v2327 = vmul.f32 %v2325, 1.442695
    %v2328 = vpow.pop %v2327
    %v2329 = vmul.f32 %v2326, 1.442695
    %v2330 = vpow.pop %v2329
    %v2331 = vadd.f32 %v2328, 1.0
    %v2332 = vadd.f32 %v2330, 1.0
    %v2333 = vrcp.pop %v2331
    %v2334 = vmul.f32 %v2331, %v2333
    %v2335 = vsub.f32 1.0, %v2334
    %v2336 = vmul.f32 %v2333, %v2335
    %v2337 = vadd.f32 %v2333, %v2336
    %vm2338 = vweird.f32 %v2331
    %vm2339 = vweird.f32 %v2333
    %vm2340 = vmor %vm2338, %vm2339
    %v2341 = vsel %vm2340, %v2333, %v2337
    %v2342 = vand.u32 2147483647, %v2331
    %vm2343 = vcmp.eq.f32.partialorder %v2342, 8.507059e+37
    %v2344 = vand.u32 %v2331, 2147483648
    %v2345 = vor.u32 1.1754944e-38, %v2344
    %v2346 = vsel %vm2343, %v2345, %v2341
    %v2347 = vmul.f32 1.0, %v2346
    %v2348 = vrcp.pop %v2332
    %v2349 = vmul.f32 %v2332, %v2348
    %v2350 = vsub.f32 1.0, %v2349
    %v2351 = vmul.f32 %v2348, %v2350
    %v2352 = vadd.f32 %v2348, %v2351
    %vm2353 = vweird.f32 %v2332
    %vm2354 = vweird.f32 %v2348
    %vm2355 = vmor %vm2353, %vm2354
    %v2356 = vsel %vm2355, %v2348, %v2352
    %v2357 = vand.u32 2147483647, %v2332
    %vm2358 = vcmp.eq.f32.partialorder %v2357, 8.507059e+37
    %v2359 = vand.u32 %v2332, 2147483648
    %v2360 = vor.u32 1.1754944e-38, %v2359
    %v2361 = vsel %vm2358, %v2360, %v2356
    %v2362 = vmul.f32 1.0, %v2361
    %v2363 = vtanh.pop %v2261
    %v2364 = vxor.u32 %v2323, 2147483648
    %v2365 = vxor.u32 %v2324, 2147483648
    %v2366 = vmul.f32 %v2364, 1.442695
    %v2367 = vpow.pop %v2366
    %v2368 = vmul.f32 %v2365, 1.442695
    %v2369 = vpow.pop %v2368
    %v2370 = vadd.f32 %v2367, 1.0
    %v2371 = vadd.f32 %v2369, 1.0
    %v2372 = vrcp.pop %v2370
    %v2373 = vmul.f32 %v2370, %v2372
    %v2374 = vsub.f32 1.0, %v2373
    %v2375 = vmul.f32 %v2372, %v2374
    %v2376 = vadd.f32 %v2372, %v2375
    %vm2377 = vweird.f32 %v2370
    %vm2378 = vweird.f32 %v2372
    %vm2379 = vmor %vm2377, %vm2378
    %v2380 = vsel %vm2379, %v2372, %v2376
    %v2381 = vand.u32 2147483647, %v2370
    %vm2382 = vcmp.eq.f32.partialorder %v2381, 8.507059e+37
    %v2383 = vand.u32 %v2370, 2147483648
    %v2384 = vor.u32 1.1754944e-38, %v2383
    %v2385 = vsel %vm2382, %v2384, %v2380
    %v2386 = vmul.f32 1.0, %v2385
    %v2387 = vrcp.pop %v2371
    %v2388 = vmul.f32 %v2371, %v2387
    %v2389 = vsub.f32 1.0, %v2388
    %v2390 = vmul.f32 %v2387, %v2389
    %v2391 = vadd.f32 %v2387, %v2390
    %vm2392 = vweird.f32 %v2371
    %vm2393 = vweird.f32 %v2387
    %vm2394 = vmor %vm2392, %vm2393
    %v2395 = vsel %vm2394, %v2387, %v2391
    %v2396 = vand.u32 2147483647, %v2371
    %vm2397 = vcmp.eq.f32.partialorder %v2396, 8.507059e+37
    %v2398 = vand.u32 %v2371, 2147483648
    %v2399 = vor.u32 1.1754944e-38, %v2398
    %v2400 = vsel %vm2397, %v2399, %v2395
    %v2401 = vmul.f32 1.0, %v2400
    %v2402 = vtanh.pop %v2324
    %v2403 = vmul.f32 %v2347, %v2173
    %2405 = vrot.lane.b32.xlu0 %v2363, 64
    %v2406 = vpop.permute.xlu0 %2405
    %v2408 = vmul.f32 %v2347, %v2406
    %2410 = vrot.lane.b32.xlu0 %v2408, 64
    %v2411 = vpop.permute.xlu0 %2410
    %v2413 = vadd.f32 %v2403, %v2411
    %v2414 = vtanh.pop %v2413
    %2416 = vrot.lane.b32.xlu0 %v2414, 64
    %v2417 = vpop.permute.xlu0 %2416
    %v2419 = vmul.f32 %v2362, %v2417
    %v2420 = vmul.f32 %v2386, %v2190
    %2422 = vrot.lane.b32.xlu0 %v2402, 64
    %v2423 = vpop.permute.xlu0 %2422
    %v2425 = vmul.f32 %v2386, %v2423
    %2427 = vrot.lane.b32.xlu0 %v2425, 64
    %v2428 = vpop.permute.xlu0 %2427
    %v2430 = vadd.f32 %v2420, %v2428
    %v2431 = vtanh.pop %v2430
    %2433 = vrot.lane.b32.xlu0 %v2431, 64
    %v2434 = vpop.permute.xlu0 %2433
    %v2436 = vmul.f32 %v2401, %v2434
    %2437 = vst.msk [vmem:[#allocation5 + $0x18] sm:$0xff] %vm136, %v2419
    %2438 = vst.msk [vmem:[#allocation6 + $0x20] sm:$0xff] %vm136, %v2436
    %v2439 = vld [vmem:[#allocation4 + $0x80] sm:$0xff]
    %v2440 = vld [vmem:[#allocation4 + $0x88] sm:$0xff]
    %v2441 = vld [vmem:[#allocation10 + $0xd0] sm:$0xff]
    %v2442 = vld [vmem:[#allocation10 + $0xd8] sm:$0xff]
    %v2443 = vld [vmem:[#allocation10 + $0xe0] sm:$0xff]
    %v2444 = vld [vmem:[#allocation10 + $0xe8] sm:$0xff]
    %v2445 = vld [vmem:[#allocation10 + $0xf0] sm:$0xff]
    %v2446 = vld [vmem:[#allocation10 + $0xf8] sm:$0xff]
    %v2447 = vld [vmem:[#allocation10 + $0x100] sm:$0xff]
    %v2448 = vld [vmem:[#allocation10 + $0x108] sm:$0xff]
    %v2449 = vld [vmem:[#allocation10 + $0x110] sm:$0xff]
    %v2450 = vld [vmem:[#allocation10 + $0x118] sm:$0xff]
    %v2451 = vld [vmem:[#allocation10 + $0x120] sm:$0xff]
    %v2452 = vld [vmem:[#allocation10 + $0x128] sm:$0xff]
    %v2453 = vld [vmem:[#allocation10 + $0x130] sm:$0xff]
    %v2454 = vld [vmem:[#allocation10 + $0x138] sm:$0xff]
    %v2455 = vld [vmem:[#allocation10 + $0x140] sm:$0xff]
    %v2456 = vld [vmem:[#allocation10 + $0x148] sm:$0xff]
    %v2458 = vsel %vm136, %v2419, 0
    %2460 = vmatpush.msra.mxu0 0.0
    %2461 = vmatpush.msra.mxu0 0.0
    %2462 = vmatpush.msra.mxu0 0.0
    %2463 = vmatpush.msra.mxu0 0.0
    %2464 = vmatpush.msra.mxu0 0.0
    %2465 = vmatpush.msra.mxu0 0.0
    %2466 = vmatpush.msra.mxu0 0.0
    %2467 = vmatpush.msra.mxu0 0.0
    %2468 = vmatpush.msra.mxu0 %v2455
    %2469 = vmatpush.msra.mxu0 %v2453
    %2470 = vmatpush.msra.mxu0 %v2451
    %2471 = vmatpush.msra.mxu0 %v2449
    %2472 = vmatpush.msra.mxu0 %v2447
    %2473 = vmatpush.msra.mxu0 %v2445
    %2474 = vmatpush.msra.mxu0 %v2443
    %2475 = vmatpush.msra.mxu0 %v2441
    %2476 = vmatmul.f32.gmra.mxu0 %v2458
    %v2477 = vpop.f32.mrf.mxu0
    %v2478 = vadd.f32 0.0, %v2477
    %2479 = vdwg.mxu0
    %2480 = vmatpush.msra.mxu0 0.0
    %2481 = vmatpush.msra.mxu0 0.0
    %2482 = vmatpush.msra.mxu0 0.0
    %2483 = vmatpush.msra.mxu0 0.0
    %2484 = vmatpush.msra.mxu0 0.0
    %2485 = vmatpush.msra.mxu0 0.0
    %2486 = vmatpush.msra.mxu0 0.0
    %2487 = vmatpush.msra.mxu0 0.0
    %2488 = vmatpush.msra.mxu0 %v2456
    %2489 = vmatpush.msra.mxu0 %v2454
    %2490 = vmatpush.msra.mxu0 %v2452
    %2491 = vmatpush.msra.mxu0 %v2450
    %2492 = vmatpush.msra.mxu0 %v2448
    %2493 = vmatpush.msra.mxu0 %v2446
    %2494 = vmatpush.msra.mxu0 %v2444
    %2495 = vmatpush.msra.mxu0 %v2442
    %2496 = vmatmul.f32.gmra.mxu0 %v2458
    %v2497 = vpop.f32.mrf.mxu0
    %v2498 = vadd.f32 0.0, %v2497
    %2499 = vdwg.mxu0
    %v2500 = vadd.f32 %v2439, %v2478
    %v2501 = vadd.f32 %v2440, %v2498
    %v2502 = vld [vmem:[#allocation4 + $0x70] sm:$0xff]
    %v2503 = vld [vmem:[#allocation4 + $0x78] sm:$0xff]
    %v2504 = vld [vmem:[#allocation10 + $0x150] sm:$0xff]
    %v2505 = vld [vmem:[#allocation10 + $0x158] sm:$0xff]
    %v2506 = vld [vmem:[#allocation10 + $0x160] sm:$0xff]
    %v2507 = vld [vmem:[#allocation10 + $0x168] sm:$0xff]
    %v2508 = vld [vmem:[#allocation10 + $0x170] sm:$0xff]
    %v2509 = vld [vmem:[#allocation10 + $0x178] sm:$0xff]
    %v2510 = vld [vmem:[#allocation10 + $0x180] sm:$0xff]
    %v2511 = vld [vmem:[#allocation10 + $0x188] sm:$0xff]
    %v2512 = vld [vmem:[#allocation10 + $0x190] sm:$0xff]
    %v2513 = vld [vmem:[#allocation10 + $0x198] sm:$0xff]
    %v2514 = vld [vmem:[#allocation10 + $0x1a0] sm:$0xff]
    %v2515 = vld [vmem:[#allocation10 + $0x1a8] sm:$0xff]
    %v2516 = vld [vmem:[#allocation10 + $0x1b0] sm:$0xff]
    %v2517 = vld [vmem:[#allocation10 + $0x1b8] sm:$0xff]
    %v2518 = vld [vmem:[#allocation10 + $0x1c0] sm:$0xff]
    %v2519 = vld [vmem:[#allocation10 + $0x1c8] sm:$0xff]
    %v2521 = vsel %vm136, %v2436, 0
    %2523 = vmatpush.msra.mxu0 0.0
    %2524 = vmatpush.msra.mxu0 0.0
    %2525 = vmatpush.msra.mxu0 0.0
    %2526 = vmatpush.msra.mxu0 0.0
    %2527 = vmatpush.msra.mxu0 0.0
    %2528 = vmatpush.msra.mxu0 0.0
    %2529 = vmatpush.msra.mxu0 0.0
    %2530 = vmatpush.msra.mxu0 0.0
    %2531 = vmatpush.msra.mxu0 %v2518
    %2532 = vmatpush.msra.mxu0 %v2516
    %2533 = vmatpush.msra.mxu0 %v2514
    %2534 = vmatpush.msra.mxu0 %v2512
    %2535 = vmatpush.msra.mxu0 %v2510
    %2536 = vmatpush.msra.mxu0 %v2508
    %2537 = vmatpush.msra.mxu0 %v2506
    %2538 = vmatpush.msra.mxu0 %v2504
    %2539 = vmatmul.f32.gmra.mxu0 %v2521
    %v2540 = vpop.f32.mrf.mxu0
    %v2541 = vadd.f32 0.0, %v2540
    %2542 = vdwg.mxu0
    %2543 = vmatpush.msra.mxu0 0.0
    %2544 = vmatpush.msra.mxu0 0.0
    %2545 = vmatpush.msra.mxu0 0.0
    %2546 = vmatpush.msra.mxu0 0.0
    %2547 = vmatpush.msra.mxu0 0.0
    %2548 = vmatpush.msra.mxu0 0.0
    %2549 = vmatpush.msra.mxu0 0.0
    %2550 = vmatpush.msra.mxu0 0.0
    %2551 = vmatpush.msra.mxu0 %v2519
    %2552 = vmatpush.msra.mxu0 %v2517
    %2553 = vmatpush.msra.mxu0 %v2515
    %2554 = vmatpush.msra.mxu0 %v2513
    %2555 = vmatpush.msra.mxu0 %v2511
    %2556 = vmatpush.msra.mxu0 %v2509
    %2557 = vmatpush.msra.mxu0 %v2507
    %2558 = vmatpush.msra.mxu0 %v2505
    %2559 = vmatmul.f32.gmra.mxu0 %v2521
    %v2560 = vpop.f32.mrf.mxu0
    %v2561 = vadd.f32 0.0, %v2560
    %2562 = vdwg.mxu0
    %v2563 = vadd.f32 %v2502, %v2541
    %v2564 = vadd.f32 %v2503, %v2561
    %v2565 = vxor.u32 %v2500, 2147483648
    %v2566 = vxor.u32 %v2501, 2147483648
    %v2567 = vmul.f32 %v2565, 1.442695
    %v2568 = vpow.pop %v2567
    %v2569 = vmul.f32 %v2566, 1.442695
    %v2570 = vpow.pop %v2569
    %v2571 = vadd.f32 %v2568, 1.0
    %v2572 = vadd.f32 %v2570, 1.0
    %v2573 = vrcp.pop %v2571
    %v2574 = vmul.f32 %v2571, %v2573
    %v2575 = vsub.f32 1.0, %v2574
    %v2576 = vmul.f32 %v2573, %v2575
    %v2577 = vadd.f32 %v2573, %v2576
    %vm2578 = vweird.f32 %v2571
    %vm2579 = vweird.f32 %v2573
    %vm2580 = vmor %vm2578, %vm2579
    %v2581 = vsel %vm2580, %v2573, %v2577
    %v2582 = vand.u32 2147483647, %v2571
    %vm2583 = vcmp.eq.f32.partialorder %v2582, 8.507059e+37
    %v2584 = vand.u32 %v2571, 2147483648
    %v2585 = vor.u32 1.1754944e-38, %v2584
    %v2586 = vsel %vm2583, %v2585, %v2581
    %v2587 = vmul.f32 1.0, %v2586
    %v2588 = vrcp.pop %v2572
    %v2589 = vmul.f32 %v2572, %v2588
    %v2590 = vsub.f32 1.0, %v2589
    %v2591 = vmul.f32 %v2588, %v2590
    %v2592 = vadd.f32 %v2588, %v2591
    %vm2593 = vweird.f32 %v2572
    %vm2594 = vweird.f32 %v2588
    %vm2595 = vmor %vm2593, %vm2594
    %v2596 = vsel %vm2595, %v2588, %v2592
    %v2597 = vand.u32 2147483647, %v2572
    %vm2598 = vcmp.eq.f32.partialorder %v2597, 8.507059e+37
    %v2599 = vand.u32 %v2572, 2147483648
    %v2600 = vor.u32 1.1754944e-38, %v2599
    %v2601 = vsel %vm2598, %v2600, %v2596
    %v2602 = vmul.f32 1.0, %v2601
    %v2603 = vtanh.pop %v2501
    %v2604 = vxor.u32 %v2563, 2147483648
    %v2605 = vxor.u32 %v2564, 2147483648
    %v2606 = vmul.f32 %v2604, 1.442695
    %v2607 = vpow.pop %v2606
    %v2608 = vmul.f32 %v2605, 1.442695
    %v2609 = vpow.pop %v2608
    %v2610 = vadd.f32 %v2607, 1.0
    %v2611 = vadd.f32 %v2609, 1.0
    %v2612 = vrcp.pop %v2610
    %v2613 = vmul.f32 %v2610, %v2612
    %v2614 = vsub.f32 1.0, %v2613
    %v2615 = vmul.f32 %v2612, %v2614
    %v2616 = vadd.f32 %v2612, %v2615
    %vm2617 = vweird.f32 %v2610
    %vm2618 = vweird.f32 %v2612
    %vm2619 = vmor %vm2617, %vm2618
    %v2620 = vsel %vm2619, %v2612, %v2616
    %v2621 = vand.u32 2147483647, %v2610
    %vm2622 = vcmp.eq.f32.partialorder %v2621, 8.507059e+37
    %v2623 = vand.u32 %v2610, 2147483648
    %v2624 = vor.u32 1.1754944e-38, %v2623
    %v2625 = vsel %vm2622, %v2624, %v2620
    %v2626 = vmul.f32 1.0, %v2625
    %v2627 = vrcp.pop %v2611
    %v2628 = vmul.f32 %v2611, %v2627
    %v2629 = vsub.f32 1.0, %v2628
    %v2630 = vmul.f32 %v2627, %v2629
    %v2631 = vadd.f32 %v2627, %v2630
    %vm2632 = vweird.f32 %v2611
    %vm2633 = vweird.f32 %v2627
    %vm2634 = vmor %vm2632, %vm2633
    %v2635 = vsel %vm2634, %v2627, %v2631
    %v2636 = vand.u32 2147483647, %v2611
    %vm2637 = vcmp.eq.f32.partialorder %v2636, 8.507059e+37
    %v2638 = vand.u32 %v2611, 2147483648
    %v2639 = vor.u32 1.1754944e-38, %v2638
    %v2640 = vsel %vm2637, %v2639, %v2635
    %v2641 = vmul.f32 1.0, %v2640
    %v2642 = vtanh.pop %v2564
    %v2643 = vmul.f32 %v2587, %v2413
    %2645 = vrot.lane.b32.xlu0 %v2603, 64
    %v2646 = vpop.permute.xlu0 %2645
    %v2648 = vmul.f32 %v2587, %v2646
    %2650 = vrot.lane.b32.xlu0 %v2648, 64
    %v2651 = vpop.permute.xlu0 %2650
    %v2653 = vadd.f32 %v2643, %v2651
    %v2654 = vtanh.pop %v2653
    %2656 = vrot.lane.b32.xlu0 %v2654, 64
    %v2657 = vpop.permute.xlu0 %2656
    %v2659 = vmul.f32 %v2602, %v2657
    %v2660 = vmul.f32 %v2626, %v2430
    %2662 = vrot.lane.b32.xlu0 %v2642, 64
    %v2663 = vpop.permute.xlu0 %2662
    %v2665 = vmul.f32 %v2626, %v2663
    %2667 = vrot.lane.b32.xlu0 %v2665, 64
    %v2668 = vpop.permute.xlu0 %2667
    %v2670 = vadd.f32 %v2660, %v2668
    %v2671 = vtanh.pop %v2670
    %2673 = vrot.lane.b32.xlu0 %v2671, 64
    %v2674 = vpop.permute.xlu0 %2673
    %v2676 = vmul.f32 %v2641, %v2674
    %2677 = vst.msk [vmem:[#allocation5 + $0x20] sm:$0xff] %vm136, %v2659
    %2678 = vst.msk [vmem:[#allocation6 + $0x18] sm:$0xff] %vm136, %v2676
    %v2679 = vld [vmem:[#allocation4 + $0xa0] sm:$0xff]
    %v2680 = vld [vmem:[#allocation4 + $0xa8] sm:$0xff]
    %v2681 = vld [vmem:[#allocation10 + $0xd0] sm:$0xff]
    %v2682 = vld [vmem:[#allocation10 + $0xd8] sm:$0xff]
    %v2683 = vld [vmem:[#allocation10 + $0xe0] sm:$0xff]
    %v2684 = vld [vmem:[#allocation10 + $0xe8] sm:$0xff]
    %v2685 = vld [vmem:[#allocation10 + $0xf0] sm:$0xff]
    %v2686 = vld [vmem:[#allocation10 + $0xf8] sm:$0xff]
    %v2687 = vld [vmem:[#allocation10 + $0x100] sm:$0xff]
    %v2688 = vld [vmem:[#allocation10 + $0x108] sm:$0xff]
    %v2689 = vld [vmem:[#allocation10 + $0x110] sm:$0xff]
    %v2690 = vld [vmem:[#allocation10 + $0x118] sm:$0xff]
    %v2691 = vld [vmem:[#allocation10 + $0x120] sm:$0xff]
    %v2692 = vld [vmem:[#allocation10 + $0x128] sm:$0xff]
    %v2693 = vld [vmem:[#allocation10 + $0x130] sm:$0xff]
    %v2694 = vld [vmem:[#allocation10 + $0x138] sm:$0xff]
    %v2695 = vld [vmem:[#allocation10 + $0x140] sm:$0xff]
    %v2696 = vld [vmem:[#allocation10 + $0x148] sm:$0xff]
    %v2698 = vsel %vm136, %v2659, 0
    %2700 = vmatpush.msra.mxu0 0.0
    %2701 = vmatpush.msra.mxu0 0.0
    %2702 = vmatpush.msra.mxu0 0.0
    %2703 = vmatpush.msra.mxu0 0.0
    %2704 = vmatpush.msra.mxu0 0.0
    %2705 = vmatpush.msra.mxu0 0.0
    %2706 = vmatpush.msra.mxu0 0.0
    %2707 = vmatpush.msra.mxu0 0.0
    %2708 = vmatpush.msra.mxu0 %v2695
    %2709 = vmatpush.msra.mxu0 %v2693
    %2710 = vmatpush.msra.mxu0 %v2691
    %2711 = vmatpush.msra.mxu0 %v2689
    %2712 = vmatpush.msra.mxu0 %v2687
    %2713 = vmatpush.msra.mxu0 %v2685
    %2714 = vmatpush.msra.mxu0 %v2683
    %2715 = vmatpush.msra.mxu0 %v2681
    %2716 = vmatmul.f32.gmra.mxu0 %v2698
    %v2717 = vpop.f32.mrf.mxu0
    %v2718 = vadd.f32 0.0, %v2717
    %2719 = vdwg.mxu0
    %2720 = vmatpush.msra.mxu0 0.0
    %2721 = vmatpush.msra.mxu0 0.0
    %2722 = vmatpush.msra.mxu0 0.0
    %2723 = vmatpush.msra.mxu0 0.0
    %2724 = vmatpush.msra.mxu0 0.0
    %2725 = vmatpush.msra.mxu0 0.0
    %2726 = vmatpush.msra.mxu0 0.0
    %2727 = vmatpush.msra.mxu0 0.0
    %2728 = vmatpush.msra.mxu0 %v2696
    %2729 = vmatpush.msra.mxu0 %v2694
    %2730 = vmatpush.msra.mxu0 %v2692
    %2731 = vmatpush.msra.mxu0 %v2690
    %2732 = vmatpush.msra.mxu0 %v2688
    %2733 = vmatpush.msra.mxu0 %v2686
    %2734 = vmatpush.msra.mxu0 %v2684
    %2735 = vmatpush.msra.mxu0 %v2682
    %2736 = vmatmul.f32.gmra.mxu0 %v2698
    %v2737 = vpop.f32.mrf.mxu0
    %v2738 = vadd.f32 0.0, %v2737
    %2739 = vdwg.mxu0
    %v2740 = vadd.f32 %v2679, %v2718
    %v2741 = vadd.f32 %v2680, %v2738
    %v2742 = vld [vmem:[#allocation4 + $0x50] sm:$0xff]
    %v2743 = vld [vmem:[#allocation4 + $0x58] sm:$0xff]
    %v2744 = vld [vmem:[#allocation10 + $0x150] sm:$0xff]
    %v2745 = vld [vmem:[#allocation10 + $0x158] sm:$0xff]
    %v2746 = vld [vmem:[#allocation10 + $0x160] sm:$0xff]
    %v2747 = vld [vmem:[#allocation10 + $0x168] sm:$0xff]
    %v2748 = vld [vmem:[#allocation10 + $0x170] sm:$0xff]
    %v2749 = vld [vmem:[#allocation10 + $0x178] sm:$0xff]
    %v2750 = vld [vmem:[#allocation10 + $0x180] sm:$0xff]
    %v2751 = vld [vmem:[#allocation10 + $0x188] sm:$0xff]
    %v2752 = vld [vmem:[#allocation10 + $0x190] sm:$0xff]
    %v2753 = vld [vmem:[#allocation10 + $0x198] sm:$0xff]
    %v2754 = vld [vmem:[#allocation10 + $0x1a0] sm:$0xff]
    %v2755 = vld [vmem:[#allocation10 + $0x1a8] sm:$0xff]
    %v2756 = vld [vmem:[#allocation10 + $0x1b0] sm:$0xff]
    %v2757 = vld [vmem:[#allocation10 + $0x1b8] sm:$0xff]
    %v2758 = vld [vmem:[#allocation10 + $0x1c0] sm:$0xff]
    %v2759 = vld [vmem:[#allocation10 + $0x1c8] sm:$0xff]
    %v2761 = vsel %vm136, %v2676, 0
    %2763 = vmatpush.msra.mxu0 0.0
    %2764 = vmatpush.msra.mxu0 0.0
    %2765 = vmatpush.msra.mxu0 0.0
    %2766 = vmatpush.msra.mxu0 0.0
    %2767 = vmatpush.msra.mxu0 0.0
    %2768 = vmatpush.msra.mxu0 0.0
    %2769 = vmatpush.msra.mxu0 0.0
    %2770 = vmatpush.msra.mxu0 0.0
    %2771 = vmatpush.msra.mxu0 %v2758
    %2772 = vmatpush.msra.mxu0 %v2756
    %2773 = vmatpush.msra.mxu0 %v2754
    %2774 = vmatpush.msra.mxu0 %v2752
    %2775 = vmatpush.msra.mxu0 %v2750
    %2776 = vmatpush.msra.mxu0 %v2748
    %2777 = vmatpush.msra.mxu0 %v2746
    %2778 = vmatpush.msra.mxu0 %v2744
    %2779 = vmatmul.f32.gmra.mxu0 %v2761
    %v2780 = vpop.f32.mrf.mxu0
    %v2781 = vadd.f32 0.0, %v2780
    %2782 = vdwg.mxu0
    %2783 = vmatpush.msra.mxu0 0.0
    %2784 = vmatpush.msra.mxu0 0.0
    %2785 = vmatpush.msra.mxu0 0.0
    %2786 = vmatpush.msra.mxu0 0.0
    %2787 = vmatpush.msra.mxu0 0.0
    %2788 = vmatpush.msra.mxu0 0.0
    %2789 = vmatpush.msra.mxu0 0.0
    %2790 = vmatpush.msra.mxu0 0.0
    %2791 = vmatpush.msra.mxu0 %v2759
    %2792 = vmatpush.msra.mxu0 %v2757
    %2793 = vmatpush.msra.mxu0 %v2755
    %2794 = vmatpush.msra.mxu0 %v2753
    %2795 = vmatpush.msra.mxu0 %v2751
    %2796 = vmatpush.msra.mxu0 %v2749
    %2797 = vmatpush.msra.mxu0 %v2747
    %2798 = vmatpush.msra.mxu0 %v2745
    %2799 = vmatmul.f32.gmra.mxu0 %v2761
    %v2800 = vpop.f32.mrf.mxu0
    %v2801 = vadd.f32 0.0, %v2800
    %2802 = vdwg.mxu0
    %v2803 = vadd.f32 %v2742, %v2781
    %v2804 = vadd.f32 %v2743, %v2801
    %v2805 = vxor.u32 %v2740, 2147483648
    %v2806 = vxor.u32 %v2741, 2147483648
    %v2807 = vmul.f32 %v2805, 1.442695
    %v2808 = vpow.pop %v2807
    %v2809 = vmul.f32 %v2806, 1.442695
    %v2810 = vpow.pop %v2809
    %v2811 = vadd.f32 %v2808, 1.0
    %v2812 = vadd.f32 %v2810, 1.0
    %v2813 = vrcp.pop %v2811
    %v2814 = vmul.f32 %v2811, %v2813
    %v2815 = vsub.f32 1.0, %v2814
    %v2816 = vmul.f32 %v2813, %v2815
    %v2817 = vadd.f32 %v2813, %v2816
    %vm2818 = vweird.f32 %v2811
    %vm2819 = vweird.f32 %v2813
    %vm2820 = vmor %vm2818, %vm2819
    %v2821 = vsel %vm2820, %v2813, %v2817
    %v2822 = vand.u32 2147483647, %v2811
    %vm2823 = vcmp.eq.f32.partialorder %v2822, 8.507059e+37
    %v2824 = vand.u32 %v2811, 2147483648
    %v2825 = vor.u32 1.1754944e-38, %v2824
    %v2826 = vsel %vm2823, %v2825, %v2821
    %v2827 = vmul.f32 1.0, %v2826
    %v2828 = vrcp.pop %v2812
    %v2829 = vmul.f32 %v2812, %v2828
    %v2830 = vsub.f32 1.0, %v2829
    %v2831 = vmul.f32 %v2828, %v2830
    %v2832 = vadd.f32 %v2828, %v2831
    %vm2833 = vweird.f32 %v2812
    %vm2834 = vweird.f32 %v2828
    %vm2835 = vmor %vm2833, %vm2834
    %v2836 = vsel %vm2835, %v2828, %v2832
    %v2837 = vand.u32 2147483647, %v2812
    %vm2838 = vcmp.eq.f32.partialorder %v2837, 8.507059e+37
    %v2839 = vand.u32 %v2812, 2147483648
    %v2840 = vor.u32 1.1754944e-38, %v2839
    %v2841 = vsel %vm2838, %v2840, %v2836
    %v2842 = vmul.f32 1.0, %v2841
    %v2843 = vtanh.pop %v2741
    %v2844 = vxor.u32 %v2803, 2147483648
    %v2845 = vxor.u32 %v2804, 2147483648
    %v2846 = vmul.f32 %v2844, 1.442695
    %v2847 = vpow.pop %v2846
    %v2848 = vmul.f32 %v2845, 1.442695
    %v2849 = vpow.pop %v2848
    %v2850 = vadd.f32 %v2847, 1.0
    %v2851 = vadd.f32 %v2849, 1.0
    %v2852 = vrcp.pop %v2850
    %v2853 = vmul.f32 %v2850, %v2852
    %v2854 = vsub.f32 1.0, %v2853
    %v2855 = vmul.f32 %v2852, %v2854
    %v2856 = vadd.f32 %v2852, %v2855
    %vm2857 = vweird.f32 %v2850
    %vm2858 = vweird.f32 %v2852
    %vm2859 = vmor %vm2857, %vm2858
    %v2860 = vsel %vm2859, %v2852, %v2856
    %v2861 = vand.u32 2147483647, %v2850
    %vm2862 = vcmp.eq.f32.partialorder %v2861, 8.507059e+37
    %v2863 = vand.u32 %v2850, 2147483648
    %v2864 = vor.u32 1.1754944e-38, %v2863
    %v2865 = vsel %vm2862, %v2864, %v2860
    %v2866 = vmul.f32 1.0, %v2865
    %v2867 = vrcp.pop %v2851
    %v2868 = vmul.f32 %v2851, %v2867
    %v2869 = vsub.f32 1.0, %v2868
    %v2870 = vmul.f32 %v2867, %v2869
    %v2871 = vadd.f32 %v2867, %v2870
    %vm2872 = vweird.f32 %v2851
    %vm2873 = vweird.f32 %v2867
    %vm2874 = vmor %vm2872, %vm2873
    %v2875 = vsel %vm2874, %v2867, %v2871
    %v2876 = vand.u32 2147483647, %v2851
    %vm2877 = vcmp.eq.f32.partialorder %v2876, 8.507059e+37
    %v2878 = vand.u32 %v2851, 2147483648
    %v2879 = vor.u32 1.1754944e-38, %v2878
    %v2880 = vsel %vm2877, %v2879, %v2875
    %v2881 = vmul.f32 1.0, %v2880
    %v2882 = vtanh.pop %v2804
    %v2883 = vmul.f32 %v2827, %v2653
    %2885 = vrot.lane.b32.xlu0 %v2843, 64
    %v2886 = vpop.permute.xlu0 %2885
    %v2888 = vmul.f32 %v2827, %v2886
    %2890 = vrot.lane.b32.xlu0 %v2888, 64
    %v2891 = vpop.permute.xlu0 %2890
    %v2893 = vadd.f32 %v2883, %v2891
    %v2894 = vtanh.pop %v2893
    %2896 = vrot.lane.b32.xlu0 %v2894, 64
    %v2897 = vpop.permute.xlu0 %2896
    %v2899 = vmul.f32 %v2842, %v2897
    %v2900 = vmul.f32 %v2866, %v2670
    %2902 = vrot.lane.b32.xlu0 %v2882, 64
    %v2903 = vpop.permute.xlu0 %2902
    %v2905 = vmul.f32 %v2866, %v2903
    %2907 = vrot.lane.b32.xlu0 %v2905, 64
    %v2908 = vpop.permute.xlu0 %2907
    %v2910 = vadd.f32 %v2900, %v2908
    %v2911 = vtanh.pop %v2910
    %2913 = vrot.lane.b32.xlu0 %v2911, 64
    %v2914 = vpop.permute.xlu0 %2913
    %v2916 = vmul.f32 %v2881, %v2914
    %2917 = vst.msk [vmem:[#allocation5 + $0x28] sm:$0xff] %vm136, %v2899
    %2918 = vst.msk [vmem:[#allocation6 + $0x10] sm:$0xff] %vm136, %v2916
    %v2919 = vld [vmem:[#allocation4 + $0xc0] sm:$0xff]
    %v2920 = vld [vmem:[#allocation4 + $0xc8] sm:$0xff]
    %v2921 = vld [vmem:[#allocation10 + $0xd0] sm:$0xff]
    %v2922 = vld [vmem:[#allocation10 + $0xd8] sm:$0xff]
    %v2923 = vld [vmem:[#allocation10 + $0xe0] sm:$0xff]
    %v2924 = vld [vmem:[#allocation10 + $0xe8] sm:$0xff]
    %v2925 = vld [vmem:[#allocation10 + $0xf0] sm:$0xff]
    %v2926 = vld [vmem:[#allocation10 + $0xf8] sm:$0xff]
    %v2927 = vld [vmem:[#allocation10 + $0x100] sm:$0xff]
    %v2928 = vld [vmem:[#allocation10 + $0x108] sm:$0xff]
    %v2929 = vld [vmem:[#allocation10 + $0x110] sm:$0xff]
    %v2930 = vld [vmem:[#allocation10 + $0x118] sm:$0xff]
    %v2931 = vld [vmem:[#allocation10 + $0x120] sm:$0xff]
    %v2932 = vld [vmem:[#allocation10 + $0x128] sm:$0xff]
    %v2933 = vld [vmem:[#allocation10 + $0x130] sm:$0xff]
    %v2934 = vld [vmem:[#allocation10 + $0x138] sm:$0xff]
    %v2935 = vld [vmem:[#allocation10 + $0x140] sm:$0xff]
    %v2936 = vld [vmem:[#allocation10 + $0x148] sm:$0xff]
    %v2938 = vsel %vm136, %v2899, 0
    %2940 = vmatpush.msra.mxu0 0.0
    %2941 = vmatpush.msra.mxu0 0.0
    %2942 = vmatpush.msra.mxu0 0.0
    %2943 = vmatpush.msra.mxu0 0.0
    %2944 = vmatpush.msra.mxu0 0.0
    %2945 = vmatpush.msra.mxu0 0.0
    %2946 = vmatpush.msra.mxu0 0.0
    %2947 = vmatpush.msra.mxu0 0.0
    %2948 = vmatpush.msra.mxu0 %v2935
    %2949 = vmatpush.msra.mxu0 %v2933
    %2950 = vmatpush.msra.mxu0 %v2931
    %2951 = vmatpush.msra.mxu0 %v2929
    %2952 = vmatpush.msra.mxu0 %v2927
    %2953 = vmatpush.msra.mxu0 %v2925
    %2954 = vmatpush.msra.mxu0 %v2923
    %2955 = vmatpush.msra.mxu0 %v2921
    %2956 = vmatmul.f32.gmra.mxu0 %v2938
    %v2957 = vpop.f32.mrf.mxu0
    %v2958 = vadd.f32 0.0, %v2957
    %2959 = vdwg.mxu0
    %2960 = vmatpush.msra.mxu0 0.0
    %2961 = vmatpush.msra.mxu0 0.0
    %2962 = vmatpush.msra.mxu0 0.0
    %2963 = vmatpush.msra.mxu0 0.0
    %2964 = vmatpush.msra.mxu0 0.0
    %2965 = vmatpush.msra.mxu0 0.0
    %2966 = vmatpush.msra.mxu0 0.0
    %2967 = vmatpush.msra.mxu0 0.0
    %2968 = vmatpush.msra.mxu0 %v2936
    %2969 = vmatpush.msra.mxu0 %v2934
    %2970 = vmatpush.msra.mxu0 %v2932
    %2971 = vmatpush.msra.mxu0 %v2930
    %2972 = vmatpush.msra.mxu0 %v2928
    %2973 = vmatpush.msra.mxu0 %v2926
    %2974 = vmatpush.msra.mxu0 %v2924
    %2975 = vmatpush.msra.mxu0 %v2922
    %2976 = vmatmul.f32.gmra.mxu0 %v2938
    %v2977 = vpop.f32.mrf.mxu0
    %v2978 = vadd.f32 0.0, %v2977
    %2979 = vdwg.mxu0
    %v2980 = vadd.f32 %v2919, %v2958
    %v2981 = vadd.f32 %v2920, %v2978
    %v2982 = vld [vmem:[#allocation4 + $0x30] sm:$0xff]
    %v2983 = vld [vmem:[#allocation4 + $0x38] sm:$0xff]
    %v2984 = vld [vmem:[#allocation10 + $0x150] sm:$0xff]
    %v2985 = vld [vmem:[#allocation10 + $0x158] sm:$0xff]
    %v2986 = vld [vmem:[#allocation10 + $0x160] sm:$0xff]
    %v2987 = vld [vmem:[#allocation10 + $0x168] sm:$0xff]
    %v2988 = vld [vmem:[#allocation10 + $0x170] sm:$0xff]
    %v2989 = vld [vmem:[#allocation10 + $0x178] sm:$0xff]
    %v2990 = vld [vmem:[#allocation10 + $0x180] sm:$0xff]
    %v2991 = vld [vmem:[#allocation10 + $0x188] sm:$0xff]
    %v2992 = vld [vmem:[#allocation10 + $0x190] sm:$0xff]
    %v2993 = vld [vmem:[#allocation10 + $0x198] sm:$0xff]
    %v2994 = vld [vmem:[#allocation10 + $0x1a0] sm:$0xff]
    %v2995 = vld [vmem:[#allocation10 + $0x1a8] sm:$0xff]
    %v2996 = vld [vmem:[#allocation10 + $0x1b0] sm:$0xff]
    %v2997 = vld [vmem:[#allocation10 + $0x1b8] sm:$0xff]
    %v2998 = vld [vmem:[#allocation10 + $0x1c0] sm:$0xff]
    %v2999 = vld [vmem:[#allocation10 + $0x1c8] sm:$0xff]
    %v3001 = vsel %vm136, %v2916, 0
    %3003 = vmatpush.msra.mxu0 0.0
    %3004 = vmatpush.msra.mxu0 0.0
    %3005 = vmatpush.msra.mxu0 0.0
    %3006 = vmatpush.msra.mxu0 0.0
    %3007 = vmatpush.msra.mxu0 0.0
    %3008 = vmatpush.msra.mxu0 0.0
    %3009 = vmatpush.msra.mxu0 0.0
    %3010 = vmatpush.msra.mxu0 0.0
    %3011 = vmatpush.msra.mxu0 %v2998
    %3012 = vmatpush.msra.mxu0 %v2996
    %3013 = vmatpush.msra.mxu0 %v2994
    %3014 = vmatpush.msra.mxu0 %v2992
    %3015 = vmatpush.msra.mxu0 %v2990
    %3016 = vmatpush.msra.mxu0 %v2988
    %3017 = vmatpush.msra.mxu0 %v2986
    %3018 = vmatpush.msra.mxu0 %v2984
    %3019 = vmatmul.f32.gmra.mxu0 %v3001
    %v3020 = vpop.f32.mrf.mxu0
    %v3021 = vadd.f32 0.0, %v3020
    %3022 = vdwg.mxu0
    %3023 = vmatpush.msra.mxu0 0.0
    %3024 = vmatpush.msra.mxu0 0.0
    %3025 = vmatpush.msra.mxu0 0.0
    %3026 = vmatpush.msra.mxu0 0.0
    %3027 = vmatpush.msra.mxu0 0.0
    %3028 = vmatpush.msra.mxu0 0.0
    %3029 = vmatpush.msra.mxu0 0.0
    %3030 = vmatpush.msra.mxu0 0.0
    %3031 = vmatpush.msra.mxu0 %v2999
    %3032 = vmatpush.msra.mxu0 %v2997
    %3033 = vmatpush.msra.mxu0 %v2995
    %3034 = vmatpush.msra.mxu0 %v2993
    %3035 = vmatpush.msra.mxu0 %v2991
    %3036 = vmatpush.msra.mxu0 %v2989
    %3037 = vmatpush.msra.mxu0 %v2987
    %3038 = vmatpush.msra.mxu0 %v2985
    %3039 = vmatmul.f32.gmra.mxu0 %v3001
    %v3040 = vpop.f32.mrf.mxu0
    %v3041 = vadd.f32 0.0, %v3040
    %3042 = vdwg.mxu0
    %v3043 = vadd.f32 %v2982, %v3021
    %v3044 = vadd.f32 %v2983, %v3041
    %v3045 = vxor.u32 %v2980, 2147483648
    %v3046 = vxor.u32 %v2981, 2147483648
    %v3047 = vmul.f32 %v3045, 1.442695
    %v3048 = vpow.pop %v3047
    %v3049 = vmul.f32 %v3046, 1.442695
    %v3050 = vpow.pop %v3049
    %v3051 = vadd.f32 %v3048, 1.0
    %v3052 = vadd.f32 %v3050, 1.0
    %v3053 = vrcp.pop %v3051
    %v3054 = vmul.f32 %v3051, %v3053
    %v3055 = vsub.f32 1.0, %v3054
    %v3056 = vmul.f32 %v3053, %v3055
    %v3057 = vadd.f32 %v3053, %v3056
    %vm3058 = vweird.f32 %v3051
    %vm3059 = vweird.f32 %v3053
    %vm3060 = vmor %vm3058, %vm3059
    %v3061 = vsel %vm3060, %v3053, %v3057
    %v3062 = vand.u32 2147483647, %v3051
    %vm3063 = vcmp.eq.f32.partialorder %v3062, 8.507059e+37
    %v3064 = vand.u32 %v3051, 2147483648
    %v3065 = vor.u32 1.1754944e-38, %v3064
    %v3066 = vsel %vm3063, %v3065, %v3061
    %v3067 = vmul.f32 1.0, %v3066
    %v3068 = vrcp.pop %v3052
    %v3069 = vmul.f32 %v3052, %v3068
    %v3070 = vsub.f32 1.0, %v3069
    %v3071 = vmul.f32 %v3068, %v3070
    %v3072 = vadd.f32 %v3068, %v3071
    %vm3073 = vweird.f32 %v3052
    %vm3074 = vweird.f32 %v3068
    %vm3075 = vmor %vm3073, %vm3074
    %v3076 = vsel %vm3075, %v3068, %v3072
    %v3077 = vand.u32 2147483647, %v3052
    %vm3078 = vcmp.eq.f32.partialorder %v3077, 8.507059e+37
    %v3079 = vand.u32 %v3052, 2147483648
    %v3080 = vor.u32 1.1754944e-38, %v3079
    %v3081 = vsel %vm3078, %v3080, %v3076
    %v3082 = vmul.f32 1.0, %v3081
    %v3083 = vtanh.pop %v2981
    %v3084 = vxor.u32 %v3043, 2147483648
    %v3085 = vxor.u32 %v3044, 2147483648
    %v3086 = vmul.f32 %v3084, 1.442695
    %v3087 = vpow.pop %v3086
    %v3088 = vmul.f32 %v3085, 1.442695
    %v3089 = vpow.pop %v3088
    %v3090 = vadd.f32 %v3087, 1.0
    %v3091 = vadd.f32 %v3089, 1.0
    %v3092 = vrcp.pop %v3090
    %v3093 = vmul.f32 %v3090, %v3092
    %v3094 = vsub.f32 1.0, %v3093
    %v3095 = vmul.f32 %v3092, %v3094
    %v3096 = vadd.f32 %v3092, %v3095
    %vm3097 = vweird.f32 %v3090
    %vm3098 = vweird.f32 %v3092
    %vm3099 = vmor %vm3097, %vm3098
    %v3100 = vsel %vm3099, %v3092, %v3096
    %v3101 = vand.u32 2147483647, %v3090
    %vm3102 = vcmp.eq.f32.partialorder %v3101, 8.507059e+37
    %v3103 = vand.u32 %v3090, 2147483648
    %v3104 = vor.u32 1.1754944e-38, %v3103
    %v3105 = vsel %vm3102, %v3104, %v3100
    %v3106 = vmul.f32 1.0, %v3105
    %v3107 = vrcp.pop %v3091
    %v3108 = vmul.f32 %v3091, %v3107
    %v3109 = vsub.f32 1.0, %v3108
    %v3110 = vmul.f32 %v3107, %v3109
    %v3111 = vadd.f32 %v3107, %v3110
    %vm3112 = vweird.f32 %v3091
    %vm3113 = vweird.f32 %v3107
    %vm3114 = vmor %vm3112, %vm3113
    %v3115 = vsel %vm3114, %v3107, %v3111
    %v3116 = vand.u32 2147483647, %v3091
    %vm3117 = vcmp.eq.f32.partialorder %v3116, 8.507059e+37
    %v3118 = vand.u32 %v3091, 2147483648
    %v3119 = vor.u32 1.1754944e-38, %v3118
    %v3120 = vsel %vm3117, %v3119, %v3115
    %v3121 = vmul.f32 1.0, %v3120
    %v3122 = vtanh.pop %v3044
    %v3123 = vmul.f32 %v3067, %v2893
    %3125 = vrot.lane.b32.xlu0 %v3083, 64
    %v3126 = vpop.permute.xlu0 %3125
    %v3128 = vmul.f32 %v3067, %v3126
    %3130 = vrot.lane.b32.xlu0 %v3128, 64
    %v3131 = vpop.permute.xlu0 %3130
    %v3133 = vadd.f32 %v3123, %v3131
    %v3134 = vtanh.pop %v3133
    %3136 = vrot.lane.b32.xlu0 %v3134, 64
    %v3137 = vpop.permute.xlu0 %3136
    %v3139 = vmul.f32 %v3082, %v3137
    %v3140 = vmul.f32 %v3106, %v2910
    %3142 = vrot.lane.b32.xlu0 %v3122, 64
    %v3143 = vpop.permute.xlu0 %3142
    %v3145 = vmul.f32 %v3106, %v3143
    %3147 = vrot.lane.b32.xlu0 %v3145, 64
    %v3148 = vpop.permute.xlu0 %3147
    %v3150 = vadd.f32 %v3140, %v3148
    %v3151 = vtanh.pop %v3150
    %3153 = vrot.lane.b32.xlu0 %v3151, 64
    %v3154 = vpop.permute.xlu0 %3153
    %v3156 = vmul.f32 %v3121, %v3154
    %3157 = vst.msk [vmem:[#allocation5 + $0x30] sm:$0xff] %vm136, %v3139
    %3158 = vst.msk [vmem:[#allocation6 + $0x8] sm:$0xff] %vm136, %v3156
    %v3159 = vld [vmem:[#allocation4 + $0xe0] sm:$0xff]
    %v3160 = vld [vmem:[#allocation4 + $0xe8] sm:$0xff]
    %v3161 = vld [vmem:[#allocation10 + $0xd0] sm:$0xff]
    %v3162 = vld [vmem:[#allocation10 + $0xd8] sm:$0xff]
    %v3163 = vld [vmem:[#allocation10 + $0xe0] sm:$0xff]
    %v3164 = vld [vmem:[#allocation10 + $0xe8] sm:$0xff]
    %v3165 = vld [vmem:[#allocation10 + $0xf0] sm:$0xff]
    %v3166 = vld [vmem:[#allocation10 + $0xf8] sm:$0xff]
    %v3167 = vld [vmem:[#allocation10 + $0x100] sm:$0xff]
    %v3168 = vld [vmem:[#allocation10 + $0x108] sm:$0xff]
    %v3169 = vld [vmem:[#allocation10 + $0x110] sm:$0xff]
    %v3170 = vld [vmem:[#allocation10 + $0x118] sm:$0xff]
    %v3171 = vld [vmem:[#allocation10 + $0x120] sm:$0xff]
    %v3172 = vld [vmem:[#allocation10 + $0x128] sm:$0xff]
    %v3173 = vld [vmem:[#allocation10 + $0x130] sm:$0xff]
    %v3174 = vld [vmem:[#allocation10 + $0x138] sm:$0xff]
    %v3175 = vld [vmem:[#allocation10 + $0x140] sm:$0xff]
    %v3176 = vld [vmem:[#allocation10 + $0x148] sm:$0xff]
    %v3178 = vsel %vm136, %v3139, 0
    %3180 = vmatpush.msra.mxu0 0.0
    %3181 = vmatpush.msra.mxu0 0.0
    %3182 = vmatpush.msra.mxu0 0.0
    %3183 = vmatpush.msra.mxu0 0.0
    %3184 = vmatpush.msra.mxu0 0.0
    %3185 = vmatpush.msra.mxu0 0.0
    %3186 = vmatpush.msra.mxu0 0.0
    %3187 = vmatpush.msra.mxu0 0.0
    %3188 = vmatpush.msra.mxu0 %v3175
    %3189 = vmatpush.msra.mxu0 %v3173
    %3190 = vmatpush.msra.mxu0 %v3171
    %3191 = vmatpush.msra.mxu0 %v3169
    %3192 = vmatpush.msra.mxu0 %v3167
    %3193 = vmatpush.msra.mxu0 %v3165
    %3194 = vmatpush.msra.mxu0 %v3163
    %3195 = vmatpush.msra.mxu0 %v3161
    %3196 = vmatmul.f32.gmra.mxu0 %v3178
    %v3197 = vpop.f32.mrf.mxu0
    %v3198 = vadd.f32 0.0, %v3197
    %3199 = vdwg.mxu0
    %3200 = vmatpush.msra.mxu0 0.0
    %3201 = vmatpush.msra.mxu0 0.0
    %3202 = vmatpush.msra.mxu0 0.0
    %3203 = vmatpush.msra.mxu0 0.0
    %3204 = vmatpush.msra.mxu0 0.0
    %3205 = vmatpush.msra.mxu0 0.0
    %3206 = vmatpush.msra.mxu0 0.0
    %3207 = vmatpush.msra.mxu0 0.0
    %3208 = vmatpush.msra.mxu0 %v3176
    %3209 = vmatpush.msra.mxu0 %v3174
    %3210 = vmatpush.msra.mxu0 %v3172
    %3211 = vmatpush.msra.mxu0 %v3170
    %3212 = vmatpush.msra.mxu0 %v3168
    %3213 = vmatpush.msra.mxu0 %v3166
    %3214 = vmatpush.msra.mxu0 %v3164
    %3215 = vmatpush.msra.mxu0 %v3162
    %3216 = vmatmul.f32.gmra.mxu0 %v3178
    %v3217 = vpop.f32.mrf.mxu0
    %v3218 = vadd.f32 0.0, %v3217
    %3219 = vdwg.mxu0
    %v3220 = vadd.f32 %v3159, %v3198
    %v3221 = vadd.f32 %v3160, %v3218
    %v3222 = vld [vmem:[#allocation4 + $0x10] sm:$0xff]
    %v3223 = vld [vmem:[#allocation4 + $0x18] sm:$0xff]
    %v3224 = vld [vmem:[#allocation10 + $0x150] sm:$0xff]
    %v3225 = vld [vmem:[#allocation10 + $0x158] sm:$0xff]
    %v3226 = vld [vmem:[#allocation10 + $0x160] sm:$0xff]
    %v3227 = vld [vmem:[#allocation10 + $0x168] sm:$0xff]
    %v3228 = vld [vmem:[#allocation10 + $0x170] sm:$0xff]
    %v3229 = vld [vmem:[#allocation10 + $0x178] sm:$0xff]
    %v3230 = vld [vmem:[#allocation10 + $0x180] sm:$0xff]
    %v3231 = vld [vmem:[#allocation10 + $0x188] sm:$0xff]
    %v3232 = vld [vmem:[#allocation10 + $0x190] sm:$0xff]
    %v3233 = vld [vmem:[#allocation10 + $0x198] sm:$0xff]
    %v3234 = vld [vmem:[#allocation10 + $0x1a0] sm:$0xff]
    %v3235 = vld [vmem:[#allocation10 + $0x1a8] sm:$0xff]
    %v3236 = vld [vmem:[#allocation10 + $0x1b0] sm:$0xff]
    %v3237 = vld [vmem:[#allocation10 + $0x1b8] sm:$0xff]
    %v3238 = vld [vmem:[#allocation10 + $0x1c0] sm:$0xff]
    %v3239 = vld [vmem:[#allocation10 + $0x1c8] sm:$0xff]
    %v3241 = vsel %vm136, %v3156, 0
    %3243 = vmatpush.msra.mxu0 0.0
    %3244 = vmatpush.msra.mxu0 0.0
    %3245 = vmatpush.msra.mxu0 0.0
    %3246 = vmatpush.msra.mxu0 0.0
    %3247 = vmatpush.msra.mxu0 0.0
    %3248 = vmatpush.msra.mxu0 0.0
    %3249 = vmatpush.msra.mxu0 0.0
    %3250 = vmatpush.msra.mxu0 0.0
    %3251 = vmatpush.msra.mxu0 %v3238
    %3252 = vmatpush.msra.mxu0 %v3236
    %3253 = vmatpush.msra.mxu0 %v3234
    %3254 = vmatpush.msra.mxu0 %v3232
    %3255 = vmatpush.msra.mxu0 %v3230
    %3256 = vmatpush.msra.mxu0 %v3228
    %3257 = vmatpush.msra.mxu0 %v3226
    %3258 = vmatpush.msra.mxu0 %v3224
    %3259 = vmatmul.f32.gmra.mxu0 %v3241
    %v3260 = vpop.f32.mrf.mxu0
    %v3261 = vadd.f32 0.0, %v3260
    %3262 = vdwg.mxu0
    %3263 = vmatpush.msra.mxu0 0.0
    %3264 = vmatpush.msra.mxu0 0.0
    %3265 = vmatpush.msra.mxu0 0.0
    %3266 = vmatpush.msra.mxu0 0.0
    %3267 = vmatpush.msra.mxu0 0.0
    %3268 = vmatpush.msra.mxu0 0.0
    %3269 = vmatpush.msra.mxu0 0.0
    %3270 = vmatpush.msra.mxu0 0.0
    %3271 = vmatpush.msra.mxu0 %v3239
    %3272 = vmatpush.msra.mxu0 %v3237
    %3273 = vmatpush.msra.mxu0 %v3235
    %3274 = vmatpush.msra.mxu0 %v3233
    %3275 = vmatpush.msra.mxu0 %v3231
    %3276 = vmatpush.msra.mxu0 %v3229
    %3277 = vmatpush.msra.mxu0 %v3227
    %3278 = vmatpush.msra.mxu0 %v3225
    %3279 = vmatmul.f32.gmra.mxu0 %v3241
    %v3280 = vpop.f32.mrf.mxu0
    %v3281 = vadd.f32 0.0, %v3280
    %3282 = vdwg.mxu0
    %v3283 = vadd.f32 %v3222, %v3261
    %v3284 = vadd.f32 %v3223, %v3281
    %v3285 = vxor.u32 %v3220, 2147483648
    %v3286 = vxor.u32 %v3221, 2147483648
    %v3287 = vmul.f32 %v3285, 1.442695
    %v3288 = vpow.pop %v3287
    %v3289 = vmul.f32 %v3286, 1.442695
    %v3290 = vpow.pop %v3289
    %v3291 = vadd.f32 %v3288, 1.0
    %v3292 = vadd.f32 %v3290, 1.0
    %v3293 = vrcp.pop %v3291
    %v3294 = vmul.f32 %v3291, %v3293
    %v3295 = vsub.f32 1.0, %v3294
    %v3296 = vmul.f32 %v3293, %v3295
    %v3297 = vadd.f32 %v3293, %v3296
    %vm3298 = vweird.f32 %v3291
    %vm3299 = vweird.f32 %v3293
    %vm3300 = vmor %vm3298, %vm3299
    %v3301 = vsel %vm3300, %v3293, %v3297
    %v3302 = vand.u32 2147483647, %v3291
    %vm3303 = vcmp.eq.f32.partialorder %v3302, 8.507059e+37
    %v3304 = vand.u32 %v3291, 2147483648
    %v3305 = vor.u32 1.1754944e-38, %v3304
    %v3306 = vsel %vm3303, %v3305, %v3301
    %v3307 = vmul.f32 1.0, %v3306
    %v3308 = vrcp.pop %v3292
    %v3309 = vmul.f32 %v3292, %v3308
    %v3310 = vsub.f32 1.0, %v3309
    %v3311 = vmul.f32 %v3308, %v3310
    %v3312 = vadd.f32 %v3308, %v3311
    %vm3313 = vweird.f32 %v3292
    %vm3314 = vweird.f32 %v3308
    %vm3315 = vmor %vm3313, %vm3314
    %v3316 = vsel %vm3315, %v3308, %v3312
    %v3317 = vand.u32 2147483647, %v3292
    %vm3318 = vcmp.eq.f32.partialorder %v3317, 8.507059e+37
    %v3319 = vand.u32 %v3292, 2147483648
    %v3320 = vor.u32 1.1754944e-38, %v3319
    %v3321 = vsel %vm3318, %v3320, %v3316
    %v3322 = vmul.f32 1.0, %v3321
    %v3323 = vtanh.pop %v3221
    %v3324 = vxor.u32 %v3283, 2147483648
    %v3325 = vxor.u32 %v3284, 2147483648
    %v3326 = vmul.f32 %v3324, 1.442695
    %v3327 = vpow.pop %v3326
    %v3328 = vmul.f32 %v3325, 1.442695
    %v3329 = vpow.pop %v3328
    %v3330 = vadd.f32 %v3327, 1.0
    %v3331 = vadd.f32 %v3329, 1.0
    %v3332 = vrcp.pop %v3330
    %v3333 = vmul.f32 %v3330, %v3332
    %v3334 = vsub.f32 1.0, %v3333
    %v3335 = vmul.f32 %v3332, %v3334
    %v3336 = vadd.f32 %v3332, %v3335
    %vm3337 = vweird.f32 %v3330
    %vm3338 = vweird.f32 %v3332
    %vm3339 = vmor %vm3337, %vm3338
    %v3340 = vsel %vm3339, %v3332, %v3336
    %v3341 = vand.u32 2147483647, %v3330
    %vm3342 = vcmp.eq.f32.partialorder %v3341, 8.507059e+37
    %v3343 = vand.u32 %v3330, 2147483648
    %v3344 = vor.u32 1.1754944e-38, %v3343
    %v3345 = vsel %vm3342, %v3344, %v3340
    %v3346 = vmul.f32 1.0, %v3345
    %v3347 = vrcp.pop %v3331
    %v3348 = vmul.f32 %v3331, %v3347
    %v3349 = vsub.f32 1.0, %v3348
    %v3350 = vmul.f32 %v3347, %v3349
    %v3351 = vadd.f32 %v3347, %v3350
    %vm3352 = vweird.f32 %v3331
    %vm3353 = vweird.f32 %v3347
    %vm3354 = vmor %vm3352, %vm3353
    %v3355 = vsel %vm3354, %v3347, %v3351
    %v3356 = vand.u32 2147483647, %v3331
    %vm3357 = vcmp.eq.f32.partialorder %v3356, 8.507059e+37
    %v3358 = vand.u32 %v3331, 2147483648
    %v3359 = vor.u32 1.1754944e-38, %v3358
    %v3360 = vsel %vm3357, %v3359, %v3355
    %v3361 = vmul.f32 1.0, %v3360
    %v3362 = vtanh.pop %v3284
    %v3363 = vmul.f32 %v3307, %v3133
    %3365 = vrot.lane.b32.xlu0 %v3323, 64
    %v3366 = vpop.permute.xlu0 %3365
    %v3368 = vmul.f32 %v3307, %v3366
    %3370 = vrot.lane.b32.xlu0 %v3368, 64
    %v3371 = vpop.permute.xlu0 %3370
    %v3373 = vadd.f32 %v3363, %v3371
    %v3374 = vtanh.pop %v3373
    %3376 = vrot.lane.b32.xlu0 %v3374, 64
    %v3377 = vpop.permute.xlu0 %3376
    %v3379 = vmul.f32 %v3322, %v3377
    %v3380 = vmul.f32 %v3346, %v3150
    %3382 = vrot.lane.b32.xlu0 %v3362, 64
    %v3383 = vpop.permute.xlu0 %3382
    %v3385 = vmul.f32 %v3346, %v3383
    %3387 = vrot.lane.b32.xlu0 %v3385, 64
    %v3388 = vpop.permute.xlu0 %3387
    %v3390 = vadd.f32 %v3380, %v3388
    %v3391 = vtanh.pop %v3390
    %3393 = vrot.lane.b32.xlu0 %v3391, 64
    %v3394 = vpop.permute.xlu0 %3393
    %v3396 = vmul.f32 %v3361, %v3394
    %3397 = vst.msk [vmem:[#allocation5 + $0x38] sm:$0xff] %vm136, %v3379
    %3398 = vst.msk [vmem:[#allocation6] sm:$0xff] %vm136, %v3396
    %v3399 = vld [vmem:[#allocation5] sm:$0xff]
    %v3400 = vld [vmem:[#allocation5 + $0x8] sm:$0xff]
    %v3401 = vld [vmem:[#allocation5 + $0x10] sm:$0xff]
    %v3402 = vld [vmem:[#allocation5 + $0x18] sm:$0xff]
    %v3403 = vld [vmem:[#allocation5 + $0x20] sm:$0xff]
    %v3404 = vld [vmem:[#allocation5 + $0x28] sm:$0xff]
    %v3405 = vld [vmem:[#allocation5 + $0x30] sm:$0xff]
    %v3406 = vld [vmem:[#allocation5 + $0x38] sm:$0xff]
    %v3407 = vld [vmem:[#allocation10 + $0x1d0] sm:$0xff]
    %v3408 = vld [vmem:[#allocation10 + $0x1e0] sm:$0xff]
    %v3409 = vld [vmem:[#allocation10 + $0x1f0] sm:$0xff]
    %v3410 = vld [vmem:[#allocation10 + $0x200] sm:$0xff]
    %v3411 = vld [vmem:[#allocation10 + $0x210] sm:$0xff]
    %v3412 = vld [vmem:[#allocation10 + $0x220] sm:$0xff]
    %v3413 = vld [vmem:[#allocation10 + $0x230] sm:$0xff]
    %v3414 = vld [vmem:[#allocation10 + $0x240] sm:$0xff]
    %v3415 = vld [vmem:[#allocation6] sm:$0xff]
    %v3416 = vld [vmem:[#allocation6 + $0x8] sm:$0xff]
    %v3417 = vld [vmem:[#allocation6 + $0x10] sm:$0xff]
    %v3418 = vld [vmem:[#allocation6 + $0x18] sm:$0xff]
    %v3419 = vld [vmem:[#allocation6 + $0x20] sm:$0xff]
    %v3420 = vld [vmem:[#allocation6 + $0x28] sm:$0xff]
    %v3421 = vld [vmem:[#allocation6 + $0x30] sm:$0xff]
    %v3422 = vld [vmem:[#allocation6 + $0x38] sm:$0xff]
    %v3423 = vld [vmem:[#allocation10 + $0x250] sm:$0xff]
    %v3424 = vld [vmem:[#allocation10 + $0x260] sm:$0xff]
    %v3425 = vld [vmem:[#allocation10 + $0x270] sm:$0xff]
    %v3426 = vld [vmem:[#allocation10 + $0x280] sm:$0xff]
    %v3427 = vld [vmem:[#allocation10 + $0x290] sm:$0xff]
    %v3428 = vld [vmem:[#allocation10 + $0x2a0] sm:$0xff]
    %v3429 = vld [vmem:[#allocation10 + $0x2b0] sm:$0xff]
    %v3430 = vld [vmem:[#allocation10 + $0x2c0] sm:$0xff]
    %v3432 = vsel %vm136, %v3415, 0
    %v3435 = vsel %vm136, %v3416, 0
    %v3438 = vsel %vm136, %v3417, 0
    %v3441 = vsel %vm136, %v3418, 0
    %v3444 = vsel %vm136, %v3419, 0
    %v3447 = vsel %vm136, %v3420, 0
    %v3450 = vsel %vm136, %v3421, 0
    %v3453 = vsel %vm136, %v3422, 0
    %3455 = vmatpush.msra.mxu0 0.0
    %3456 = vmatpush.msra.mxu0 0.0
    %3457 = vmatpush.msra.mxu0 0.0
    %3458 = vmatpush.msra.mxu0 0.0
    %3459 = vmatpush.msra.mxu0 0.0
    %3460 = vmatpush.msra.mxu0 0.0
    %3461 = vmatpush.msra.mxu0 0.0
    %3462 = vmatpush.msra.mxu0 0.0
    %3463 = vmatpush.msra.mxu0 %v3430
    %3464 = vmatpush.msra.mxu0 %v3429
    %3465 = vmatpush.msra.mxu0 %v3428
    %3466 = vmatpush.msra.mxu0 %v3427
    %3467 = vmatpush.msra.mxu0 %v3426
    %3468 = vmatpush.msra.mxu0 %v3425
    %3469 = vmatpush.msra.mxu0 %v3424
    %3470 = vmatpush.msra.mxu0 %v3423
    %3471 = vmatmul.f32.gmra.mxu0 %v3432
    %v3472 = vpop.f32.mrf.mxu0
    %v3473 = vadd.f32 0.0, %v3472
    %3474 = vmatmul.f32.gmra.mxu0 %v3435
    %v3475 = vpop.f32.mrf.mxu0
    %v3476 = vadd.f32 0.0, %v3475
    %3477 = vmatmul.f32.gmra.mxu0 %v3438
    %v3478 = vpop.f32.mrf.mxu0
    %v3479 = vadd.f32 0.0, %v3478
    %3480 = vmatmul.f32.gmra.mxu0 %v3441
    %v3481 = vpop.f32.mrf.mxu0
    %v3482 = vadd.f32 0.0, %v3481
    %3483 = vmatmul.f32.gmra.mxu0 %v3444
    %v3484 = vpop.f32.mrf.mxu0
    %v3485 = vadd.f32 0.0, %v3484
    %3486 = vmatmul.f32.gmra.mxu0 %v3447
    %v3487 = vpop.f32.mrf.mxu0
    %v3488 = vadd.f32 0.0, %v3487
    %3489 = vmatmul.f32.gmra.mxu0 %v3450
    %v3490 = vpop.f32.mrf.mxu0
    %v3491 = vadd.f32 0.0, %v3490
    %3492 = vmatmul.f32.gmra.mxu0 %v3453
    %v3493 = vpop.f32.mrf.mxu0
    %v3494 = vadd.f32 0.0, %v3493
    %3495 = vdwg.mxu0
    %v3497 = vsel %vm136, %v3399, 0
    %v3500 = vsel %vm136, %v3400, 0
    %v3503 = vsel %vm136, %v3401, 0
    %v3506 = vsel %vm136, %v3402, 0
    %v3509 = vsel %vm136, %v3403, 0
    %v3512 = vsel %vm136, %v3404, 0
    %v3515 = vsel %vm136, %v3405, 0
    %v3518 = vsel %vm136, %v3406, 0
    %3520 = vmatpush.msra.mxu0 0.0
    %3521 = vmatpush.msra.mxu0 0.0
    %3522 = vmatpush.msra.mxu0 0.0
    %3523 = vmatpush.msra.mxu0 0.0
    %3524 = vmatpush.msra.mxu0 0.0
    %3525 = vmatpush.msra.mxu0 0.0
    %3526 = vmatpush.msra.mxu0 0.0
    %3527 = vmatpush.msra.mxu0 0.0
    %3528 = vmatpush.msra.mxu0 %v3414
    %3529 = vmatpush.msra.mxu0 %v3413
    %3530 = vmatpush.msra.mxu0 %v3412
    %3531 = vmatpush.msra.mxu0 %v3411
    %3532 = vmatpush.msra.mxu0 %v3410
    %3533 = vmatpush.msra.mxu0 %v3409
    %3534 = vmatpush.msra.mxu0 %v3408
    %3535 = vmatpush.msra.mxu0 %v3407
    %3536 = vmatmul.f32.gmra.mxu0 %v3497
    %v3537 = vpop.f32.mrf.mxu0
    %v3538 = vadd.f32 %v3473, %v3537
    %3539 = vmatmul.f32.gmra.mxu0 %v3500
    %v3540 = vpop.f32.mrf.mxu0
    %v3541 = vadd.f32 %v3476, %v3540
    %3542 = vmatmul.f32.gmra.mxu0 %v3503
    %v3543 = vpop.f32.mrf.mxu0
    %v3544 = vadd.f32 %v3479, %v3543
    %3545 = vmatmul.f32.gmra.mxu0 %v3506
    %v3546 = vpop.f32.mrf.mxu0
    %v3547 = vadd.f32 %v3482, %v3546
    %3548 = vmatmul.f32.gmra.mxu0 %v3509
    %v3549 = vpop.f32.mrf.mxu0
    %v3550 = vadd.f32 %v3485, %v3549
    %3551 = vmatmul.f32.gmra.mxu0 %v3512
    %v3552 = vpop.f32.mrf.mxu0
    %v3553 = vadd.f32 %v3488, %v3552
    %3554 = vmatmul.f32.gmra.mxu0 %v3515
    %v3555 = vpop.f32.mrf.mxu0
    %v3556 = vadd.f32 %v3491, %v3555
    %3557 = vmatmul.f32.gmra.mxu0 %v3518
    %v3558 = vpop.f32.mrf.mxu0
    %v3559 = vadd.f32 %v3494, %v3558
    %3560 = vdwg.mxu0
    %v3561 = vld [vmem:[#allocation10 + $0x2d0] ss:$0 sm:$0xff]
    %v3562 = vadd.f32 %v3538, %v3561
    %v3563 = vadd.f32 %v3541, %v3561
    %v3564 = vadd.f32 %v3544, %v3561
    %v3565 = vadd.f32 %v3547, %v3561
    %v3566 = vadd.f32 %v3550, %v3561
    %v3567 = vadd.f32 %v3553, %v3561
    %v3568 = vadd.f32 %v3556, %v3561
    %v3569 = vadd.f32 %v3559, %v3561
    %3570 = vst [vmem:[#allocation13] sm:$0xff] %v3562
    %3571 = vst [vmem:[#allocation13 + $0x8] sm:$0xff] %v3563
    %3572 = vst [vmem:[#allocation13 + $0x10] sm:$0xff] %v3564
    %3573 = vst [vmem:[#allocation13 + $0x18] sm:$0xff] %v3565
    %3574 = vst [vmem:[#allocation13 + $0x20] sm:$0xff] %v3566
    %3575 = vst [vmem:[#allocation13 + $0x28] sm:$0xff] %v3567
    %3576 = vst [vmem:[#allocation13 + $0x30] sm:$0xff] %v3568
    %3577 = vst [vmem:[#allocation13 + $0x38] sm:$0xff] %v3569
    // Predicated region
    $region26: #{tpu_custom_call.1} parent=1 // pred_check
      _
    $region27: #{tpu_custom_call.1} parent=1 // pred_check_branch
      %3579 = sbr.rel (0) target = $region29
    $region28: #{tpu_custom_call.1} parent=1 // pred_region
      %3581 = vsyncadd [#allocation9], 0
      %s3582 = sshll.u32 [#allocation13], 4
      %s3583 = int_to_ptr.vmem [resolvable:$true] %s3582
      %s3584 = sshll.u32 %s3, 4
      %s3585 = int_to_ptr.hbm [resolvable:$true] %s3584
      %3590 = dma.vmem_to_hbm [thread:$0]  %s3583, 1024, %s3585, [#allocation9], 128, 128, 8
    $region29: #{tpu_custom_call.1} parent=1 // pred_fallthru
      _
    // Predicated region
    $region30: #{tpu_custom_call.1} parent=1 // pred_check
      _
    $region31: #{tpu_custom_call.1} parent=1 // pred_check_branch
      %3592 = sbr.rel (0) target = $region33
    $region32: #{tpu_custom_call.1} parent=1 // pred_region
      %3594 = dma.done [#allocation9], 1024
    $region33: #{tpu_custom_call.1} parent=1 // pred_fallthru
      _
    %3595 = vsyncpa [#allocation8], 1
    %3596 = vsyncpa [#allocation11], 1
    %3597 = vsyncpa [#allocation9], 1

</llo_original>
